<compile_context>
chip_gen: v5e
topology: v5e:2x2
jax: 0.10.0
libtpu: 0.0.40
codegen_flags: <defaults>
</compile_context>

<pallas_src>
import jax
import jax.numpy as jnp
import numpy as np
from jax import lax
from jax.experimental import pallas as pl
from jax.experimental.pallas import tpu as pltpu


def _make_gattn_kernel(C, num_heads, Na, Bt):
    hd = C // num_heads
    T = Bt * Na                # tokens handled per grid step
    K = 5                      # forget-gate taps along the key axis
    bf16, f32 = jnp.bfloat16, jnp.float32

    def kernel(x_ref, wqkg_ref, wog_ref, bqkg_ref, bog_ref, wf_ref, bfg_ref, o_ref):
        x16 = x_ref[...]                                              # (T, C) bf16

        # ---- ONE fused channel projection (T,C)@(C,3C): [q*scale | k | in-gate]
        proj = jnp.dot(x16, wqkg_ref[...],
                       preferred_element_type=f32) + bqkg_ref[...]    # (T, 3C) f32

        # input gate (f32 VPU/EUP math); value tensor kept bf16 for the AV MXU op
        v16 = (jax.nn.sigmoid(proj[:, 2 * C:3 * C])
               * x16.astype(f32)).astype(bf16)                        # (T, C) bf16

        # ---- per-head scores (batched over the Bt slabs) + f32 softmax --------
        p_heads = []
        for h in range(num_heads):
            q = proj[:, h * hd:(h + 1) * hd].astype(bf16).reshape(Bt, Na, hd)
            k = proj[:, C + h * hd:C + (h + 1) * hd].astype(bf16).reshape(Bt, Na, hd)
            s = jnp.einsum('bnd,bmd->bnm', q, k,
                           preferred_element_type=f32).reshape(T, Na)
            s = s - jnp.max(s, axis=-1, keepdims=True)
            p = jnp.exp(s)
            p_heads.append(
                p * pl.reciprocal(jnp.sum(p, axis=-1, keepdims=True), approx=True))

        # ---- forget gate: (1,5) conv over keys == 5 shifted-adds (roll + mask) --
        col = lax.broadcasted_iota(jnp.int32, (1, Na), 1)              # lane iota
        acc = [None] * num_heads                                       # stacked accs
        for t in range(K):
            off = t - 2
            mask = None
            if off:
                mask = ((col + off >= 0) & (col + off < Na)).astype(f32)  # (1, Na)
            for hi in range(num_heads):
                if off == 0:
                    sh = p_heads[hi]
                else:
                    sh = pltpu.roll(p_heads[hi], (-off) % Na, axis=1) * mask
                for ho in range(num_heads):
                    w = wf_ref[(ho * num_heads + hi) * K + t]          # SMEM scalar
                    term = w * sh
                    acc[ho] = term if acc[ho] is None else acc[ho] + term

        # ---- SiLU(gate) @ v (batched, bf16 MXU operands); lane-concat heads ----
        o_heads = []
        for ho in range(num_heads):
            g = acc[ho] + bfg_ref[ho]                                  # bias once
            g = g * jax.nn.sigmoid(g)                                  # SiLU, f32
            g16 = g.astype(bf16).reshape(Bt, Na, Na)
            vh = v16[:, ho * hd:(ho + 1) * hd].reshape(Bt, Na, hd)
            o_heads.append(
                jnp.einsum('bnm,bmd->bnd', g16, vh,
                           preferred_element_type=f32).reshape(T, hd))
        o = jnp.concatenate(o_heads, axis=1)                           # (T, C) f32

        # ---- output gate + residual (x re-read from the ref for the residual) --
        og = jax.nn.sigmoid(
            jnp.dot(o.astype(bf16), wog_ref[...],
                    preferred_element_type=f32) + bog_ref[...])
        o_ref[...] = (og * o + x_ref[...].astype(f32)).astype(o_ref.dtype)

    return kernel


def _vmem_budget():
    """Generation-aware scoped-VMEM limit and f32 working-set budget."""
    try:
        phys = int(pltpu.get_tpu_info().vmem_capacity_bytes)
    except Exception:
        phys = 64 * 1024 * 1024            # v7x-safe fallback
    limit = min(phys * 3 // 4, 100 * 1024 * 1024)   # ~48 MiB on v7x, ~96 MiB on v5e/v6e
    return limit, limit // 2


def _pick_block_slabs(Bg, Na, C, nh, budget):
    """Slabs per grid step, sized from the f32 working set (score maps, forget-gate
    accumulators, projections dominate) while keeping >= 4 grid steps — and an even
    count — so v7x's two TensorCores both stay busy under the 'parallel' axis."""
    per_slab = 4 * Na * ((2 * nh + 3) * Na + 8 * C)    # generous f32 bytes / slab
    cap = max(1, budget // per_slab)
    target = max(1, min(cap, max(1, Bg // 4)))
    for bt in range(target, 0, -1):
        if Bg % bt:
            continue
        if Bg % 2 == 0 and (Bg // bt) % 2:             # prefer an even grid length
            continue
        return bt
    return 1


def gattn_pallas(x, params, num_heads, area, block_slabs=None,
                 out_dtype=jnp.bfloat16):
    B, C, H, W = x.shape
    N = H * W
    assert N % area == 0 and C % num_heads == 0
    Na = N // area
    Bg = B * area
    hd = C // num_heads
    assert Na % 8 == 0, "tokens per area must be sublane aligned"

    vmem_limit, budget = _vmem_budget()
    Bt = block_slabs if block_slabs is not None else \
        _pick_block_slabs(Bg, Na, C, num_heads, budget)
    assert Bg % Bt == 0
    T = Bt * Na

    f32, bf16 = jnp.float32, jnp.bfloat16
    scale = hd ** -0.5

    # NCHW -> (B, N, C) -> token-major lane-dense 2-D slab; bf16 halves HBM traffic.
    xf = x.reshape(B, C, N).transpose(0, 2, 1).reshape(Bg * Na, C)
    x16 = xf.astype(bf16)

    # Fused projection weight/bias: [Wq * hd^-0.5 | Wk | Wig]  (one MXU call, one DMA).
    wqkg = jnp.concatenate(
        [params["wq"] * scale, params["wk"], params["wig"]], axis=1).astype(bf16)
    bqkg = jnp.concatenate(
        [params["bq"] * scale, params["bk"], params["big"]]).reshape(1, 3 * C).astype(f32)
    wog = params["wog"].astype(bf16)
    bog = params["bog"].reshape(1, C).astype(f32)
    wf_flat = params["wf"].reshape(-1).astype(f32)        # (nh*nh*5,) scalar taps
    bf_vec = params["bf"].astype(f32)                     # (nh,)

    kernel = _make_gattn_kernel(C, num_heads, Na, Bt)

    grid_spec = pltpu.PrefetchScalarGridSpec(
        num_scalar_prefetch=0,
        grid=(Bg // Bt,),
        in_specs=[
            pl.BlockSpec((T, C), lambda b: (b, 0)),                    # x slab (bf16)
            pl.BlockSpec((C, 3 * C), lambda b: (0, 0)),                # fused proj W
            pl.BlockSpec((C, C), lambda b: (0, 0)),                    # Wog
            pl.BlockSpec((1, 3 * C), lambda b: (0, 0)),                # fused proj b
            pl.BlockSpec((1, C), lambda b: (0, 0)),                    # bog
            pl.BlockSpec(memory_space=pltpu.MemorySpace.SMEM),         # forget taps
            pl.BlockSpec(memory_space=pltpu.MemorySpace.SMEM),         # forget bias
        ],
        out_specs=pl.BlockSpec((T, C), lambda b: (b, 0)),
    )

    out_flat = pl.pallas_call(
        kernel,
        out_shape=jax.ShapeDtypeStruct((Bg * Na, C), out_dtype),
        grid_spec=grid_spec,
        compiler_params=pltpu.CompilerParams(
            dimension_semantics=("parallel",),            # megacore over batch axis
            vmem_limit_bytes=vmem_limit),
    )(x16, wqkg, wog, bqkg, bog, wf_flat, bf_vec)

    # (Bg*Na, C) == (B*N, C) -> NHWC -> NCHW, back to f32 for downstream use.
    return out_flat.astype(jnp.float32).reshape(B, H, W, C).transpose(0, 3, 1, 2)


def gattn_ref(x, params, num_heads, area):
    """Pure-JAX f32 reference mirroring the PyTorch forward (BN folded)."""
    B, C, H, W = x.shape
    N = H * W
    hd = C // num_heads

    xf = x.reshape(B, C, N).transpose(0, 2, 1)                         # (B, N, C)
    q = xf @ params["wq"] + params["bq"]
    k = xf @ params["wk"] + params["bk"]
    v = jax.nn.sigmoid(xf @ params["wig"] + params["big"]) * xf

    q = q.reshape(B * area, N // area, C)
    k = k.reshape(B * area, N // area, C)
    v = v.reshape(B * area, N // area, C)
    Bg, Na, _ = q.shape
    q = q.transpose(0, 2, 1).reshape(Bg, num_heads, hd, Na)
    k = k.transpose(0, 2, 1).reshape(Bg, num_heads, hd, Na)
    v = v.transpose(0, 2, 1).reshape(Bg, num_heads, hd, Na)

    attn = jnp.einsum('bhdn,bhdm->bhnm', q, k) * hd ** -0.5
    attn = jax.nn.softmax(attn, axis=-1)
    attn = lax.conv_general_dilated(
        attn, params["wf"][:, :, None, :], window_strides=(1, 1),
        padding=((0, 0), (2, 2)),
        dimension_numbers=('NCHW', 'OIHW', 'NCHW')) \
        + params["bf"][None, :, None, None]
    attn = attn * jax.nn.sigmoid(attn)                                 # SiLU
    o = jnp.einsum('bhdn,bhmn->bhdm', v, attn)                         # v @ attn^T
    o = o.transpose(0, 3, 1, 2).reshape(Bg, Na, C).reshape(B, N, C)
    out = jax.nn.sigmoid(o @ params["wog"] + params["bog"]) * o + xf
    return out.reshape(B, H, W, C).transpose(0, 3, 1, 2)


if __name__ == "__main__":
    # Small but representative config: C=128 (lane-dense I/O), hd=64, Na=128.
    B, C, H, W = 2, 128, 16, 16
    num_heads, area = 2, 2

    key = jax.random.PRNGKey(0)
    ks = jax.random.split(key, 11)
    wscale = C ** -0.5
    # Deterministic synthetic parameters (ultralytics Conv = conv + BN + act;
    # BN is folded into the effective weight/bias below).
    params = dict(
        wq=jax.random.normal(ks[0], (C, C), jnp.float32) * wscale,
        bq=jax.random.normal(ks[1], (C,), jnp.float32) * 0.05,
        wk=jax.random.normal(ks[2], (C, C), jnp.float32) * wscale,
        bk=jax.random.normal(ks[3], (C,), jnp.float32) * 0.05,
        wig=jax.random.normal(ks[4], (C, C), jnp.float32) * wscale,
        big=jax.random.normal(ks[5], (C,), jnp.float32) * 0.05,
        wog=jax.random.normal(ks[6], (C, C), jnp.float32) * wscale,
        bog=jax.random.normal(ks[7], (C,), jnp.float32) * 0.05,
        wf=jax.random.normal(ks[8], (num_heads, num_heads, 5), jnp.float32) * 0.5,
        bf=jax.random.normal(ks[9], (num_heads,), jnp.float32) * 0.05,
    )
    x = jax.random.normal(ks[10], (B, C, H, W), jnp.float32)

    out = jax.block_until_ready(gattn_pallas(x, params, num_heads, area))
    ref = jax.block_until_ready(gattn_ref(x, params, num_heads, area))

    assert out.shape == x.shape
    # bf16 MXU operands (q/k/attn/v/o), bf16 x and bf16 output vs. a pure-f32
    # reference: ~3e-2 is the appropriate comparison tolerance.
    np.testing.assert_allclose(np.asarray(out), np.asarray(ref), rtol=3e-2, atol=3e-2)
    print("KERNEL_OK")
</pallas_src>

<mosaic_0001>
module attributes {stable_mosaic.version = 11 : i64} {
  func.func @kernel(%arg0: i32, %arg1: memref<128x128xbf16, #tpu.memory_space<vmem>>, %arg2: memref<128x384xbf16, #tpu.memory_space<vmem>>, %arg3: memref<128x128xbf16, #tpu.memory_space<vmem>>, %arg4: memref<1x384xf32, #tpu.memory_space<vmem>>, %arg5: memref<1x128xf32, #tpu.memory_space<vmem>>, %arg6: memref<20xf32, #tpu.memory_space<smem>>, %arg7: memref<2xf32, #tpu.memory_space<smem>>, %arg8: memref<128x128xbf16, #tpu.memory_space<vmem>>) attributes {dimension_semantics = [#tpu.dimension_semantics<parallel>], iteration_bounds = array<i64: 4>, scalar_prefetch = 0 : i64, scratch_operands = 0 : i64, tpu.core_type = #tpu.core_type<tc>, window_params = [{transform_indices = @transform_0, window_bounds = array<i64: 128, 128>}, {pipeline_mode = #tpu.pipeline_mode<synchronous>, transform_indices = @transform_1, window_bounds = array<i64: 128, 384>}, {pipeline_mode = #tpu.pipeline_mode<synchronous>, transform_indices = @transform_2, window_bounds = array<i64: 128, 128>}, {pipeline_mode = #tpu.pipeline_mode<synchronous>, transform_indices = @transform_3, window_bounds = array<i64: 1, 384>}, {pipeline_mode = #tpu.pipeline_mode<synchronous>, transform_indices = @transform_4, window_bounds = array<i64: 1, 128>}, {transform_indices = @transform_5, window_bounds = array<i64: 20>}, {transform_indices = @transform_6, window_bounds = array<i64: 2>}, {transform_indices = @transform_7, window_bounds = array<i64: 128, 128>}]} {
    %c0 = arith.constant 0 : index
    %c0_0 = arith.constant 0 : index
    %0 = vector.load %arg1[%c0, %c0_0] : memref<128x128xbf16, #tpu.memory_space<vmem>>, vector<128x128xbf16>
    %c0_1 = arith.constant 0 : index
    %c0_2 = arith.constant 0 : index
    %1 = vector.load %arg2[%c0_1, %c0_2] : memref<128x384xbf16, #tpu.memory_space<vmem>>, vector<128x384xbf16>
    %cst = arith.constant dense<0.000000e+00> : vector<128x384xf32>
    %2 = tpu.matmul %0, %1, %cst {dimension_numbers = #tpu.dot_dimension_numbers<[1], [0], [0], [1], [0, 0, 1, 1], [], []>} : vector<128x128xbf16>, vector<128x384xbf16>, vector<128x384xf32> -> vector<128x384xf32>
    %c0_3 = arith.constant 0 : index
    %c0_4 = arith.constant 0 : index
    %3 = vector.load %arg4[%c0_3, %c0_4] : memref<1x384xf32, #tpu.memory_space<vmem>>, vector<1x384xf32>
    %4 = vector.broadcast %3 : vector<1x384xf32> to vector<128x384xf32>
    %5 = arith.addf %2, %4 : vector<128x384xf32>
    %6 = vector.extract_strided_slice %5 {offsets = [0, 256], sizes = [128, 128], strides = [1, 1]} : vector<128x384xf32> to vector<128x128xf32>
    %7 = arith.negf %6 : vector<128x128xf32>
    %8 = math.exp %7 : vector<128x128xf32>
    %cst_5 = arith.constant 1.000000e+00 : f32
    %9 = vector.broadcast %cst_5 : f32 to vector<128x128xf32>
    %10 = arith.addf %9, %8 : vector<128x128xf32>
    %11 = arith.divf %9, %10 : vector<128x128xf32>
    %12 = arith.extf %0 : vector<128x128xbf16> to vector<128x128xf32>
    %13 = arith.mulf %11, %12 : vector<128x128xf32>
    %14 = arith.truncf %13 : vector<128x128xf32> to vector<128x128xbf16>
    %15 = vector.extract_strided_slice %5 {offsets = [0, 0], sizes = [128, 64], strides = [1, 1]} : vector<128x384xf32> to vector<128x64xf32>
    %16 = arith.truncf %15 : vector<128x64xf32> to vector<128x64xbf16>
    %17 = vector.shape_cast %16 : vector<128x64xbf16> to vector<1x128x64xbf16>
    %18 = vector.extract_strided_slice %5 {offsets = [0, 128], sizes = [128, 64], strides = [1, 1]} : vector<128x384xf32> to vector<128x64xf32>
    %19 = arith.truncf %18 : vector<128x64xf32> to vector<128x64xbf16>
    %20 = vector.shape_cast %19 : vector<128x64xbf16> to vector<1x128x64xbf16>
    "tpu.trace_start"() <{level = 10 : i32, message = "bnd,bmd->bnm"}> : () -> ()
    %cst_6 = arith.constant dense<0.000000e+00> : vector<1x128x128xf32>
    %21 = tpu.matmul %17, %20, %cst_6 {dimension_numbers = #tpu.dot_dimension_numbers<[2], [2], [1], [1], [0, 0, 0, 1, 1, 1], [0], [0]>} : vector<1x128x64xbf16>, vector<1x128x64xbf16>, vector<1x128x128xf32> -> vector<1x128x128xf32>
    "tpu.trace_stop"() : () -> ()
    %22 = vector.shape_cast %21 : vector<1x128x128xf32> to vector<128x128xf32>
    %cst_7 = arith.constant dense<0xFF800000> : vector<128xf32>
    %23 = vector.multi_reduction <maximumf>, %22, %cst_7 [1] : vector<128x128xf32> to vector<128xf32>
    %24 = vector.shape_cast %23 : vector<128xf32> to vector<128x1xf32>
    %25 = vector.broadcast %24 : vector<128x1xf32> to vector<128x128xf32>
    %26 = arith.subf %22, %25 : vector<128x128xf32>
    %27 = math.exp %26 : vector<128x128xf32>
    %cst_8 = arith.constant dense<0.000000e+00> : vector<128xf32>
    %28 = vector.multi_reduction <add>, %27, %cst_8 [1] : vector<128x128xf32> to vector<128xf32>
    %29 = vector.shape_cast %28 : vector<128xf32> to vector<128x1xf32>
    %30 = tpu.reciprocal %29 {approx = true} : vector<128x1xf32> -> vector<128x1xf32>
    %31 = vector.broadcast %30 : vector<128x1xf32> to vector<128x128xf32>
    %32 = arith.mulf %27, %31 : vector<128x128xf32>
    %33 = vector.extract_strided_slice %5 {offsets = [0, 64], sizes = [128, 64], strides = [1, 1]} : vector<128x384xf32> to vector<128x64xf32>
    %34 = arith.truncf %33 : vector<128x64xf32> to vector<128x64xbf16>
    %35 = vector.shape_cast %34 : vector<128x64xbf16> to vector<1x128x64xbf16>
    %36 = vector.extract_strided_slice %5 {offsets = [0, 192], sizes = [128, 64], strides = [1, 1]} : vector<128x384xf32> to vector<128x64xf32>
    %37 = arith.truncf %36 : vector<128x64xf32> to vector<128x64xbf16>
    %38 = vector.shape_cast %37 : vector<128x64xbf16> to vector<1x128x64xbf16>
    "tpu.trace_start"() <{level = 10 : i32, message = "bnd,bmd->bnm"}> : () -> ()
    %cst_9 = arith.constant dense<0.000000e+00> : vector<1x128x128xf32>
    %39 = tpu.matmul %35, %38, %cst_9 {dimension_numbers = #tpu.dot_dimension_numbers<[2], [2], [1], [1], [0, 0, 0, 1, 1, 1], [0], [0]>} : vector<1x128x64xbf16>, vector<1x128x64xbf16>, vector<1x128x128xf32> -> vector<1x128x128xf32>
    "tpu.trace_stop"() : () -> ()
    %40 = vector.shape_cast %39 : vector<1x128x128xf32> to vector<128x128xf32>
    %cst_10 = arith.constant dense<0xFF800000> : vector<128xf32>
    %41 = vector.multi_reduction <maximumf>, %40, %cst_10 [1] : vector<128x128xf32> to vector<128xf32>
    %42 = vector.shape_cast %41 : vector<128xf32> to vector<128x1xf32>
    %43 = vector.broadcast %42 : vector<128x1xf32> to vector<128x128xf32>
    %44 = arith.subf %40, %43 : vector<128x128xf32>
    %45 = math.exp %44 : vector<128x128xf32>
    %cst_11 = arith.constant dense<0.000000e+00> : vector<128xf32>
    %46 = vector.multi_reduction <add>, %45, %cst_11 [1] : vector<128x128xf32> to vector<128xf32>
    %47 = vector.shape_cast %46 : vector<128xf32> to vector<128x1xf32>
    %48 = tpu.reciprocal %47 {approx = true} : vector<128x1xf32> -> vector<128x1xf32>
    %49 = vector.broadcast %48 : vector<128x1xf32> to vector<128x128xf32>
    %50 = arith.mulf %45, %49 : vector<128x128xf32>
    %51 = tpu.iota {dimensions = array<i32: 1>} : vector<1x128xi32>
    %c-2_i32 = arith.constant -2 : i32
    %52 = vector.broadcast %c-2_i32 : i32 to vector<1x128xi32>
    %53 = arith.addi %51, %52 : vector<1x128xi32>
    %c0_i32 = arith.constant 0 : i32
    %54 = vector.broadcast %c0_i32 : i32 to vector<1x128xi32>
    %55 = arith.cmpi sge, %53, %54 : vector<1x128xi32>
    %c-2_i32_12 = arith.constant -2 : i32
    %56 = vector.broadcast %c-2_i32_12 : i32 to vector<1x128xi32>
    %57 = arith.addi %51, %56 : vector<1x128xi32>
    %c128_i32 = arith.constant 128 : i32
    %58 = vector.broadcast %c128_i32 : i32 to vector<1x128xi32>
    %59 = arith.cmpi slt, %57, %58 : vector<1x128xi32>
    %60 = arith.andi %55, %59 : vector<1x128xi1>
    %61 = arith.extui %60 : vector<1x128xi1> to vector<1x128xi32>
    %62 = arith.sitofp %61 : vector<1x128xi32> to vector<1x128xf32>
    %c2_i32 = arith.constant 2 : i32
    %63 = tpu.dynamic_rotate %32 by %c2_i32 dim 1 : vector<128x128xf32>, i32 -> vector<128x128xf32>
    %64 = vector.broadcast %62 : vector<1x128xf32> to vector<128x128xf32>
    %65 = arith.mulf %63, %64 : vector<128x128xf32>
    %c0_13 = arith.constant 0 : index
    %66 = memref.load %arg6[%c0_13] : memref<20xf32, #tpu.memory_space<smem>>
    %67 = vector.broadcast %66 : f32 to vector<128x128xf32>
    %68 = arith.mulf %67, %65 : vector<128x128xf32>
    %c10 = arith.constant 10 : index
    %69 = memref.load %arg6[%c10] : memref<20xf32, #tpu.memory_space<smem>>
    %70 = vector.broadcast %69 : f32 to vector<128x128xf32>
    %71 = arith.mulf %70, %65 : vector<128x128xf32>
    %c2_i32_14 = arith.constant 2 : i32
    %72 = tpu.dynamic_rotate %50 by %c2_i32_14 dim 1 : vector<128x128xf32>, i32 -> vector<128x128xf32>
    %73 = vector.broadcast %62 : vector<1x128xf32> to vector<128x128xf32>
    %74 = arith.mulf %72, %73 : vector<128x128xf32>
    %c5 = arith.constant 5 : index
    %75 = memref.load %arg6[%c5] : memref<20xf32, #tpu.memory_space<smem>>
    %76 = vector.broadcast %75 : f32 to vector<128x128xf32>
    %77 = arith.mulf %76, %74 : vector<128x128xf32>
    %78 = arith.addf %68, %77 : vector<128x128xf32>
    %c15 = arith.constant 15 : index
    %79 = memref.load %arg6[%c15] : memref<20xf32, #tpu.memory_space<smem>>
    %80 = vector.broadcast %79 : f32 to vector<128x128xf32>
    %81 = arith.mulf %80, %74 : vector<128x128xf32>
    %82 = arith.addf %71, %81 : vector<128x128xf32>
    %c-1_i32 = arith.constant -1 : i32
    %83 = vector.broadcast %c-1_i32 : i32 to vector<1x128xi32>
    %84 = arith.addi %51, %83 : vector<1x128xi32>
    %c0_i32_15 = arith.constant 0 : i32
    %85 = vector.broadcast %c0_i32_15 : i32 to vector<1x128xi32>
    %86 = arith.cmpi sge, %84, %85 : vector<1x128xi32>
    %c-1_i32_16 = arith.constant -1 : i32
    %87 = vector.broadcast %c-1_i32_16 : i32 to vector<1x128xi32>
    %88 = arith.addi %51, %87 : vector<1x128xi32>
    %c128_i32_17 = arith.constant 128 : i32
    %89 = vector.broadcast %c128_i32_17 : i32 to vector<1x128xi32>
    %90 = arith.cmpi slt, %88, %89 : vector<1x128xi32>
    %91 = arith.andi %86, %90 : vector<1x128xi1>
    %92 = arith.extui %91 : vector<1x128xi1> to vector<1x128xi32>
    %93 = arith.sitofp %92 : vector<1x128xi32> to vector<1x128xf32>
    %c1_i32 = arith.constant 1 : i32
    %94 = tpu.dynamic_rotate %32 by %c1_i32 dim 1 : vector<128x128xf32>, i32 -> vector<128x128xf32>
    %95 = vector.broadcast %93 : vector<1x128xf32> to vector<128x128xf32>
    %96 = arith.mulf %94, %95 : vector<128x128xf32>
    %c1 = arith.constant 1 : index
    %97 = memref.load %arg6[%c1] : memref<20xf32, #tpu.memory_space<smem>>
    %98 = vector.broadcast %97 : f32 to vector<128x128xf32>
    %99 = arith.mulf %98, %96 : vector<128x128xf32>
    %100 = arith.addf %78, %99 : vector<128x128xf32>
    %c11 = arith.constant 11 : index
    %101 = memref.load %arg6[%c11] : memref<20xf32, #tpu.memory_space<smem>>
    %102 = vector.broadcast %101 : f32 to vector<128x128xf32>
    %103 = arith.mulf %102, %96 : vector<128x128xf32>
    %104 = arith.addf %82, %103 : vector<128x128xf32>
    %c1_i32_18 = arith.constant 1 : i32
    %105 = tpu.dynamic_rotate %50 by %c1_i32_18 dim 1 : vector<128x128xf32>, i32 -> vector<128x128xf32>
    %106 = vector.broadcast %93 : vector<1x128xf32> to vector<128x128xf32>
    %107 = arith.mulf %105, %106 : vector<128x128xf32>
    %c6 = arith.constant 6 : index
    %108 = memref.load %arg6[%c6] : memref<20xf32, #tpu.memory_space<smem>>
    %109 = vector.broadcast %108 : f32 to vector<128x128xf32>
    %110 = arith.mulf %109, %107 : vector<128x128xf32>
    %111 = arith.addf %100, %110 : vector<128x128xf32>
    %c16 = arith.constant 16 : index
    %112 = memref.load %arg6[%c16] : memref<20xf32, #tpu.memory_space<smem>>
    %113 = vector.broadcast %112 : f32 to vector<128x128xf32>
    %114 = arith.mulf %113, %107 : vector<128x128xf32>
    %115 = arith.addf %104, %114 : vector<128x128xf32>
    %c2 = arith.constant 2 : index
    %116 = memref.load %arg6[%c2] : memref<20xf32, #tpu.memory_space<smem>>
    %117 = vector.broadcast %116 : f32 to vector<128x128xf32>
    %118 = arith.mulf %117, %32 : vector<128x128xf32>
    %119 = arith.addf %111, %118 : vector<128x128xf32>
    %c12 = arith.constant 12 : index
    %120 = memref.load %arg6[%c12] : memref<20xf32, #tpu.memory_space<smem>>
    %121 = vector.broadcast %120 : f32 to vector<128x128xf32>
    %122 = arith.mulf %121, %32 : vector<128x128xf32>
    %123 = arith.addf %115, %122 : vector<128x128xf32>
    %c7 = arith.constant 7 : index
    %124 = memref.load %arg6[%c7] : memref<20xf32, #tpu.memory_space<smem>>
    %125 = vector.broadcast %124 : f32 to vector<128x128xf32>
    %126 = arith.mulf %125, %50 : vector<128x128xf32>
    %127 = arith.addf %119, %126 : vector<128x128xf32>
    %c17 = arith.constant 17 : index
    %128 = memref.load %arg6[%c17] : memref<20xf32, #tpu.memory_space<smem>>
    %129 = vector.broadcast %128 : f32 to vector<128x128xf32>
    %130 = arith.mulf %129, %50 : vector<128x128xf32>
    %131 = arith.addf %123, %130 : vector<128x128xf32>
    %c1_i32_19 = arith.constant 1 : i32
    %132 = vector.broadcast %c1_i32_19 : i32 to vector<1x128xi32>
    %133 = arith.addi %51, %132 : vector<1x128xi32>
    %c0_i32_20 = arith.constant 0 : i32
    %134 = vector.broadcast %c0_i32_20 : i32 to vector<1x128xi32>
    %135 = arith.cmpi sge, %133, %134 : vector<1x128xi32>
    %c1_i32_21 = arith.constant 1 : i32
    %136 = vector.broadcast %c1_i32_21 : i32 to vector<1x128xi32>
    %137 = arith.addi %51, %136 : vector<1x128xi32>
    %c128_i32_22 = arith.constant 128 : i32
    %138 = vector.broadcast %c128_i32_22 : i32 to vector<1x128xi32>
    %139 = arith.cmpi slt, %137, %138 : vector<1x128xi32>
    %140 = arith.andi %135, %139 : vector<1x128xi1>
    %141 = arith.extui %140 : vector<1x128xi1> to vector<1x128xi32>
    %142 = arith.sitofp %141 : vector<1x128xi32> to vector<1x128xf32>
    %c127_i32 = arith.constant 127 : i32
    %143 = tpu.dynamic_rotate %32 by %c127_i32 dim 1 : vector<128x128xf32>, i32 -> vector<128x128xf32>
    %144 = vector.broadcast %142 : vector<1x128xf32> to vector<128x128xf32>
    %145 = arith.mulf %143, %144 : vector<128x128xf32>
    %c3 = arith.constant 3 : index
    %146 = memref.load %arg6[%c3] : memref<20xf32, #tpu.memory_space<smem>>
    %147 = vector.broadcast %146 : f32 to vector<128x128xf32>
    %148 = arith.mulf %147, %145 : vector<128x128xf32>
    %149 = arith.addf %127, %148 : vector<128x128xf32>
    %c13 = arith.constant 13 : index
    %150 = memref.load %arg6[%c13] : memref<20xf32, #tpu.memory_space<smem>>
    %151 = vector.broadcast %150 : f32 to vector<128x128xf32>
    %152 = arith.mulf %151, %145 : vector<128x128xf32>
    %153 = arith.addf %131, %152 : vector<128x128xf32>
    %c127_i32_23 = arith.constant 127 : i32
    %154 = tpu.dynamic_rotate %50 by %c127_i32_23 dim 1 : vector<128x128xf32>, i32 -> vector<128x128xf32>
    %155 = vector.broadcast %142 : vector<1x128xf32> to vector<128x128xf32>
    %156 = arith.mulf %154, %155 : vector<128x128xf32>
    %c8 = arith.constant 8 : index
    %157 = memref.load %arg6[%c8] : memref<20xf32, #tpu.memory_space<smem>>
    %158 = vector.broadcast %157 : f32 to vector<128x128xf32>
    %159 = arith.mulf %158, %156 : vector<128x128xf32>
    %160 = arith.addf %149, %159 : vector<128x128xf32>
    %c18 = arith.constant 18 : index
    %161 = memref.load %arg6[%c18] : memref<20xf32, #tpu.memory_space<smem>>
    %162 = vector.broadcast %161 : f32 to vector<128x128xf32>
    %163 = arith.mulf %162, %156 : vector<128x128xf32>
    %164 = arith.addf %153, %163 : vector<128x128xf32>
    %c2_i32_24 = arith.constant 2 : i32
    %165 = vector.broadcast %c2_i32_24 : i32 to vector<1x128xi32>
    %166 = arith.addi %51, %165 : vector<1x128xi32>
    %c0_i32_25 = arith.constant 0 : i32
    %167 = vector.broadcast %c0_i32_25 : i32 to vector<1x128xi32>
    %168 = arith.cmpi sge, %166, %167 : vector<1x128xi32>
    %c2_i32_26 = arith.constant 2 : i32
    %169 = vector.broadcast %c2_i32_26 : i32 to vector<1x128xi32>
    %170 = arith.addi %51, %169 : vector<1x128xi32>
    %c128_i32_27 = arith.constant 128 : i32
    %171 = vector.broadcast %c128_i32_27 : i32 to vector<1x128xi32>
    %172 = arith.cmpi slt, %170, %171 : vector<1x128xi32>
    %173 = arith.andi %168, %172 : vector<1x128xi1>
    %174 = arith.extui %173 : vector<1x128xi1> to vector<1x128xi32>
    %175 = arith.sitofp %174 : vector<1x128xi32> to vector<1x128xf32>
    %c126_i32 = arith.constant 126 : i32
    %176 = tpu.dynamic_rotate %32 by %c126_i32 dim 1 : vector<128x128xf32>, i32 -> vector<128x128xf32>
    %177 = vector.broadcast %175 : vector<1x128xf32> to vector<128x128xf32>
    %178 = arith.mulf %176, %177 : vector<128x128xf32>
    %c4 = arith.constant 4 : index
    %179 = memref.load %arg6[%c4] : memref<20xf32, #tpu.memory_space<smem>>
    %180 = vector.broadcast %179 : f32 to vector<128x128xf32>
    %181 = arith.mulf %180, %178 : vector<128x128xf32>
    %182 = arith.addf %160, %181 : vector<128x128xf32>
    %c14 = arith.constant 14 : index
    %183 = memref.load %arg6[%c14] : memref<20xf32, #tpu.memory_space<smem>>
    %184 = vector.broadcast %183 : f32 to vector<128x128xf32>
    %185 = arith.mulf %184, %178 : vector<128x128xf32>
    %186 = arith.addf %164, %185 : vector<128x128xf32>
    %c126_i32_28 = arith.constant 126 : i32
    %187 = tpu.dynamic_rotate %50 by %c126_i32_28 dim 1 : vector<128x128xf32>, i32 -> vector<128x128xf32>
    %188 = vector.broadcast %175 : vector<1x128xf32> to vector<128x128xf32>
    %189 = arith.mulf %187, %188 : vector<128x128xf32>
    %c9 = arith.constant 9 : index
    %190 = memref.load %arg6[%c9] : memref<20xf32, #tpu.memory_space<smem>>
    %191 = vector.broadcast %190 : f32 to vector<128x128xf32>
    %192 = arith.mulf %191, %189 : vector<128x128xf32>
    %193 = arith.addf %182, %192 : vector<128x128xf32>
    %c19 = arith.constant 19 : index
    %194 = memref.load %arg6[%c19] : memref<20xf32, #tpu.memory_space<smem>>
    %195 = vector.broadcast %194 : f32 to vector<128x128xf32>
    %196 = arith.mulf %195, %189 : vector<128x128xf32>
    %197 = arith.addf %186, %196 : vector<128x128xf32>
    %c0_29 = arith.constant 0 : index
    %198 = memref.load %arg7[%c0_29] : memref<2xf32, #tpu.memory_space<smem>>
    %199 = vector.broadcast %198 : f32 to vector<128x128xf32>
    %200 = arith.addf %193, %199 : vector<128x128xf32>
    %201 = arith.negf %200 : vector<128x128xf32>
    %202 = math.exp %201 : vector<128x128xf32>
    %cst_30 = arith.constant 1.000000e+00 : f32
    %203 = vector.broadcast %cst_30 : f32 to vector<128x128xf32>
    %204 = arith.addf %203, %202 : vector<128x128xf32>
    %205 = arith.divf %203, %204 : vector<128x128xf32>
    %206 = arith.mulf %200, %205 : vector<128x128xf32>
    %207 = arith.truncf %206 : vector<128x128xf32> to vector<128x128xbf16>
    %208 = vector.shape_cast %207 : vector<128x128xbf16> to vector<1x128x128xbf16>
    %209 = vector.extract_strided_slice %14 {offsets = [0, 0], sizes = [128, 64], strides = [1, 1]} : vector<128x128xbf16> to vector<128x64xbf16>
    %210 = vector.shape_cast %209 : vector<128x64xbf16> to vector<1x128x64xbf16>
    "tpu.trace_start"() <{level = 10 : i32, message = "bnm,bmd->bnd"}> : () -> ()
    %cst_31 = arith.constant dense<0.000000e+00> : vector<1x128x64xf32>
    %211 = tpu.matmul %208, %210, %cst_31 {dimension_numbers = #tpu.dot_dimension_numbers<[2], [1], [1], [2], [0, 0, 0, 1, 1, 2], [0], [0]>} : vector<1x128x128xbf16>, vector<1x128x64xbf16>, vector<1x128x64xf32> -> vector<1x128x64xf32>
    "tpu.trace_stop"() : () -> ()
    %212 = vector.shape_cast %211 : vector<1x128x64xf32> to vector<128x64xf32>
    %c1_32 = arith.constant 1 : index
    %213 = memref.load %arg7[%c1_32] : memref<2xf32, #tpu.memory_space<smem>>
    %214 = vector.broadcast %213 : f32 to vector<128x128xf32>
    %215 = arith.addf %197, %214 : vector<128x128xf32>
    %216 = arith.negf %215 : vector<128x128xf32>
    %217 = math.exp %216 : vector<128x128xf32>
    %cst_33 = arith.constant 1.000000e+00 : f32
    %218 = vector.broadcast %cst_33 : f32 to vector<128x128xf32>
    %219 = arith.addf %218, %217 : vector<128x128xf32>
    %220 = arith.divf %218, %219 : vector<128x128xf32>
    %221 = arith.mulf %215, %220 : vector<128x128xf32>
    %222 = arith.truncf %221 : vector<128x128xf32> to vector<128x128xbf16>
    %223 = vector.shape_cast %222 : vector<128x128xbf16> to vector<1x128x128xbf16>
    %224 = vector.extract_strided_slice %14 {offsets = [0, 64], sizes = [128, 64], strides = [1, 1]} : vector<128x128xbf16> to vector<128x64xbf16>
    %225 = vector.shape_cast %224 : vector<128x64xbf16> to vector<1x128x64xbf16>
    "tpu.trace_start"() <{level = 10 : i32, message = "bnm,bmd->bnd"}> : () -> ()
    %cst_34 = arith.constant dense<0.000000e+00> : vector<1x128x64xf32>
    %226 = tpu.matmul %223, %225, %cst_34 {dimension_numbers = #tpu.dot_dimension_numbers<[2], [1], [1], [2], [0, 0, 0, 1, 1, 2], [0], [0]>} : vector<1x128x128xbf16>, vector<1x128x64xbf16>, vector<1x128x64xf32> -> vector<1x128x64xf32>
    "tpu.trace_stop"() : () -> ()
    %227 = vector.shape_cast %226 : vector<1x128x64xf32> to vector<128x64xf32>
    %228 = tpu.concatenate %212, %227 in 1 : vector<128x64xf32>, vector<128x64xf32> -> vector<128x128xf32>
    %229 = arith.truncf %228 : vector<128x128xf32> to vector<128x128xbf16>
    %c0_35 = arith.constant 0 : index
    %c0_36 = arith.constant 0 : index
    %230 = vector.load %arg3[%c0_35, %c0_36] : memref<128x128xbf16, #tpu.memory_space<vmem>>, vector<128x128xbf16>
    %cst_37 = arith.constant dense<0.000000e+00> : vector<128x128xf32>
    %231 = tpu.matmul %229, %230, %cst_37 {dimension_numbers = #tpu.dot_dimension_numbers<[1], [0], [0], [1], [0, 0, 1, 1], [], []>} : vector<128x128xbf16>, vector<128x128xbf16>, vector<128x128xf32> -> vector<128x128xf32>
    %c0_38 = arith.constant 0 : index
    %c0_39 = arith.constant 0 : index
    %232 = vector.load %arg5[%c0_38, %c0_39] : memref<1x128xf32, #tpu.memory_space<vmem>>, vector<1x128xf32>
    %233 = vector.broadcast %232 : vector<1x128xf32> to vector<128x128xf32>
    %234 = arith.addf %231, %233 : vector<128x128xf32>
    %235 = arith.negf %234 : vector<128x128xf32>
    %236 = math.exp %235 : vector<128x128xf32>
    %cst_40 = arith.constant 1.000000e+00 : f32
    %237 = vector.broadcast %cst_40 : f32 to vector<128x128xf32>
    %238 = arith.addf %237, %236 : vector<128x128xf32>
    %239 = arith.divf %237, %238 : vector<128x128xf32>
    %240 = arith.mulf %239, %228 : vector<128x128xf32>
    %c0_41 = arith.constant 0 : index
    %c0_42 = arith.constant 0 : index
    %241 = vector.load %arg1[%c0_41, %c0_42] : memref<128x128xbf16, #tpu.memory_space<vmem>>, vector<128x128xbf16>
    %242 = arith.extf %241 : vector<128x128xbf16> to vector<128x128xf32>
    %243 = arith.addf %240, %242 : vector<128x128xf32>
    %244 = arith.truncf %243 : vector<128x128xf32> to vector<128x128xbf16>
    %c0_43 = arith.constant 0 : index
    %c0_44 = arith.constant 0 : index
    %245 = vector.load %arg8[%c0_43, %c0_44] : memref<128x128xbf16, #tpu.memory_space<vmem>>, vector<128x128xbf16>
    tpu.vector_store %arg8[%c0_43, %c0_44], %244 {strides = array<i32>} : memref<128x128xbf16, #tpu.memory_space<vmem>>, vector<128x128xbf16>,
    return
  }
  func.func @transform_0(%arg0: i32) -> (i32, i32) {
    %c0_i32 = arith.constant 0 : i32
    %c0_i32_0 = arith.constant 0 : i32
    return %arg0, %c0_i32 : i32, i32
  }
  func.func @transform_1(%arg0: i32) -> (i32, i32) {
    %c0_i32 = arith.constant 0 : i32
    %c0_i32_0 = arith.constant 0 : i32
    %c0_i32_1 = arith.constant 0 : i32
    return %c0_i32, %c0_i32_0 : i32, i32
  }
  func.func @transform_2(%arg0: i32) -> (i32, i32) {
    %c0_i32 = arith.constant 0 : i32
    %c0_i32_0 = arith.constant 0 : i32
    %c0_i32_1 = arith.constant 0 : i32
    return %c0_i32, %c0_i32_0 : i32, i32
  }
  func.func @transform_3(%arg0: i32) -> (i32, i32) {
    %c0_i32 = arith.constant 0 : i32
    %c0_i32_0 = arith.constant 0 : i32
    %c0_i32_1 = arith.constant 0 : i32
    return %c0_i32, %c0_i32_0 : i32, i32
  }
  func.func @transform_4(%arg0: i32) -> (i32, i32) {
    %c0_i32 = arith.constant 0 : i32
    %c0_i32_0 = arith.constant 0 : i32
    %c0_i32_1 = arith.constant 0 : i32
    return %c0_i32, %c0_i32_0 : i32, i32
  }
  func.func @transform_5(%arg0: i32) -> i32 {
    %c0_i32 = arith.constant 0 : i32
    %c0_i32_0 = arith.constant 0 : i32
    return %c0_i32 : i32
  }
  func.func @transform_6(%arg0: i32) -> i32 {
    %c0_i32 = arith.constant 0 : i32
    %c0_i32_0 = arith.constant 0 : i32
    return %c0_i32 : i32
  }
  func.func @transform_7(%arg0: i32) -> (i32, i32) {
    %c0_i32 = arith.constant 0 : i32
    %c0_i32_0 = arith.constant 0 : i32
    return %arg0, %c0_i32 : i32, i32
  }
}

</mosaic_0001>

<llo_original>
// kernel: tpu_custom_call.1
$region0: #{tpu_custom_call.1}
  #allocation0 [shape = 'u32[]', space=smem, size = 0x4, offset = 0x4, fixed_abs, tag = 'smem constant byte address 0x4 - core index']
  #allocation1 [shape = 'u32[72,128]{1,0:T(1,128)}', space=vmem, size = 0x9000, scoped, tag = 'internal scratch']
  %s0 = inlined_call_operand.hbm [shape: bf16[512,128], index: 0, kind: input, shape index: {}]
  %s1 = inlined_call_operand.hbm [shape: bf16[128,384], index: 1, kind: input, shape index: {}]
  %s2 = inlined_call_operand.hbm [shape: bf16[128,128], index: 2, kind: input, shape index: {}]
  %s3 = inlined_call_operand.hbm [shape: f32[1,384], index: 3, kind: input, shape index: {}]
  %s4 = inlined_call_operand.vmem [shape: f32[1,128], index: 4, kind: input, shape index: {}]
  %s5 = inlined_call_operand.vmem [shape: f32[20], index: 5, kind: input, shape index: {}]
  %s6 = inlined_call_operand.vmem [shape: f32[2], index: 6, kind: input, shape index: {}]
  %s7 = inlined_call_operand.hbm [shape: bf16[512,128], index: 7, kind: output, shape index: {}]
  %s8 = sld [smem:[#allocation0]]
  $region85: #{tpu_custom_call.1} parent=0
    _
  %s10 = ssub.s32 1, %s8
  %s11 = scalar_select 0, %s10, %s8
  $region1: #{tpu_custom_call.1} parent=0
    #allocation2 [shape = 'u8[65536]{0}', space=vmem, size = 0x10000, scoped, tag = 'input window, operand 0']
    #allocation3 [shape = 's32[2]{0}', space=sflag, size = 0x8, scoped, tag = 'scoped memory for tpu_custom_call.1']
    #allocation4 [shape = 's32[2]{0}', space=sflag, size = 0x8, scoped, tag = 'scoped memory for tpu_custom_call.1']
    #allocation5 [shape = 's32[2]{0}', space=sflag, size = 0x8, scoped, tag = 'scoped memory for tpu_custom_call.1']
    #allocation6 [shape = 'u8[98304]{0}', space=vmem, size = 0x18000, scoped, tag = 'input window, operand 1, single buffered']
    #allocation7 [shape = 's32[1]{0}', space=sflag, size = 0x4, scoped, tag = 'scoped memory for tpu_custom_call.1']
    #allocation8 [shape = 'u8[32768]{0}', space=vmem, size = 0x8000, scoped, tag = 'input window, operand 2, single buffered']
    #allocation9 [shape = 'u8[1536]{0}', space=vmem, size = 0x800, scoped, tag = 'input window, operand 3, single buffered']
    #allocation10 [shape = 's32[1]{0}', space=sflag, size = 0x4, scoped, tag = 'scoped memory for tpu_custom_call.1']
    #allocation11 [shape = 'u8[512]{0}', space=smem, size = 0x200, scoped, tag = 'input window, operand 5, single buffered']
    #allocation12 [shape = 'u8[512]{0}', space=smem, size = 0x200, scoped, tag = 'input window, operand 6, single buffered']
    #allocation13 [shape = 's32[1]{0}', space=sflag, size = 0x4, scoped, tag = 'scoped memory for tpu_custom_call.1']
    #allocation14 [shape = 'u8[65536]{0}', space=vmem, size = 0x10000, scoped, tag = 'output window, operand 0']
    %12 = vsyncpa [#allocation3], 0
    %s13 = scalar_lea.sflag [#allocation3], 1
    %14 = vsyncpa %s13, 0
    %15 = vsyncpa [#allocation7], 0
    %16 = vsyncpa [#allocation10], 0
    %17 = vsyncpa [#allocation5], 0
    %18 = vsyncpa [#allocation13], 0
    %19 = vsyncpa [#allocation4], 0
    %s20 = scalar_lea.sflag [#allocation4], 1
    %21 = vsyncpa %s20, 0
    loop: start=0, step=1, limit=6
    $region2: #{tpu_custom_call.1} parent=1 // loop_pre_header
      _
    $region3: #{tpu_custom_call.1} parent=1 // loop_header
      %s23 = sphi 0, %s27
      %p24 = scmp.ge.s32.totalorder %s23, 6
      %s33 = sphi 0, %s35
      %s36 = sphi 0, %s33
      %s37 = sphi 0, %s36
      %s53 = sphi 0, %s37
      %s57 = sphi 0, %s57
      %s59 = sphi 0, %s57
      %s60 = sphi 0, %s59
      %s74 = sphi 0, %s60
      %s78 = sphi 0, %s78
      %s80 = sphi 0, %s78
      %s81 = sphi 0, %s80
      %s95 = sphi 0, %s81
      %s99 = sphi 0, %s99
      %s101 = sphi 0, %s99
      %s102 = sphi 0, %s101
      %s116 = sphi 0, %s102
      %s120 = sphi 0, %s120
      %s122 = sphi 0, %s120
      %s123 = sphi 0, %s122
      %s137 = sphi 0, %s123
      %s141 = sphi 0, %s141
      %s143 = sphi 0, %s141
      %s144 = sphi 0, %s143
      %s158 = sphi 0, %s144
      %s162 = sphi 0, %s162
      %s164 = sphi 0, %s162
      %s165 = sphi 0, %s164
      %s179 = sphi 0, %s165
      %s185 = sphi 0, %s187
      %s188 = sphi 0, %s185
      %s189 = sphi 0, %s188
      %s205 = sphi 0, %s189
    $region4: #{tpu_custom_call.1} parent=1 // loop_header_branch
      %26 = sbr.rel (%p24) target = $region8
    $region5: #{tpu_custom_call.1} parent=1 // loop_body
      %s28 = ssub.s32 %s23, 1
      %s29 = ssub.s32 %s23, 2
      %s30 = sadd.s32 %s23, 1
      %s31 = ssub.s32 %s23, %s30
      %p32 = scmp.eq.s32.totalorder %s31, 0
      %s34 = sadd.s32 %s33, 1
      %s35 = scalar_select %p32, %s33, %s34
      %p38 = pneg %p32
      %p39 = scmp.eq.s32.totalorder %s23, 3
      %p40 = por %p38, %p39
      %p41 = scmp.ne.s32.totalorder %s33, %s36
      %p42 = scmp.eq.s32.totalorder %s23, 0
      %p43 = por %p41, %p42
      %p44 = scmp.ne.s32.totalorder %s33, %s36
      %p45 = scmp.eq.s32.totalorder %s28, 3
      %p46 = por %p44, %p45
      %p47 = scmp.ne.s32.totalorder %s36, %s37
      %p48 = scmp.eq.s32.totalorder %s28, 0
      %p49 = por %p47, %p48
      %p50 = scmp.ne.s32.totalorder %s36, %s37
      %p51 = scmp.eq.s32.totalorder %s29, 3
      %p52 = por %p50, %p51
      %p54 = scmp.ne.s32.totalorder %s37, %s53
      %p55 = scmp.eq.s32.totalorder %s29, 0
      %p56 = por %p54, %p55
      %s58 = sadd.s32 %s57, 1
      %p61 = scmp.eq.s32.totalorder %s23, 3
      %p62 = scmp.ne.s32.totalorder %s57, %s59
      %p63 = scmp.eq.s32.totalorder %s23, 0
      %p64 = por %p62, %p63
      %p65 = scmp.ne.s32.totalorder %s57, %s59
      %p66 = scmp.eq.s32.totalorder %s28, 3
      %p67 = por %p65, %p66
      %p68 = scmp.ne.s32.totalorder %s59, %s60
      %p69 = scmp.eq.s32.totalorder %s28, 0
      %p70 = por %p68, %p69
      %p71 = scmp.ne.s32.totalorder %s59, %s60
      %p72 = scmp.eq.s32.totalorder %s29, 3
      %p73 = por %p71, %p72
      %p75 = scmp.ne.s32.totalorder %s60, %s74
      %p76 = scmp.eq.s32.totalorder %s29, 0
      %p77 = por %p75, %p76
      %s79 = sadd.s32 %s78, 1
      %p82 = scmp.eq.s32.totalorder %s23, 3
      %p83 = scmp.ne.s32.totalorder %s78, %s80
      %p84 = scmp.eq.s32.totalorder %s23, 0
      %p85 = por %p83, %p84
      %p86 = scmp.ne.s32.totalorder %s78, %s80
      %p87 = scmp.eq.s32.totalorder %s28, 3
      %p88 = por %p86, %p87
      %p89 = scmp.ne.s32.totalorder %s80, %s81
      %p90 = scmp.eq.s32.totalorder %s28, 0
      %p91 = por %p89, %p90
      %p92 = scmp.ne.s32.totalorder %s80, %s81
      %p93 = scmp.eq.s32.totalorder %s29, 3
      %p94 = por %p92, %p93
      %p96 = scmp.ne.s32.totalorder %s81, %s95
      %p97 = scmp.eq.s32.totalorder %s29, 0
      %p98 = por %p96, %p97
      %s100 = sadd.s32 %s99, 1
      %p103 = scmp.eq.s32.totalorder %s23, 3
      %p104 = scmp.ne.s32.totalorder %s99, %s101
      %p105 = scmp.eq.s32.totalorder %s23, 0
      %p106 = por %p104, %p105
      %p107 = scmp.ne.s32.totalorder %s99, %s101
      %p108 = scmp.eq.s32.totalorder %s28, 3
      %p109 = por %p107, %p108
      %p110 = scmp.ne.s32.totalorder %s101, %s102
      %p111 = scmp.eq.s32.totalorder %s28, 0
      %p112 = por %p110, %p111
      %p113 = scmp.ne.s32.totalorder %s101, %s102
      %p114 = scmp.eq.s32.totalorder %s29, 3
      %p115 = por %p113, %p114
      %p117 = scmp.ne.s32.totalorder %s102, %s116
      %p118 = scmp.eq.s32.totalorder %s29, 0
      %p119 = por %p117, %p118
      %s121 = sadd.s32 %s120, 1
      %p124 = scmp.eq.s32.totalorder %s23, 3
      %p125 = scmp.ne.s32.totalorder %s120, %s122
      %p126 = scmp.eq.s32.totalorder %s23, 0
      %p127 = por %p125, %p126
      %p128 = scmp.ne.s32.totalorder %s120, %s122
      %p129 = scmp.eq.s32.totalorder %s28, 3
      %p130 = por %p128, %p129
      %p131 = scmp.ne.s32.totalorder %s122, %s123
      %p132 = scmp.eq.s32.totalorder %s28, 0
      %p133 = por %p131, %p132
      %p134 = scmp.ne.s32.totalorder %s122, %s123
      %p135 = scmp.eq.s32.totalorder %s29, 3
      %p136 = por %p134, %p135
      %p138 = scmp.ne.s32.totalorder %s123, %s137
      %p139 = scmp.eq.s32.totalorder %s29, 0
      %p140 = por %p138, %p139
      %s142 = sadd.s32 %s141, 1
      %p145 = scmp.eq.s32.totalorder %s23, 3
      %p146 = scmp.ne.s32.totalorder %s141, %s143
      %p147 = scmp.eq.s32.totalorder %s23, 0
      %p148 = por %p146, %p147
      %p149 = scmp.ne.s32.totalorder %s141, %s143
      %p150 = scmp.eq.s32.totalorder %s28, 3
      %p151 = por %p149, %p150
      %p152 = scmp.ne.s32.totalorder %s143, %s144
      %p153 = scmp.eq.s32.totalorder %s28, 0
      %p154 = por %p152, %p153
      %p155 = scmp.ne.s32.totalorder %s143, %s144
      %p156 = scmp.eq.s32.totalorder %s29, 3
      %p157 = por %p155, %p156
      %p159 = scmp.ne.s32.totalorder %s144, %s158
      %p160 = scmp.eq.s32.totalorder %s29, 0
      %p161 = por %p159, %p160
      %s163 = sadd.s32 %s162, 1
      %p166 = scmp.eq.s32.totalorder %s23, 3
      %p167 = scmp.ne.s32.totalorder %s162, %s164
      %p168 = scmp.eq.s32.totalorder %s23, 0
      %p169 = por %p167, %p168
      %p170 = scmp.ne.s32.totalorder %s162, %s164
      %p171 = scmp.eq.s32.totalorder %s28, 3
      %p172 = por %p170, %p171
      %p173 = scmp.ne.s32.totalorder %s164, %s165
      %p174 = scmp.eq.s32.totalorder %s28, 0
      %p175 = por %p173, %p174
      %p176 = scmp.ne.s32.totalorder %s164, %s165
      %p177 = scmp.eq.s32.totalorder %s29, 3
      %p178 = por %p176, %p177
      %p180 = scmp.ne.s32.totalorder %s165, %s179
      %p181 = scmp.eq.s32.totalorder %s29, 0
      %p182 = por %p180, %p181
      %s183 = ssub.s32 %s23, %s30
      %p184 = scmp.eq.s32.totalorder %s183, 0
      %s186 = sadd.s32 %s185, 1
      %s187 = scalar_select %p184, %s185, %s186
      %p190 = pneg %p184
      %p191 = scmp.eq.s32.totalorder %s23, 3
      %p192 = por %p190, %p191
      %p193 = scmp.ne.s32.totalorder %s185, %s188
      %p194 = scmp.eq.s32.totalorder %s23, 0
      %p195 = por %p193, %p194
      %p196 = scmp.ne.s32.totalorder %s185, %s188
      %p197 = scmp.eq.s32.totalorder %s28, 3
      %p198 = por %p196, %p197
      %p199 = scmp.ne.s32.totalorder %s188, %s189
      %p200 = scmp.eq.s32.totalorder %s28, 0
      %p201 = por %p199, %p200
      %p202 = scmp.ne.s32.totalorder %s188, %s189
      %p203 = scmp.eq.s32.totalorder %s29, 3
      %p204 = por %p202, %p203
      %p206 = scmp.ne.s32.totalorder %s189, %s205
      %p207 = scmp.eq.s32.totalorder %s29, 0
      %p208 = por %p206, %p207
      %p209 = scmp.le.s32.totalorder 1, %s23
      %p210 = scmp.lt.s32.totalorder %s23, 5
      %p211 = pnand %p209, %p210
      %p212 = pneg %p211
      // Predicated region
      $region9: #{tpu_custom_call.1} parent=5 // pred_check
        _
      $region10: #{tpu_custom_call.1} parent=5 // pred_check_branch
        %214 = sbr.rel (%p211) target = $region12
      $region11: #{tpu_custom_call.1} parent=5 // pred_region
        %s215 = ssub.s32 %s23, 1
        // Predicated region
        $region13: #{tpu_custom_call.1} parent=11 // pred_check
          %p216 = pneg %p70
        $region14: #{tpu_custom_call.1} parent=11 // pred_check_branch
          %218 = sbr.rel (%p216) target = $region16
        $region15: #{tpu_custom_call.1} parent=11 // pred_region
          %220 = vsyncadd [#allocation7], 0
          %s221 = sshll.u32 %s1, 4
          %s222 = int_to_ptr.hbm [resolvable:$true] %s221
          %s223 = sshll.u32 [#allocation6], 4
          %s224 = int_to_ptr.vmem [resolvable:$true] %s223
          %229 = dma.hbm_to_vmem [thread:$0]  %s222, 3072, %s224, [#allocation7], 192, 192, 12
        $region16: #{tpu_custom_call.1} parent=11 // pred_fallthru
          _
        // Predicated region
        $region17: #{tpu_custom_call.1} parent=11 // pred_check
          %p230 = pneg %p91
        $region18: #{tpu_custom_call.1} parent=11 // pred_check_branch
          %232 = sbr.rel (%p230) target = $region20
        $region19: #{tpu_custom_call.1} parent=11 // pred_region
          %234 = vsyncadd [#allocation7], 0
          %s235 = sshll.u32 %s2, 4
          %s236 = int_to_ptr.hbm [resolvable:$true] %s235
          %s237 = sshll.u32 [#allocation8], 4
          %s238 = int_to_ptr.vmem [resolvable:$true] %s237
          %243 = dma.hbm_to_vmem [thread:$0]  %s236, 1024, %s238, [#allocation7], 64, 64, 4
        $region20: #{tpu_custom_call.1} parent=11 // pred_fallthru
          _
        // Predicated region
        $region21: #{tpu_custom_call.1} parent=11 // pred_check
          %p244 = pneg %p112
        $region22: #{tpu_custom_call.1} parent=11 // pred_check_branch
          %246 = sbr.rel (%p244) target = $region24
        $region23: #{tpu_custom_call.1} parent=11 // pred_region
          %248 = vsyncadd [#allocation10], 0
          %s250 = sshll.u32 %s3, 4
          %s251 = int_to_ptr.hbm [resolvable:$true] %s250
          %s252 = sshll.u32 [#allocation9], 4
          %s253 = int_to_ptr.vmem [resolvable:$true] %s252
          %255 = dma.hbm_to_vmem [thread:$0]  %s251, 48, %s253, [#allocation10]
        $region24: #{tpu_custom_call.1} parent=11 // pred_fallthru
          _
        // Predicated region
        $region25: #{tpu_custom_call.1} parent=11 // pred_check
          %p256 = pneg %p133
        $region26: #{tpu_custom_call.1} parent=11 // pred_check_branch
          %258 = sbr.rel (%p256) target = $region28
        $region27: #{tpu_custom_call.1} parent=11 // pred_region
          _
        $region28: #{tpu_custom_call.1} parent=11 // pred_fallthru
          _
        // Predicated region
        $region29: #{tpu_custom_call.1} parent=11 // pred_check
          %p259 = pneg %p154
        $region30: #{tpu_custom_call.1} parent=11 // pred_check_branch
          %261 = sbr.rel (%p259) target = $region32
        $region31: #{tpu_custom_call.1} parent=11 // pred_region
          %263 = vsyncadd [#allocation5], 0
          %s265 = sshll.u32 %s5, 4
          %s266 = int_to_ptr.vmem [resolvable:$true] %s265
          %268 = dma.vmem_to_smem %s266, 16, [#allocation11], [#allocation5]
        $region32: #{tpu_custom_call.1} parent=11 // pred_fallthru
          _
        // Predicated region
        $region33: #{tpu_custom_call.1} parent=11 // pred_check
          %p269 = pneg %p175
        $region34: #{tpu_custom_call.1} parent=11 // pred_check_branch
          %271 = sbr.rel (%p269) target = $region36
        $region35: #{tpu_custom_call.1} parent=11 // pred_region
          %273 = vsyncadd [#allocation13], 0
          %s275 = sshll.u32 %s6, 4
          %s276 = int_to_ptr.vmem [resolvable:$true] %s275
          %278 = dma.vmem_to_smem %s276, 16, [#allocation12], [#allocation13]
        $region36: #{tpu_custom_call.1} parent=11 // pred_fallthru
          _
      $region12: #{tpu_custom_call.1} parent=5 // pred_fallthru
        _
      %p279 = scmp.lt.s32.totalorder %s23, 4
      // Predicated region
      $region37: #{tpu_custom_call.1} parent=5 // pred_check
        %p280 = pneg %p279
      $region38: #{tpu_custom_call.1} parent=5 // pred_check_branch
        %282 = sbr.rel (%p280) target = $region40
      $region39: #{tpu_custom_call.1} parent=5 // pred_region
        // Predicated region
        $region41: #{tpu_custom_call.1} parent=39 // pred_check
          %p283 = pneg %p43
        $region42: #{tpu_custom_call.1} parent=39 // pred_check_branch
          %285 = sbr.rel (%p283) target = $region44
        $region43: #{tpu_custom_call.1} parent=39 // pred_region
          %s286 = sand.u32 %s33, 1
          %s287 = scalar_lea.sflag [#allocation3], %s286
          %s288 = sand.u32 %s33, 1
          %s289 = smul.addr %s288, 64
          %s290 = scalar_lea.vmem [#allocation2], %s289
          %s291 = smul.u32 16, %s23
          %293 = vsyncadd %s287, 0
          %s294 = smul.addr %s291, 4
          %s295 = scalar_lea.hbm %s0, %s294
          %s296 = sshll.u32 %s295, 4
          %s297 = int_to_ptr.hbm [resolvable:$true] %s296
          %s298 = sshll.u32 %s290, 4
          %s299 = int_to_ptr.vmem [resolvable:$true] %s298
          %304 = dma.hbm_to_vmem [thread:$0]  %s297, 1024, %s299, %s287, 64, 64, 4
        $region44: #{tpu_custom_call.1} parent=39 // pred_fallthru
          _
      $region40: #{tpu_custom_call.1} parent=5 // pred_fallthru
        _
      %p305 = scmp.le.s32.totalorder 1, %s23
      %p306 = scmp.lt.s32.totalorder %s23, 5
      %p307 = pnand %p305, %p306
      %p308 = pneg %p307
      // Predicated region
      $region45: #{tpu_custom_call.1} parent=5 // pred_check
        _
      $region46: #{tpu_custom_call.1} parent=5 // pred_check_branch
        %310 = sbr.rel (%p307) target = $region48
      $region47: #{tpu_custom_call.1} parent=5 // pred_region
        %s311 = ssub.s32 %s23, 1
        %s312 = sand.u32 %s36, 1
        %s313 = scalar_lea.sflag [#allocation3], %s312
        %s314 = sand.u32 %s36, 1
        %s315 = smul.addr %s314, 64
        %s316 = scalar_lea.vmem [#allocation2], %s315
        // Predicated region
        $region49: #{tpu_custom_call.1} parent=47 // pred_check
          %p317 = pneg %p49
        $region50: #{tpu_custom_call.1} parent=47 // pred_check_branch
          %319 = sbr.rel (%p317) target = $region52
        $region51: #{tpu_custom_call.1} parent=47 // pred_region
          %321 = dma.done %s313, 1024
        $region52: #{tpu_custom_call.1} parent=47 // pred_fallthru
          _
        // Predicated region
        $region53: #{tpu_custom_call.1} parent=47 // pred_check
          %p322 = pneg %p70
        $region54: #{tpu_custom_call.1} parent=47 // pred_check_branch
          %324 = sbr.rel (%p322) target = $region56
        $region55: #{tpu_custom_call.1} parent=47 // pred_region
          %326 = dma.done [#allocation7], 3072
        $region56: #{tpu_custom_call.1} parent=47 // pred_fallthru
          _
        // Predicated region
        $region57: #{tpu_custom_call.1} parent=47 // pred_check
          %p327 = pneg %p91
        $region58: #{tpu_custom_call.1} parent=47 // pred_check_branch
          %329 = sbr.rel (%p327) target = $region60
        $region59: #{tpu_custom_call.1} parent=47 // pred_region
          %331 = dma.done [#allocation7], 1024
        $region60: #{tpu_custom_call.1} parent=47 // pred_fallthru
          _
        // Predicated region
        $region61: #{tpu_custom_call.1} parent=47 // pred_check
          %p332 = pneg %p112
        $region62: #{tpu_custom_call.1} parent=47 // pred_check_branch
          %334 = sbr.rel (%p332) target = $region64
        $region63: #{tpu_custom_call.1} parent=47 // pred_region
          %336 = dma.done [#allocation10], 48
        $region64: #{tpu_custom_call.1} parent=47 // pred_fallthru
          _
        // Predicated region
        $region65: #{tpu_custom_call.1} parent=47 // pred_check
          %p337 = pneg %p154
        $region66: #{tpu_custom_call.1} parent=47 // pred_check_branch
          %339 = sbr.rel (%p337) target = $region68
        $region67: #{tpu_custom_call.1} parent=47 // pred_region
          %341 = dma.done [#allocation5], 16
        $region68: #{tpu_custom_call.1} parent=47 // pred_fallthru
          _
        // Predicated region
        $region69: #{tpu_custom_call.1} parent=47 // pred_check
          %p342 = pneg %p175
        $region70: #{tpu_custom_call.1} parent=47 // pred_check_branch
          %344 = sbr.rel (%p342) target = $region72
        $region71: #{tpu_custom_call.1} parent=47 // pred_region
          %346 = dma.done [#allocation13], 16
        $region72: #{tpu_custom_call.1} parent=47 // pred_fallthru
          _
        %347 = sfence
        %s348 = sand.u32 %s36, 1
        %s349 = scalar_lea.sflag [#allocation3], %s348
        %s350 = sand.u32 %s36, 1
        %s351 = smul.addr %s350, 64
        %s352 = scalar_lea.vmem [#allocation2], %s351
        %p353 = pneg %p49
        %p354 = pneg %p46
        %p355 = pneg %p70
        %p356 = pneg %p67
        %p357 = pneg %p91
        %p358 = pneg %p88
        %p359 = pneg %p112
        %p360 = pneg %p109
        %p361 = pneg %p133
        %p362 = pneg %p130
        %p363 = pneg %p154
        %p364 = pneg %p151
        %p365 = pneg %p175
        %p366 = pneg %p172
        %p367 = pneg %p201
        %p368 = pneg %p198
        %s369 = sand.u32 %s188, 1
        %s370 = scalar_lea.sflag [#allocation4], %s369
        %s371 = sand.u32 %s188, 1
        %s372 = smul.addr %s371, 64
        %s373 = scalar_lea.vmem [#allocation14], %s372
        %s374 = smul.u32 16, %s28
        %s375 = smul.u32 16, %s28
        %v376 = vld [vmem:[%s316] sm:$0xf]
        %v377 = vld [vmem:[%s316 + $0x4] sm:$0xf]
        %v378 = vld [vmem:[%s316 + $0x8] sm:$0xf]
        %v379 = vld [vmem:[%s316 + $0xc] sm:$0xf]
        %v380 = vld [vmem:[%s316 + $0x10] sm:$0xf]
        %v381 = vld [vmem:[%s316 + $0x14] sm:$0xf]
        %v382 = vld [vmem:[%s316 + $0x18] sm:$0xf]
        %v383 = vld [vmem:[%s316 + $0x1c] sm:$0xf]
        %v384 = vld [vmem:[%s316 + $0x20] sm:$0xf]
        %v385 = vld [vmem:[%s316 + $0x24] sm:$0xf]
        %v386 = vld [vmem:[%s316 + $0x28] sm:$0xf]
        %v387 = vld [vmem:[%s316 + $0x2c] sm:$0xf]
        %v388 = vld [vmem:[%s316 + $0x30] sm:$0xf]
        %v389 = vld [vmem:[%s316 + $0x34] sm:$0xf]
        %v390 = vld [vmem:[%s316 + $0x38] sm:$0xf]
        %v391 = vld [vmem:[%s316 + $0x3c] sm:$0xf]
        %v392 = vld [vmem:[#allocation6] sm:$0xff]
        %v393 = vld [vmem:[#allocation6 + $0x8] sm:$0xf]
        %v394 = vld [vmem:[#allocation6 + $0xc] sm:$0xff]
        %v395 = vld [vmem:[#allocation6 + $0x14] sm:$0xf]
        %v396 = vld [vmem:[#allocation6 + $0x18] sm:$0xff]
        %v397 = vld [vmem:[#allocation6 + $0x20] sm:$0xf]
        %v398 = vld [vmem:[#allocation6 + $0x24] sm:$0xff]
        %v399 = vld [vmem:[#allocation6 + $0x2c] sm:$0xf]
        %v400 = vld [vmem:[#allocation6 + $0x30] sm:$0xff]
        %v401 = vld [vmem:[#allocation6 + $0x38] sm:$0xf]
        %v402 = vld [vmem:[#allocation6 + $0x3c] sm:$0xff]
        %v403 = vld [vmem:[#allocation6 + $0x44] sm:$0xf]
        %v404 = vld [vmem:[#allocation6 + $0x48] sm:$0xff]
        %v405 = vld [vmem:[#allocation6 + $0x50] sm:$0xf]
        %v406 = vld [vmem:[#allocation6 + $0x54] sm:$0xff]
        %v407 = vld [vmem:[#allocation6 + $0x5c] sm:$0xf]
        %v408 = vld [vmem:[#allocation6 + $0x60] sm:$0xff]
        %v409 = vld [vmem:[#allocation6 + $0x68] sm:$0xf]
        %v410 = vld [vmem:[#allocation6 + $0x6c] sm:$0xff]
        %v411 = vld [vmem:[#allocation6 + $0x74] sm:$0xf]
        %v412 = vld [vmem:[#allocation6 + $0x78] sm:$0xff]
        %v413 = vld [vmem:[#allocation6 + $0x80] sm:$0xf]
        %v414 = vld [vmem:[#allocation6 + $0x84] sm:$0xff]
        %v415 = vld [vmem:[#allocation6 + $0x8c] sm:$0xf]
        %v416 = vld [vmem:[#allocation6 + $0x90] sm:$0xff]
        %v417 = vld [vmem:[#allocation6 + $0x98] sm:$0xf]
        %v418 = vld [vmem:[#allocation6 + $0x9c] sm:$0xff]
        %v419 = vld [vmem:[#allocation6 + $0xa4] sm:$0xf]
        %v420 = vld [vmem:[#allocation6 + $0xa8] sm:$0xff]
        %v421 = vld [vmem:[#allocation6 + $0xb0] sm:$0xf]
        %v422 = vld [vmem:[#allocation6 + $0xb4] sm:$0xff]
        %v423 = vld [vmem:[#allocation6 + $0xbc] sm:$0xf]
        %v424 = vld [vmem:[#allocation9] sm:$0x7]
        %v426 = vperm.slane %v424, 0
        %v427 = vperm.slane %v424, 1
        %v428 = vperm.slane %v424, 2
        %v448 = vunpack.c.l.b16 %v376
        %v449 = vunpack.c.l.b16 %v377
        %v450 = vunpack.c.l.b16 %v378
        %v451 = vunpack.c.l.b16 %v379
        %v452 = vunpack.c.l.b16 %v380
        %v453 = vunpack.c.l.b16 %v381
        %v454 = vunpack.c.l.b16 %v382
        %v455 = vunpack.c.l.b16 %v383
        %v456 = vunpack.c.l.b16 %v384
        %v457 = vunpack.c.l.b16 %v385
        %v458 = vunpack.c.l.b16 %v386
        %v459 = vunpack.c.l.b16 %v387
        %v460 = vunpack.c.l.b16 %v388
        %v461 = vunpack.c.l.b16 %v389
        %v462 = vunpack.c.l.b16 %v390
        %v463 = vunpack.c.l.b16 %v391
        %v464 = vpack.c.b16 %v449, %v448
        %v465 = vpack.c.b16 %v451, %v450
        %v466 = vpack.c.b16 %v453, %v452
        %v467 = vpack.c.b16 %v455, %v454
        %v468 = vpack.c.b16 %v457, %v456
        %v469 = vpack.c.b16 %v459, %v458
        %v470 = vpack.c.b16 %v461, %v460
        %v471 = vpack.c.b16 %v463, %v462
        %v512 = vunpack.c.l.b16 %v392
        %v513 = vunpack.c.h.b16 %v392
        %v514 = vunpack.c.l.b16 %v393
        %v515 = vunpack.c.l.b16 %v394
        %v516 = vunpack.c.h.b16 %v394
        %v517 = vunpack.c.l.b16 %v395
        %v518 = vunpack.c.l.b16 %v396
        %v519 = vunpack.c.h.b16 %v396
        %v520 = vunpack.c.l.b16 %v397
        %v521 = vunpack.c.l.b16 %v398
        %v522 = vunpack.c.h.b16 %v398
        %v523 = vunpack.c.l.b16 %v399
        %v524 = vunpack.c.l.b16 %v400
        %v525 = vunpack.c.h.b16 %v400
        %v526 = vunpack.c.l.b16 %v401
        %v527 = vunpack.c.l.b16 %v402
        %v528 = vunpack.c.h.b16 %v402
        %v529 = vunpack.c.l.b16 %v403
        %v530 = vunpack.c.l.b16 %v404
        %v531 = vunpack.c.h.b16 %v404
        %v532 = vunpack.c.l.b16 %v405
        %v533 = vunpack.c.l.b16 %v406
        %v534 = vunpack.c.h.b16 %v406
        %v535 = vunpack.c.l.b16 %v407
        %v536 = vunpack.c.l.b16 %v408
        %v537 = vunpack.c.h.b16 %v408
        %v538 = vunpack.c.l.b16 %v409
        %v539 = vunpack.c.l.b16 %v410
        %v540 = vunpack.c.h.b16 %v410
        %v541 = vunpack.c.l.b16 %v411
        %v542 = vunpack.c.l.b16 %v412
        %v543 = vunpack.c.h.b16 %v412
        %v544 = vunpack.c.l.b16 %v413
        %v545 = vunpack.c.l.b16 %v414
        %v546 = vunpack.c.h.b16 %v414
        %v547 = vunpack.c.l.b16 %v415
        %v548 = vunpack.c.l.b16 %v416
        %v549 = vunpack.c.h.b16 %v416
        %v550 = vunpack.c.l.b16 %v417
        %v551 = vunpack.c.l.b16 %v418
        %v552 = vunpack.c.h.b16 %v418
        %v553 = vunpack.c.l.b16 %v419
        %v554 = vunpack.c.l.b16 %v420
        %v555 = vunpack.c.h.b16 %v420
        %v556 = vunpack.c.l.b16 %v421
        %v557 = vunpack.c.l.b16 %v422
        %v558 = vunpack.c.h.b16 %v422
        %v559 = vunpack.c.l.b16 %v423
        %v560 = vpack.c.b16 %v515, %v512
        %v561 = vpack.c.b16 %v516, %v513
        %v562 = vpack.c.b16 %v517, %v514
        %v563 = vpack.c.b16 %v521, %v518
        %v564 = vpack.c.b16 %v522, %v519
        %v565 = vpack.c.b16 %v523, %v520
        %v566 = vpack.c.b16 %v527, %v524
        %v567 = vpack.c.b16 %v528, %v525
        %v568 = vpack.c.b16 %v529, %v526
        %v569 = vpack.c.b16 %v533, %v530
        %v570 = vpack.c.b16 %v534, %v531
        %v571 = vpack.c.b16 %v535, %v532
        %v572 = vpack.c.b16 %v539, %v536
        %v573 = vpack.c.b16 %v540, %v537
        %v574 = vpack.c.b16 %v541, %v538
        %v575 = vpack.c.b16 %v545, %v542
        %v576 = vpack.c.b16 %v546, %v543
        %v577 = vpack.c.b16 %v547, %v544
        %v578 = vpack.c.b16 %v551, %v548
        %v579 = vpack.c.b16 %v552, %v549
        %v580 = vpack.c.b16 %v553, %v550
        %v581 = vpack.c.b16 %v557, %v554
        %v582 = vpack.c.b16 %v558, %v555
        %v583 = vpack.c.b16 %v559, %v556
        %608 = vmatpush.bf16.msra.mxu0 %v581
        %609 = vmatpush.bf16.msra.mxu0 %v578
        %610 = vmatpush.bf16.msra.mxu0 %v575
        %611 = vmatpush.bf16.msra.mxu0 %v572
        %612 = vmatpush.bf16.msra.mxu0 %v569
        %613 = vmatpush.bf16.msra.mxu0 %v566
        %614 = vmatpush.bf16.msra.mxu0 %v563
        %615 = vmatpush.bf16.msra.mxu0 %v560
        %616 = vmatmul.bf16.gmra.mxu0 %v464
        %v617 = vpop.f32.mrf.mxu0
        %v618 = vadd.f32 %v426, %v617
        %v619 = vpop.f32.mrf.mxu0
        %v620 = vadd.f32 %v426, %v619
        %621 = vmatmul.bf16.gmra.mxu0 %v465
        %v622 = vpop.f32.mrf.mxu0
        %v623 = vadd.f32 %v426, %v622
        %v624 = vpop.f32.mrf.mxu0
        %v625 = vadd.f32 %v426, %v624
        %626 = vmatmul.bf16.gmra.mxu0 %v466
        %v627 = vpop.f32.mrf.mxu0
        %v628 = vadd.f32 %v426, %v627
        %v629 = vpop.f32.mrf.mxu0
        %v630 = vadd.f32 %v426, %v629
        %631 = vmatmul.bf16.gmra.mxu0 %v467
        %v632 = vpop.f32.mrf.mxu0
        %v633 = vadd.f32 %v426, %v632
        %v634 = vpop.f32.mrf.mxu0
        %v635 = vadd.f32 %v426, %v634
        %636 = vmatmul.bf16.gmra.mxu0 %v468
        %v637 = vpop.f32.mrf.mxu0
        %v638 = vadd.f32 %v426, %v637
        %v639 = vpop.f32.mrf.mxu0
        %v640 = vadd.f32 %v426, %v639
        %641 = vmatmul.bf16.gmra.mxu0 %v469
        %v642 = vpop.f32.mrf.mxu0
        %v643 = vadd.f32 %v426, %v642
        %v644 = vpop.f32.mrf.mxu0
        %v645 = vadd.f32 %v426, %v644
        %646 = vmatmul.bf16.gmra.mxu0 %v470
        %v647 = vpop.f32.mrf.mxu0
        %v648 = vadd.f32 %v426, %v647
        %v649 = vpop.f32.mrf.mxu0
        %v650 = vadd.f32 %v426, %v649
        %651 = vmatmul.bf16.gmra.mxu0 %v471
        %v652 = vpop.f32.mrf.mxu0
        %v653 = vadd.f32 %v426, %v652
        %v654 = vpop.f32.mrf.mxu0
        %v655 = vadd.f32 %v426, %v654
        %656 = vdwg.mxu0
        %657 = vmatpush.bf16.msra.mxu0 %v582
        %658 = vmatpush.bf16.msra.mxu0 %v579
        %659 = vmatpush.bf16.msra.mxu0 %v576
        %660 = vmatpush.bf16.msra.mxu0 %v573
        %661 = vmatpush.bf16.msra.mxu0 %v570
        %662 = vmatpush.bf16.msra.mxu0 %v567
        %663 = vmatpush.bf16.msra.mxu0 %v564
        %664 = vmatpush.bf16.msra.mxu0 %v561
        %665 = vmatmul.bf16.gmra.mxu0 %v464
        %v666 = vpop.f32.mrf.mxu0
        %v667 = vadd.f32 %v427, %v666
        %v668 = vpop.f32.mrf.mxu0
        %v669 = vadd.f32 %v427, %v668
        %670 = vmatmul.bf16.gmra.mxu0 %v465
        %v671 = vpop.f32.mrf.mxu0
        %v672 = vadd.f32 %v427, %v671
        %v673 = vpop.f32.mrf.mxu0
        %v674 = vadd.f32 %v427, %v673
        %675 = vmatmul.bf16.gmra.mxu0 %v466
        %v676 = vpop.f32.mrf.mxu0
        %v677 = vadd.f32 %v427, %v676
        %v678 = vpop.f32.mrf.mxu0
        %v679 = vadd.f32 %v427, %v678
        %680 = vmatmul.bf16.gmra.mxu0 %v467
        %v681 = vpop.f32.mrf.mxu0
        %v682 = vadd.f32 %v427, %v681
        %v683 = vpop.f32.mrf.mxu0
        %v684 = vadd.f32 %v427, %v683
        %685 = vmatmul.bf16.gmra.mxu0 %v468
        %v686 = vpop.f32.mrf.mxu0
        %v687 = vadd.f32 %v427, %v686
        %v688 = vpop.f32.mrf.mxu0
        %v689 = vadd.f32 %v427, %v688
        %690 = vmatmul.bf16.gmra.mxu0 %v469
        %v691 = vpop.f32.mrf.mxu0
        %v692 = vadd.f32 %v427, %v691
        %v693 = vpop.f32.mrf.mxu0
        %v694 = vadd.f32 %v427, %v693
        %695 = vmatmul.bf16.gmra.mxu0 %v470
        %v696 = vpop.f32.mrf.mxu0
        %v697 = vadd.f32 %v427, %v696
        %v698 = vpop.f32.mrf.mxu0
        %v699 = vadd.f32 %v427, %v698
        %700 = vmatmul.bf16.gmra.mxu0 %v471
        %v701 = vpop.f32.mrf.mxu0
        %v702 = vadd.f32 %v427, %v701
        %v703 = vpop.f32.mrf.mxu0
        %v704 = vadd.f32 %v427, %v703
        %705 = vdwg.mxu0
        %706 = vmatpush.bf16.msra.mxu0 %v583
        %707 = vmatpush.bf16.msra.mxu0 %v580
        %708 = vmatpush.bf16.msra.mxu0 %v577
        %709 = vmatpush.bf16.msra.mxu0 %v574
        %710 = vmatpush.bf16.msra.mxu0 %v571
        %711 = vmatpush.bf16.msra.mxu0 %v568
        %712 = vmatpush.bf16.msra.mxu0 %v565
        %713 = vmatpush.bf16.msra.mxu0 %v562
        %714 = vmatmul.bf16.gmra.mxu0 %v464
        %v715 = vpop.f32.mrf.mxu0
        %v716 = vadd.f32 %v428, %v715
        %v717 = vpop.f32.mrf.mxu0
        %v718 = vadd.f32 %v428, %v717
        %719 = vmatmul.bf16.gmra.mxu0 %v465
        %v720 = vpop.f32.mrf.mxu0
        %v721 = vadd.f32 %v428, %v720
        %v722 = vpop.f32.mrf.mxu0
        %v723 = vadd.f32 %v428, %v722
        %724 = vmatmul.bf16.gmra.mxu0 %v466
        %v725 = vpop.f32.mrf.mxu0
        %v726 = vadd.f32 %v428, %v725
        %v727 = vpop.f32.mrf.mxu0
        %v728 = vadd.f32 %v428, %v727
        %729 = vmatmul.bf16.gmra.mxu0 %v467
        %v730 = vpop.f32.mrf.mxu0
        %v731 = vadd.f32 %v428, %v730
        %v732 = vpop.f32.mrf.mxu0
        %v733 = vadd.f32 %v428, %v732
        %734 = vmatmul.bf16.gmra.mxu0 %v468
        %v735 = vpop.f32.mrf.mxu0
        %v736 = vadd.f32 %v428, %v735
        %v737 = vpop.f32.mrf.mxu0
        %v738 = vadd.f32 %v428, %v737
        %739 = vmatmul.bf16.gmra.mxu0 %v469
        %v740 = vpop.f32.mrf.mxu0
        %v741 = vadd.f32 %v428, %v740
        %v742 = vpop.f32.mrf.mxu0
        %v743 = vadd.f32 %v428, %v742
        %744 = vmatmul.bf16.gmra.mxu0 %v470
        %v745 = vpop.f32.mrf.mxu0
        %v746 = vadd.f32 %v428, %v745
        %v747 = vpop.f32.mrf.mxu0
        %v748 = vadd.f32 %v428, %v747
        %749 = vmatmul.bf16.gmra.mxu0 %v471
        %v750 = vpop.f32.mrf.mxu0
        %v751 = vadd.f32 %v428, %v750
        %v752 = vpop.f32.mrf.mxu0
        %v753 = vadd.f32 %v428, %v752
        %754 = vdwg.mxu0
        %v755 = vxor.u32 %v716, 2147483648
        %v756 = vxor.u32 %v718, 2147483648
        %v757 = vxor.u32 %v721, 2147483648
        %v758 = vxor.u32 %v723, 2147483648
        %v759 = vxor.u32 %v726, 2147483648
        %v760 = vxor.u32 %v728, 2147483648
        %v761 = vxor.u32 %v731, 2147483648
        %v762 = vxor.u32 %v733, 2147483648
        %v763 = vxor.u32 %v736, 2147483648
        %v764 = vxor.u32 %v738, 2147483648
        %v765 = vxor.u32 %v741, 2147483648
        %v766 = vxor.u32 %v743, 2147483648
        %v767 = vxor.u32 %v746, 2147483648
        %v768 = vxor.u32 %v748, 2147483648
        %v769 = vxor.u32 %v751, 2147483648
        %v770 = vxor.u32 %v753, 2147483648
        %v771 = vmul.f32 %v755, 1.442695
        %v772 = vpow.pop %v771
        %v773 = vmul.f32 %v756, 1.442695
        %v774 = vpow.pop %v773
        %v775 = vmul.f32 %v757, 1.442695
        %v776 = vpow.pop %v775
        %v777 = vmul.f32 %v758, 1.442695
        %v778 = vpow.pop %v777
        %v779 = vmul.f32 %v759, 1.442695
        %v780 = vpow.pop %v779
        %v781 = vmul.f32 %v760, 1.442695
        %v782 = vpow.pop %v781
        %v783 = vmul.f32 %v761, 1.442695
        %v784 = vpow.pop %v783
        %v785 = vmul.f32 %v762, 1.442695
        %v786 = vpow.pop %v785
        %v787 = vmul.f32 %v763, 1.442695
        %v788 = vpow.pop %v787
        %v789 = vmul.f32 %v764, 1.442695
        %v790 = vpow.pop %v789
        %v791 = vmul.f32 %v765, 1.442695
        %v792 = vpow.pop %v791
        %v793 = vmul.f32 %v766, 1.442695
        %v794 = vpow.pop %v793
        %v795 = vmul.f32 %v767, 1.442695
        %v796 = vpow.pop %v795
        %v797 = vmul.f32 %v768, 1.442695
        %v798 = vpow.pop %v797
        %v799 = vmul.f32 %v769, 1.442695
        %v800 = vpow.pop %v799
        %v801 = vmul.f32 %v770, 1.442695
        %v802 = vpow.pop %v801
        %v803 = vadd.f32 %v772, 1.0
        %v804 = vadd.f32 %v774, 1.0
        %v805 = vadd.f32 %v776, 1.0
        %v806 = vadd.f32 %v778, 1.0
        %v807 = vadd.f32 %v780, 1.0
        %v808 = vadd.f32 %v782, 1.0
        %v809 = vadd.f32 %v784, 1.0
        %v810 = vadd.f32 %v786, 1.0
        %v811 = vadd.f32 %v788, 1.0
        %v812 = vadd.f32 %v790, 1.0
        %v813 = vadd.f32 %v792, 1.0
        %v814 = vadd.f32 %v794, 1.0
        %v815 = vadd.f32 %v796, 1.0
        %v816 = vadd.f32 %v798, 1.0
        %v817 = vadd.f32 %v800, 1.0
        %v818 = vadd.f32 %v802, 1.0
        %v819 = vrcp.pop %v803
        %v820 = vmul.f32 %v803, %v819
        %v821 = vsub.f32 1.0, %v820
        %v822 = vmul.f32 %v819, %v821
        %v823 = vadd.f32 %v819, %v822
        %vm824 = vweird.f32 %v803
        %vm825 = vweird.f32 %v819
        %vm826 = vmor %vm824, %vm825
        %v827 = vsel %vm826, %v819, %v823
        %v828 = vand.u32 2147483647, %v803
        %vm829 = vcmp.eq.f32.partialorder %v828, 8.507059e+37
        %v830 = vand.u32 %v803, 2147483648
        %v831 = vor.u32 1.1754944e-38, %v830
        %v832 = vsel %vm829, %v831, %v827
        %v833 = vmul.f32 1.0, %v832
        %v834 = vrcp.pop %v804
        %v835 = vmul.f32 %v804, %v834
        %v836 = vsub.f32 1.0, %v835
        %v837 = vmul.f32 %v834, %v836
        %v838 = vadd.f32 %v834, %v837
        %vm839 = vweird.f32 %v804
        %vm840 = vweird.f32 %v834
        %vm841 = vmor %vm839, %vm840
        %v842 = vsel %vm841, %v834, %v838
        %v843 = vand.u32 2147483647, %v804
        %vm844 = vcmp.eq.f32.partialorder %v843, 8.507059e+37
        %v845 = vand.u32 %v804, 2147483648
        %v846 = vor.u32 1.1754944e-38, %v845
        %v847 = vsel %vm844, %v846, %v842
        %v848 = vmul.f32 1.0, %v847
        %v849 = vrcp.pop %v805
        %v850 = vmul.f32 %v805, %v849
        %v851 = vsub.f32 1.0, %v850
        %v852 = vmul.f32 %v849, %v851
        %v853 = vadd.f32 %v849, %v852
        %vm854 = vweird.f32 %v805
        %vm855 = vweird.f32 %v849
        %vm856 = vmor %vm854, %vm855
        %v857 = vsel %vm856, %v849, %v853
        %v858 = vand.u32 2147483647, %v805
        %vm859 = vcmp.eq.f32.partialorder %v858, 8.507059e+37
        %v860 = vand.u32 %v805, 2147483648
        %v861 = vor.u32 1.1754944e-38, %v860
        %v862 = vsel %vm859, %v861, %v857
        %v863 = vmul.f32 1.0, %v862
        %v864 = vrcp.pop %v806
        %v865 = vmul.f32 %v806, %v864
        %v866 = vsub.f32 1.0, %v865
        %v867 = vmul.f32 %v864, %v866
        %v868 = vadd.f32 %v864, %v867
        %vm869 = vweird.f32 %v806
        %vm870 = vweird.f32 %v864
        %vm871 = vmor %vm869, %vm870
        %v872 = vsel %vm871, %v864, %v868
        %v873 = vand.u32 2147483647, %v806
        %vm874 = vcmp.eq.f32.partialorder %v873, 8.507059e+37
        %v875 = vand.u32 %v806, 2147483648
        %v876 = vor.u32 1.1754944e-38, %v875
        %v877 = vsel %vm874, %v876, %v872
        %v878 = vmul.f32 1.0, %v877
        %v879 = vrcp.pop %v807
        %v880 = vmul.f32 %v807, %v879
        %v881 = vsub.f32 1.0, %v880
        %v882 = vmul.f32 %v879, %v881
        %v883 = vadd.f32 %v879, %v882
        %vm884 = vweird.f32 %v807
        %vm885 = vweird.f32 %v879
        %vm886 = vmor %vm884, %vm885
        %v887 = vsel %vm886, %v879, %v883
        %v888 = vand.u32 2147483647, %v807
        %vm889 = vcmp.eq.f32.partialorder %v888, 8.507059e+37
        %v890 = vand.u32 %v807, 2147483648
        %v891 = vor.u32 1.1754944e-38, %v890
        %v892 = vsel %vm889, %v891, %v887
        %v893 = vmul.f32 1.0, %v892
        %v894 = vrcp.pop %v808
        %v895 = vmul.f32 %v808, %v894
        %v896 = vsub.f32 1.0, %v895
        %v897 = vmul.f32 %v894, %v896
        %v898 = vadd.f32 %v894, %v897
        %vm899 = vweird.f32 %v808
        %vm900 = vweird.f32 %v894
        %vm901 = vmor %vm899, %vm900
        %v902 = vsel %vm901, %v894, %v898
        %v903 = vand.u32 2147483647, %v808
        %vm904 = vcmp.eq.f32.partialorder %v903, 8.507059e+37
        %v905 = vand.u32 %v808, 2147483648
        %v906 = vor.u32 1.1754944e-38, %v905
        %v907 = vsel %vm904, %v906, %v902
        %v908 = vmul.f32 1.0, %v907
        %v909 = vrcp.pop %v809
        %v910 = vmul.f32 %v809, %v909
        %v911 = vsub.f32 1.0, %v910
        %v912 = vmul.f32 %v909, %v911
        %v913 = vadd.f32 %v909, %v912
        %vm914 = vweird.f32 %v809
        %vm915 = vweird.f32 %v909
        %vm916 = vmor %vm914, %vm915
        %v917 = vsel %vm916, %v909, %v913
        %v918 = vand.u32 2147483647, %v809
        %vm919 = vcmp.eq.f32.partialorder %v918, 8.507059e+37
        %v920 = vand.u32 %v809, 2147483648
        %v921 = vor.u32 1.1754944e-38, %v920
        %v922 = vsel %vm919, %v921, %v917
        %v923 = vmul.f32 1.0, %v922
        %v924 = vrcp.pop %v810
        %v925 = vmul.f32 %v810, %v924
        %v926 = vsub.f32 1.0, %v925
        %v927 = vmul.f32 %v924, %v926
        %v928 = vadd.f32 %v924, %v927
        %vm929 = vweird.f32 %v810
        %vm930 = vweird.f32 %v924
        %vm931 = vmor %vm929, %vm930
        %v932 = vsel %vm931, %v924, %v928
        %v933 = vand.u32 2147483647, %v810
        %vm934 = vcmp.eq.f32.partialorder %v933, 8.507059e+37
        %v935 = vand.u32 %v810, 2147483648
        %v936 = vor.u32 1.1754944e-38, %v935
        %v937 = vsel %vm934, %v936, %v932
        %v938 = vmul.f32 1.0, %v937
        %v939 = vrcp.pop %v811
        %v940 = vmul.f32 %v811, %v939
        %v941 = vsub.f32 1.0, %v940
        %v942 = vmul.f32 %v939, %v941
        %v943 = vadd.f32 %v939, %v942
        %vm944 = vweird.f32 %v811
        %vm945 = vweird.f32 %v939
        %vm946 = vmor %vm944, %vm945
        %v947 = vsel %vm946, %v939, %v943
        %v948 = vand.u32 2147483647, %v811
        %vm949 = vcmp.eq.f32.partialorder %v948, 8.507059e+37
        %v950 = vand.u32 %v811, 2147483648
        %v951 = vor.u32 1.1754944e-38, %v950
        %v952 = vsel %vm949, %v951, %v947
        %v953 = vmul.f32 1.0, %v952
        %v954 = vrcp.pop %v812
        %v955 = vmul.f32 %v812, %v954
        %v956 = vsub.f32 1.0, %v955
        %v957 = vmul.f32 %v954, %v956
        %v958 = vadd.f32 %v954, %v957
        %vm959 = vweird.f32 %v812
        %vm960 = vweird.f32 %v954
        %vm961 = vmor %vm959, %vm960
        %v962 = vsel %vm961, %v954, %v958
        %v963 = vand.u32 2147483647, %v812
        %vm964 = vcmp.eq.f32.partialorder %v963, 8.507059e+37
        %v965 = vand.u32 %v812, 2147483648
        %v966 = vor.u32 1.1754944e-38, %v965
        %v967 = vsel %vm964, %v966, %v962
        %v968 = vmul.f32 1.0, %v967
        %v969 = vrcp.pop %v813
        %v970 = vmul.f32 %v813, %v969
        %v971 = vsub.f32 1.0, %v970
        %v972 = vmul.f32 %v969, %v971
        %v973 = vadd.f32 %v969, %v972
        %vm974 = vweird.f32 %v813
        %vm975 = vweird.f32 %v969
        %vm976 = vmor %vm974, %vm975
        %v977 = vsel %vm976, %v969, %v973
        %v978 = vand.u32 2147483647, %v813
        %vm979 = vcmp.eq.f32.partialorder %v978, 8.507059e+37
        %v980 = vand.u32 %v813, 2147483648
        %v981 = vor.u32 1.1754944e-38, %v980
        %v982 = vsel %vm979, %v981, %v977
        %v983 = vmul.f32 1.0, %v982
        %v984 = vrcp.pop %v814
        %v985 = vmul.f32 %v814, %v984
        %v986 = vsub.f32 1.0, %v985
        %v987 = vmul.f32 %v984, %v986
        %v988 = vadd.f32 %v984, %v987
        %vm989 = vweird.f32 %v814
        %vm990 = vweird.f32 %v984
        %vm991 = vmor %vm989, %vm990
        %v992 = vsel %vm991, %v984, %v988
        %v993 = vand.u32 2147483647, %v814
        %vm994 = vcmp.eq.f32.partialorder %v993, 8.507059e+37
        %v995 = vand.u32 %v814, 2147483648
        %v996 = vor.u32 1.1754944e-38, %v995
        %v997 = vsel %vm994, %v996, %v992
        %v998 = vmul.f32 1.0, %v997
        %v999 = vrcp.pop %v815
        %v1000 = vmul.f32 %v815, %v999
        %v1001 = vsub.f32 1.0, %v1000
        %v1002 = vmul.f32 %v999, %v1001
        %v1003 = vadd.f32 %v999, %v1002
        %vm1004 = vweird.f32 %v815
        %vm1005 = vweird.f32 %v999
        %vm1006 = vmor %vm1004, %vm1005
        %v1007 = vsel %vm1006, %v999, %v1003
        %v1008 = vand.u32 2147483647, %v815
        %vm1009 = vcmp.eq.f32.partialorder %v1008, 8.507059e+37
        %v1010 = vand.u32 %v815, 2147483648
        %v1011 = vor.u32 1.1754944e-38, %v1010
        %v1012 = vsel %vm1009, %v1011, %v1007
        %v1013 = vmul.f32 1.0, %v1012
        %v1014 = vrcp.pop %v816
        %v1015 = vmul.f32 %v816, %v1014
        %v1016 = vsub.f32 1.0, %v1015
        %v1017 = vmul.f32 %v1014, %v1016
        %v1018 = vadd.f32 %v1014, %v1017
        %vm1019 = vweird.f32 %v816
        %vm1020 = vweird.f32 %v1014
        %vm1021 = vmor %vm1019, %vm1020
        %v1022 = vsel %vm1021, %v1014, %v1018
        %v1023 = vand.u32 2147483647, %v816
        %vm1024 = vcmp.eq.f32.partialorder %v1023, 8.507059e+37
        %v1025 = vand.u32 %v816, 2147483648
        %v1026 = vor.u32 1.1754944e-38, %v1025
        %v1027 = vsel %vm1024, %v1026, %v1022
        %v1028 = vmul.f32 1.0, %v1027
        %v1029 = vrcp.pop %v817
        %v1030 = vmul.f32 %v817, %v1029
        %v1031 = vsub.f32 1.0, %v1030
        %v1032 = vmul.f32 %v1029, %v1031
        %v1033 = vadd.f32 %v1029, %v1032
        %vm1034 = vweird.f32 %v817
        %vm1035 = vweird.f32 %v1029
        %vm1036 = vmor %vm1034, %vm1035
        %v1037 = vsel %vm1036, %v1029, %v1033
        %v1038 = vand.u32 2147483647, %v817
        %vm1039 = vcmp.eq.f32.partialorder %v1038, 8.507059e+37
        %v1040 = vand.u32 %v817, 2147483648
        %v1041 = vor.u32 1.1754944e-38, %v1040
        %v1042 = vsel %vm1039, %v1041, %v1037
        %v1043 = vmul.f32 1.0, %v1042
        %v1044 = vrcp.pop %v818
        %v1045 = vmul.f32 %v818, %v1044
        %v1046 = vsub.f32 1.0, %v1045
        %v1047 = vmul.f32 %v1044, %v1046
        %v1048 = vadd.f32 %v1044, %v1047
        %vm1049 = vweird.f32 %v818
        %vm1050 = vweird.f32 %v1044
        %vm1051 = vmor %vm1049, %vm1050
        %v1052 = vsel %vm1051, %v1044, %v1048
        %v1053 = vand.u32 2147483647, %v818
        %vm1054 = vcmp.eq.f32.partialorder %v1053, 8.507059e+37
        %v1055 = vand.u32 %v818, 2147483648
        %v1056 = vor.u32 1.1754944e-38, %v1055
        %v1057 = vsel %vm1054, %v1056, %v1052
        %v1058 = vmul.f32 1.0, %v1057
        %v1059 = vunpack.c.l.bf16 %v376
        %v1060 = vunpack.c.l.bf16 %v377
        %v1061 = vunpack.c.l.bf16 %v378
        %v1062 = vunpack.c.l.bf16 %v379
        %v1063 = vunpack.c.l.bf16 %v380
        %v1064 = vunpack.c.l.bf16 %v381
        %v1065 = vunpack.c.l.bf16 %v382
        %v1066 = vunpack.c.l.bf16 %v383
        %v1067 = vunpack.c.l.bf16 %v384
        %v1068 = vunpack.c.l.bf16 %v385
        %v1069 = vunpack.c.l.bf16 %v386
        %v1070 = vunpack.c.l.bf16 %v387
        %v1071 = vunpack.c.l.bf16 %v388
        %v1072 = vunpack.c.l.bf16 %v389
        %v1073 = vunpack.c.l.bf16 %v390
        %v1074 = vunpack.c.l.bf16 %v391
        %v1075 = vmul.f32 %v833, %v1059
        %v1076 = vmul.f32 %v848, %v1060
        %v1077 = vmul.f32 %v863, %v1061
        %v1078 = vmul.f32 %v878, %v1062
        %v1079 = vmul.f32 %v893, %v1063
        %v1080 = vmul.f32 %v908, %v1064
        %v1081 = vmul.f32 %v923, %v1065
        %v1082 = vmul.f32 %v938, %v1066
        %v1083 = vmul.f32 %v953, %v1067
        %v1084 = vmul.f32 %v968, %v1068
        %v1085 = vmul.f32 %v983, %v1069
        %v1086 = vmul.f32 %v998, %v1070
        %v1087 = vmul.f32 %v1013, %v1071
        %v1088 = vmul.f32 %v1028, %v1072
        %v1089 = vmul.f32 %v1043, %v1073
        %v1090 = vmul.f32 %v1058, %v1074
        %v1091 = vpack.c.bf16 %v1075, %v1075
        %v1092 = vpack.c.bf16 %v1076, %v1076
        %v1093 = vpack.c.bf16 %v1077, %v1077
        %v1094 = vpack.c.bf16 %v1078, %v1078
        %v1095 = vpack.c.bf16 %v1079, %v1079
        %v1096 = vpack.c.bf16 %v1080, %v1080
        %v1097 = vpack.c.bf16 %v1081, %v1081
        %v1098 = vpack.c.bf16 %v1082, %v1082
        %v1099 = vpack.c.bf16 %v1083, %v1083
        %v1100 = vpack.c.bf16 %v1084, %v1084
        %v1101 = vpack.c.bf16 %v1085, %v1085
        %v1102 = vpack.c.bf16 %v1086, %v1086
        %v1103 = vpack.c.bf16 %v1087, %v1087
        %v1104 = vpack.c.bf16 %v1088, %v1088
        %v1105 = vpack.c.bf16 %v1089, %v1089
        %v1106 = vpack.c.bf16 %v1090, %v1090
        %v1107 = vpack.c.bf16 %v618, %v618
        %v1108 = vpack.c.bf16 %v620, %v620
        %v1109 = vpack.c.bf16 %v623, %v623
        %v1110 = vpack.c.bf16 %v625, %v625
        %v1111 = vpack.c.bf16 %v628, %v628
        %v1112 = vpack.c.bf16 %v630, %v630
        %v1113 = vpack.c.bf16 %v633, %v633
        %v1114 = vpack.c.bf16 %v635, %v635
        %v1115 = vpack.c.bf16 %v638, %v638
        %v1116 = vpack.c.bf16 %v640, %v640
        %v1117 = vpack.c.bf16 %v643, %v643
        %v1118 = vpack.c.bf16 %v645, %v645
        %v1119 = vpack.c.bf16 %v648, %v648
        %v1120 = vpack.c.bf16 %v650, %v650
        %v1121 = vpack.c.bf16 %v653, %v653
        %v1122 = vpack.c.bf16 %v655, %v655
        %v1123 = vpack.c.bf16 %v667, %v667
        %v1124 = vpack.c.bf16 %v669, %v669
        %v1125 = vpack.c.bf16 %v672, %v672
        %v1126 = vpack.c.bf16 %v674, %v674
        %v1127 = vpack.c.bf16 %v677, %v677
        %v1128 = vpack.c.bf16 %v679, %v679
        %v1129 = vpack.c.bf16 %v682, %v682
        %v1130 = vpack.c.bf16 %v684, %v684
        %v1131 = vpack.c.bf16 %v687, %v687
        %v1132 = vpack.c.bf16 %v689, %v689
        %v1133 = vpack.c.bf16 %v692, %v692
        %v1134 = vpack.c.bf16 %v694, %v694
        %v1135 = vpack.c.bf16 %v697, %v697
        %v1136 = vpack.c.bf16 %v699, %v699
        %v1137 = vpack.c.bf16 %v702, %v702
        %v1138 = vpack.c.bf16 %v704, %v704
        %v1155 = vunpack.c.l.b16 %v1107
        %v1156 = vunpack.c.l.b16 %v1108
        %v1157 = vunpack.c.l.b16 %v1109
        %v1158 = vunpack.c.l.b16 %v1110
        %v1159 = vunpack.c.l.b16 %v1111
        %v1160 = vunpack.c.l.b16 %v1112
        %v1161 = vunpack.c.l.b16 %v1113
        %v1162 = vunpack.c.l.b16 %v1114
        %v1163 = vunpack.c.l.b16 %v1115
        %v1164 = vunpack.c.l.b16 %v1116
        %v1165 = vunpack.c.l.b16 %v1117
        %v1166 = vunpack.c.l.b16 %v1118
        %v1167 = vunpack.c.l.b16 %v1119
        %v1168 = vunpack.c.l.b16 %v1120
        %v1169 = vunpack.c.l.b16 %v1121
        %v1170 = vunpack.c.l.b16 %v1122
        %v1171 = vpack.c.b16 %v1156, %v1155
        %v1172 = vpack.c.b16 %v1158, %v1157
        %v1173 = vpack.c.b16 %v1160, %v1159
        %v1174 = vpack.c.b16 %v1162, %v1161
        %v1175 = vpack.c.b16 %v1164, %v1163
        %v1176 = vpack.c.b16 %v1166, %v1165
        %v1177 = vpack.c.b16 %v1168, %v1167
        %v1178 = vpack.c.b16 %v1170, %v1169
        %v1195 = vunpack.c.l.b16 %v1123
        %v1196 = vunpack.c.l.b16 %v1124
        %v1197 = vunpack.c.l.b16 %v1125
        %v1198 = vunpack.c.l.b16 %v1126
        %v1199 = vunpack.c.l.b16 %v1127
        %v1200 = vunpack.c.l.b16 %v1128
        %v1201 = vunpack.c.l.b16 %v1129
        %v1202 = vunpack.c.l.b16 %v1130
        %v1203 = vunpack.c.l.b16 %v1131
        %v1204 = vunpack.c.l.b16 %v1132
        %v1205 = vunpack.c.l.b16 %v1133
        %v1206 = vunpack.c.l.b16 %v1134
        %v1207 = vunpack.c.l.b16 %v1135
        %v1208 = vunpack.c.l.b16 %v1136
        %v1209 = vunpack.c.l.b16 %v1137
        %v1210 = vunpack.c.l.b16 %v1138
        %v1211 = vpack.c.b16 %v1196, %v1195
        %v1212 = vpack.c.b16 %v1198, %v1197
        %v1213 = vpack.c.b16 %v1200, %v1199
        %v1214 = vpack.c.b16 %v1202, %v1201
        %v1215 = vpack.c.b16 %v1204, %v1203
        %v1216 = vpack.c.b16 %v1206, %v1205
        %v1217 = vpack.c.b16 %v1208, %v1207
        %v1218 = vpack.c.b16 %v1210, %v1209
        %vm1219 = vcmask 523264
        %v1221 = vsel %vm1219, %v1171, 0
        %v1224 = vsel %vm1219, %v1172, 0
        %v1227 = vsel %vm1219, %v1173, 0
        %v1230 = vsel %vm1219, %v1174, 0
        %v1233 = vsel %vm1219, %v1175, 0
        %v1236 = vsel %vm1219, %v1176, 0
        %v1239 = vsel %vm1219, %v1177, 0
        %v1242 = vsel %vm1219, %v1178, 0
        %v1245 = vsel %vm1219, %v1211, 0
        %v1248 = vsel %vm1219, %v1212, 0
        %v1251 = vsel %vm1219, %v1213, 0
        %v1254 = vsel %vm1219, %v1214, 0
        %v1257 = vsel %vm1219, %v1215, 0
        %v1260 = vsel %vm1219, %v1216, 0
        %v1263 = vsel %vm1219, %v1217, 0
        %v1266 = vsel %vm1219, %v1218, 0
        %1268 = vmatpush.bf16.xpose.msra.mxu0 %v1266
        %1269 = vmatpush.bf16.xpose.msra.mxu0 %v1263
        %1270 = vmatpush.bf16.xpose.msra.mxu0 %v1260
        %1271 = vmatpush.bf16.xpose.msra.mxu0 %v1257
        %1272 = vmatpush.bf16.xpose.msra.mxu0 %v1254
        %1273 = vmatpush.bf16.xpose.msra.mxu0 %v1251
        %1274 = vmatpush.bf16.xpose.msra.mxu0 %v1248
        %1275 = vmatpush.bf16.xpose.msra.mxu0 %v1245
        %1276 = vmatmul.bf16.gmra.mxu0 %v1221
        %v1277 = vpop.f32.mrf.mxu0
        %v1278 = vadd.f32 0.0, %v1277
        %v1279 = vpop.f32.mrf.mxu0
        %v1280 = vadd.f32 0.0, %v1279
        %1281 = vmatmul.bf16.gmra.mxu0 %v1224
        %v1282 = vpop.f32.mrf.mxu0
        %v1283 = vadd.f32 0.0, %v1282
        %v1284 = vpop.f32.mrf.mxu0
        %v1285 = vadd.f32 0.0, %v1284
        %1286 = vmatmul.bf16.gmra.mxu0 %v1227
        %v1287 = vpop.f32.mrf.mxu0
        %v1288 = vadd.f32 0.0, %v1287
        %v1289 = vpop.f32.mrf.mxu0
        %v1290 = vadd.f32 0.0, %v1289
        %1291 = vmatmul.bf16.gmra.mxu0 %v1230
        %v1292 = vpop.f32.mrf.mxu0
        %v1293 = vadd.f32 0.0, %v1292
        %v1294 = vpop.f32.mrf.mxu0
        %v1295 = vadd.f32 0.0, %v1294
        %1296 = vmatmul.bf16.gmra.mxu0 %v1233
        %v1297 = vpop.f32.mrf.mxu0
        %v1298 = vadd.f32 0.0, %v1297
        %v1299 = vpop.f32.mrf.mxu0
        %v1300 = vadd.f32 0.0, %v1299
        %1301 = vmatmul.bf16.gmra.mxu0 %v1236
        %v1302 = vpop.f32.mrf.mxu0
        %v1303 = vadd.f32 0.0, %v1302
        %v1304 = vpop.f32.mrf.mxu0
        %v1305 = vadd.f32 0.0, %v1304
        %1306 = vmatmul.bf16.gmra.mxu0 %v1239
        %v1307 = vpop.f32.mrf.mxu0
        %v1308 = vadd.f32 0.0, %v1307
        %v1309 = vpop.f32.mrf.mxu0
        %v1310 = vadd.f32 0.0, %v1309
        %1311 = vmatmul.bf16.gmra.mxu0 %v1242
        %v1312 = vpop.f32.mrf.mxu0
        %v1313 = vadd.f32 0.0, %v1312
        %v1314 = vpop.f32.mrf.mxu0
        %v1315 = vadd.f32 0.0, %v1314
        %1316 = vdwg.mxu0
        %1317 = vmax.xlane.f32.xlu0 %v1278
        %v1318 = vpop.xlane.xlu0 %1317
        %1319 = vmax.xlane.f32.xlu0 %v1280
        %v1320 = vpop.xlane.xlu0 %1319
        %1321 = vmax.xlane.f32.xlu0 %v1283
        %v1322 = vpop.xlane.xlu0 %1321
        %1323 = vmax.xlane.f32.xlu0 %v1285
        %v1324 = vpop.xlane.xlu0 %1323
        %1325 = vmax.xlane.f32.xlu0 %v1288
        %v1326 = vpop.xlane.xlu0 %1325
        %1327 = vmax.xlane.f32.xlu0 %v1290
        %v1328 = vpop.xlane.xlu0 %1327
        %1329 = vmax.xlane.f32.xlu0 %v1293
        %v1330 = vpop.xlane.xlu0 %1329
        %1331 = vmax.xlane.f32.xlu0 %v1295
        %v1332 = vpop.xlane.xlu0 %1331
        %1333 = vmax.xlane.f32.xlu0 %v1298
        %v1334 = vpop.xlane.xlu0 %1333
        %1335 = vmax.xlane.f32.xlu0 %v1300
        %v1336 = vpop.xlane.xlu0 %1335
        %1337 = vmax.xlane.f32.xlu0 %v1303
        %v1338 = vpop.xlane.xlu0 %1337
        %1339 = vmax.xlane.f32.xlu0 %v1305
        %v1340 = vpop.xlane.xlu0 %1339
        %1341 = vmax.xlane.f32.xlu0 %v1308
        %v1342 = vpop.xlane.xlu0 %1341
        %1343 = vmax.xlane.f32.xlu0 %v1310
        %v1344 = vpop.xlane.xlu0 %1343
        %1345 = vmax.xlane.f32.xlu0 %v1313
        %v1346 = vpop.xlane.xlu0 %1345
        %1347 = vmax.xlane.f32.xlu0 %v1315
        %v1348 = vpop.xlane.xlu0 %1347
        %v1349 = vsub.f32 %v1278, %v1318
        %v1350 = vsub.f32 %v1280, %v1320
        %v1351 = vsub.f32 %v1283, %v1322
        %v1352 = vsub.f32 %v1285, %v1324
        %v1353 = vsub.f32 %v1288, %v1326
        %v1354 = vsub.f32 %v1290, %v1328
        %v1355 = vsub.f32 %v1293, %v1330
        %v1356 = vsub.f32 %v1295, %v1332
        %v1357 = vsub.f32 %v1298, %v1334
        %v1358 = vsub.f32 %v1300, %v1336
        %v1359 = vsub.f32 %v1303, %v1338
        %v1360 = vsub.f32 %v1305, %v1340
        %v1361 = vsub.f32 %v1308, %v1342
        %v1362 = vsub.f32 %v1310, %v1344
        %v1363 = vsub.f32 %v1313, %v1346
        %v1364 = vsub.f32 %v1315, %v1348
        %v1365 = vmul.f32 %v1349, 1.442695
        %v1366 = vpow.pop %v1365
        %v1367 = vmul.f32 %v1350, 1.442695
        %v1368 = vpow.pop %v1367
        %v1369 = vmul.f32 %v1351, 1.442695
        %v1370 = vpow.pop %v1369
        %v1371 = vmul.f32 %v1352, 1.442695
        %v1372 = vpow.pop %v1371
        %v1373 = vmul.f32 %v1353, 1.442695
        %v1374 = vpow.pop %v1373
        %v1375 = vmul.f32 %v1354, 1.442695
        %v1376 = vpow.pop %v1375
        %v1377 = vmul.f32 %v1355, 1.442695
        %v1378 = vpow.pop %v1377
        %v1379 = vmul.f32 %v1356, 1.442695
        %v1380 = vpow.pop %v1379
        %v1381 = vmul.f32 %v1357, 1.442695
        %v1382 = vpow.pop %v1381
        %v1383 = vmul.f32 %v1358, 1.442695
        %v1384 = vpow.pop %v1383
        %v1385 = vmul.f32 %v1359, 1.442695
        %v1386 = vpow.pop %v1385
        %v1387 = vmul.f32 %v1360, 1.442695
        %v1388 = vpow.pop %v1387
        %v1389 = vmul.f32 %v1361, 1.442695
        %v1390 = vpow.pop %v1389
        %v1391 = vmul.f32 %v1362, 1.442695
        %v1392 = vpow.pop %v1391
        %v1393 = vmul.f32 %v1363, 1.442695
        %v1394 = vpow.pop %v1393
        %v1395 = vmul.f32 %v1364, 1.442695
        %v1396 = vpow.pop %v1395
        %1397 = vadd.xlane.f32.xlu0 %v1366
        %v1398 = vpop.xlane.xlu0 %1397
        %1399 = vadd.xlane.f32.xlu0 %v1368
        %v1400 = vpop.xlane.xlu0 %1399
        %1401 = vadd.xlane.f32.xlu0 %v1370
        %v1402 = vpop.xlane.xlu0 %1401
        %1403 = vadd.xlane.f32.xlu0 %v1372
        %v1404 = vpop.xlane.xlu0 %1403
        %1405 = vadd.xlane.f32.xlu0 %v1374
        %v1406 = vpop.xlane.xlu0 %1405
        %1407 = vadd.xlane.f32.xlu0 %v1376
        %v1408 = vpop.xlane.xlu0 %1407
        %1409 = vadd.xlane.f32.xlu0 %v1378
        %v1410 = vpop.xlane.xlu0 %1409
        %1411 = vadd.xlane.f32.xlu0 %v1380
        %v1412 = vpop.xlane.xlu0 %1411
        %1413 = vadd.xlane.f32.xlu0 %v1382
        %v1414 = vpop.xlane.xlu0 %1413
        %1415 = vadd.xlane.f32.xlu0 %v1384
        %v1416 = vpop.xlane.xlu0 %1415
        %1417 = vadd.xlane.f32.xlu0 %v1386
        %v1418 = vpop.xlane.xlu0 %1417
        %1419 = vadd.xlane.f32.xlu0 %v1388
        %v1420 = vpop.xlane.xlu0 %1419
        %1421 = vadd.xlane.f32.xlu0 %v1390
        %v1422 = vpop.xlane.xlu0 %1421
        %1423 = vadd.xlane.f32.xlu0 %v1392
        %v1424 = vpop.xlane.xlu0 %1423
        %1425 = vadd.xlane.f32.xlu0 %v1394
        %v1426 = vpop.xlane.xlu0 %1425
        %1427 = vadd.xlane.f32.xlu0 %v1396
        %v1428 = vpop.xlane.xlu0 %1427
        %v1429 = vrcp.pop %v1398
        %v1430 = vrcp.pop %v1400
        %v1431 = vrcp.pop %v1402
        %v1432 = vrcp.pop %v1404
        %v1433 = vrcp.pop %v1406
        %v1434 = vrcp.pop %v1408
        %v1435 = vrcp.pop %v1410
        %v1436 = vrcp.pop %v1412
        %v1437 = vrcp.pop %v1414
        %v1438 = vrcp.pop %v1416
        %v1439 = vrcp.pop %v1418
        %v1440 = vrcp.pop %v1420
        %v1441 = vrcp.pop %v1422
        %v1442 = vrcp.pop %v1424
        %v1443 = vrcp.pop %v1426
        %v1444 = vrcp.pop %v1428
        %v1445 = vmul.f32 %v1366, %v1429
        %v1446 = vmul.f32 %v1368, %v1430
        %v1447 = vmul.f32 %v1370, %v1431
        %v1448 = vmul.f32 %v1372, %v1432
        %v1449 = vmul.f32 %v1374, %v1433
        %v1450 = vmul.f32 %v1376, %v1434
        %v1451 = vmul.f32 %v1378, %v1435
        %v1452 = vmul.f32 %v1380, %v1436
        %v1453 = vmul.f32 %v1382, %v1437
        %v1454 = vmul.f32 %v1384, %v1438
        %v1455 = vmul.f32 %v1386, %v1439
        %v1456 = vmul.f32 %v1388, %v1440
        %v1457 = vmul.f32 %v1390, %v1441
        %v1458 = vmul.f32 %v1392, %v1442
        %v1459 = vmul.f32 %v1394, %v1443
        %v1460 = vmul.f32 %v1396, %v1444
        %1461 = vrot.lane.b32.xlu0 %v1171, 64
        %v1462 = vpop.permute.xlu0 %1461
        %1463 = vrot.lane.b32.xlu0 %v1172, 64
        %v1464 = vpop.permute.xlu0 %1463
        %1465 = vrot.lane.b32.xlu0 %v1173, 64
        %v1466 = vpop.permute.xlu0 %1465
        %1467 = vrot.lane.b32.xlu0 %v1174, 64
        %v1468 = vpop.permute.xlu0 %1467
        %1469 = vrot.lane.b32.xlu0 %v1175, 64
        %v1470 = vpop.permute.xlu0 %1469
        %1471 = vrot.lane.b32.xlu0 %v1176, 64
        %v1472 = vpop.permute.xlu0 %1471
        %1473 = vrot.lane.b32.xlu0 %v1177, 64
        %v1474 = vpop.permute.xlu0 %1473
        %1475 = vrot.lane.b32.xlu0 %v1178, 64
        %v1476 = vpop.permute.xlu0 %1475
        %1477 = vrot.lane.b32.xlu0 %v1211, 64
        %v1478 = vpop.permute.xlu0 %1477
        %1479 = vrot.lane.b32.xlu0 %v1212, 64
        %v1480 = vpop.permute.xlu0 %1479
        %1481 = vrot.lane.b32.xlu0 %v1213, 64
        %v1482 = vpop.permute.xlu0 %1481
        %1483 = vrot.lane.b32.xlu0 %v1214, 64
        %v1484 = vpop.permute.xlu0 %1483
        %1485 = vrot.lane.b32.xlu0 %v1215, 64
        %v1486 = vpop.permute.xlu0 %1485
        %1487 = vrot.lane.b32.xlu0 %v1216, 64
        %v1488 = vpop.permute.xlu0 %1487
        %1489 = vrot.lane.b32.xlu0 %v1217, 64
        %v1490 = vpop.permute.xlu0 %1489
        %1491 = vrot.lane.b32.xlu0 %v1218, 64
        %v1492 = vpop.permute.xlu0 %1491
        %v1494 = vsel %vm1219, %v1462, 0
        %v1497 = vsel %vm1219, %v1464, 0
        %v1500 = vsel %vm1219, %v1466, 0
        %v1503 = vsel %vm1219, %v1468, 0
        %v1506 = vsel %vm1219, %v1470, 0
        %v1509 = vsel %vm1219, %v1472, 0
        %v1512 = vsel %vm1219, %v1474, 0
        %v1515 = vsel %vm1219, %v1476, 0
        %v1518 = vsel %vm1219, %v1478, 0
        %v1521 = vsel %vm1219, %v1480, 0
        %v1524 = vsel %vm1219, %v1482, 0
        %v1527 = vsel %vm1219, %v1484, 0
        %v1530 = vsel %vm1219, %v1486, 0
        %v1533 = vsel %vm1219, %v1488, 0
        %v1536 = vsel %vm1219, %v1490, 0
        %v1539 = vsel %vm1219, %v1492, 0
        %1541 = vmatpush.bf16.xpose.msra.mxu0 %v1539
        %1542 = vmatpush.bf16.xpose.msra.mxu0 %v1536
        %1543 = vmatpush.bf16.xpose.msra.mxu0 %v1533
        %1544 = vmatpush.bf16.xpose.msra.mxu0 %v1530
        %1545 = vmatpush.bf16.xpose.msra.mxu0 %v1527
        %1546 = vmatpush.bf16.xpose.msra.mxu0 %v1524
        %1547 = vmatpush.bf16.xpose.msra.mxu0 %v1521
        %1548 = vmatpush.bf16.xpose.msra.mxu0 %v1518
        %1549 = vmatmul.bf16.gmra.mxu0 %v1494
        %v1550 = vpop.f32.mrf.mxu0
        %v1551 = vadd.f32 0.0, %v1550
        %v1552 = vpop.f32.mrf.mxu0
        %v1553 = vadd.f32 0.0, %v1552
        %1554 = vmatmul.bf16.gmra.mxu0 %v1497
        %v1555 = vpop.f32.mrf.mxu0
        %v1556 = vadd.f32 0.0, %v1555
        %v1557 = vpop.f32.mrf.mxu0
        %v1558 = vadd.f32 0.0, %v1557
        %1559 = vmatmul.bf16.gmra.mxu0 %v1500
        %v1560 = vpop.f32.mrf.mxu0
        %v1561 = vadd.f32 0.0, %v1560
        %v1562 = vpop.f32.mrf.mxu0
        %v1563 = vadd.f32 0.0, %v1562
        %1564 = vmatmul.bf16.gmra.mxu0 %v1503
        %v1565 = vpop.f32.mrf.mxu0
        %v1566 = vadd.f32 0.0, %v1565
        %v1567 = vpop.f32.mrf.mxu0
        %v1568 = vadd.f32 0.0, %v1567
        %1569 = vmatmul.bf16.gmra.mxu0 %v1506
        %v1570 = vpop.f32.mrf.mxu0
        %v1571 = vadd.f32 0.0, %v1570
        %v1572 = vpop.f32.mrf.mxu0
        %v1573 = vadd.f32 0.0, %v1572
        %1574 = vmatmul.bf16.gmra.mxu0 %v1509
        %v1575 = vpop.f32.mrf.mxu0
        %v1576 = vadd.f32 0.0, %v1575
        %v1577 = vpop.f32.mrf.mxu0
        %v1578 = vadd.f32 0.0, %v1577
        %1579 = vmatmul.bf16.gmra.mxu0 %v1512
        %v1580 = vpop.f32.mrf.mxu0
        %v1581 = vadd.f32 0.0, %v1580
        %v1582 = vpop.f32.mrf.mxu0
        %v1583 = vadd.f32 0.0, %v1582
        %1584 = vmatmul.bf16.gmra.mxu0 %v1515
        %v1585 = vpop.f32.mrf.mxu0
        %v1586 = vadd.f32 0.0, %v1585
        %v1587 = vpop.f32.mrf.mxu0
        %v1588 = vadd.f32 0.0, %v1587
        %1589 = vdwg.mxu0
        %1590 = vmax.xlane.f32.xlu0 %v1551
        %v1591 = vpop.xlane.xlu0 %1590
        %1592 = vmax.xlane.f32.xlu0 %v1553
        %v1593 = vpop.xlane.xlu0 %1592
        %1594 = vmax.xlane.f32.xlu0 %v1556
        %v1595 = vpop.xlane.xlu0 %1594
        %1596 = vmax.xlane.f32.xlu0 %v1558
        %v1597 = vpop.xlane.xlu0 %1596
        %1598 = vmax.xlane.f32.xlu0 %v1561
        %v1599 = vpop.xlane.xlu0 %1598
        %1600 = vmax.xlane.f32.xlu0 %v1563
        %v1601 = vpop.xlane.xlu0 %1600
        %1602 = vmax.xlane.f32.xlu0 %v1566
        %v1603 = vpop.xlane.xlu0 %1602
        %1604 = vmax.xlane.f32.xlu0 %v1568
        %v1605 = vpop.xlane.xlu0 %1604
        %1606 = vmax.xlane.f32.xlu0 %v1571
        %v1607 = vpop.xlane.xlu0 %1606
        %1608 = vmax.xlane.f32.xlu0 %v1573
        %v1609 = vpop.xlane.xlu0 %1608
        %1610 = vmax.xlane.f32.xlu0 %v1576
        %v1611 = vpop.xlane.xlu0 %1610
        %1612 = vmax.xlane.f32.xlu0 %v1578
        %v1613 = vpop.xlane.xlu0 %1612
        %1614 = vmax.xlane.f32.xlu0 %v1581
        %v1615 = vpop.xlane.xlu0 %1614
        %1616 = vmax.xlane.f32.xlu0 %v1583
        %v1617 = vpop.xlane.xlu0 %1616
        %1618 = vmax.xlane.f32.xlu0 %v1586
        %v1619 = vpop.xlane.xlu0 %1618
        %1620 = vmax.xlane.f32.xlu0 %v1588
        %v1621 = vpop.xlane.xlu0 %1620
        %v1622 = vsub.f32 %v1551, %v1591
        %v1623 = vsub.f32 %v1553, %v1593
        %v1624 = vsub.f32 %v1556, %v1595
        %v1625 = vsub.f32 %v1558, %v1597
        %v1626 = vsub.f32 %v1561, %v1599
        %v1627 = vsub.f32 %v1563, %v1601
        %v1628 = vsub.f32 %v1566, %v1603
        %v1629 = vsub.f32 %v1568, %v1605
        %v1630 = vsub.f32 %v1571, %v1607
        %v1631 = vsub.f32 %v1573, %v1609
        %v1632 = vsub.f32 %v1576, %v1611
        %v1633 = vsub.f32 %v1578, %v1613
        %v1634 = vsub.f32 %v1581, %v1615
        %v1635 = vsub.f32 %v1583, %v1617
        %v1636 = vsub.f32 %v1586, %v1619
        %v1637 = vsub.f32 %v1588, %v1621
        %v1638 = vmul.f32 %v1622, 1.442695
        %v1639 = vpow.pop %v1638
        %v1640 = vmul.f32 %v1623, 1.442695
        %v1641 = vpow.pop %v1640
        %v1642 = vmul.f32 %v1624, 1.442695
        %v1643 = vpow.pop %v1642
        %v1644 = vmul.f32 %v1625, 1.442695
        %v1645 = vpow.pop %v1644
        %v1646 = vmul.f32 %v1626, 1.442695
        %v1647 = vpow.pop %v1646
        %v1648 = vmul.f32 %v1627, 1.442695
        %v1649 = vpow.pop %v1648
        %v1650 = vmul.f32 %v1628, 1.442695
        %v1651 = vpow.pop %v1650
        %v1652 = vmul.f32 %v1629, 1.442695
        %v1653 = vpow.pop %v1652
        %v1654 = vmul.f32 %v1630, 1.442695
        %v1655 = vpow.pop %v1654
        %v1656 = vmul.f32 %v1631, 1.442695
        %v1657 = vpow.pop %v1656
        %v1658 = vmul.f32 %v1632, 1.442695
        %v1659 = vpow.pop %v1658
        %v1660 = vmul.f32 %v1633, 1.442695
        %v1661 = vpow.pop %v1660
        %v1662 = vmul.f32 %v1634, 1.442695
        %v1663 = vpow.pop %v1662
        %v1664 = vmul.f32 %v1635, 1.442695
        %v1665 = vpow.pop %v1664
        %v1666 = vmul.f32 %v1636, 1.442695
        %v1667 = vpow.pop %v1666
        %v1668 = vmul.f32 %v1637, 1.442695
        %v1669 = vpow.pop %v1668
        %1670 = vadd.xlane.f32.xlu0 %v1639
        %v1671 = vpop.xlane.xlu0 %1670
        %1672 = vadd.xlane.f32.xlu0 %v1641
        %v1673 = vpop.xlane.xlu0 %1672
        %1674 = vadd.xlane.f32.xlu0 %v1643
        %v1675 = vpop.xlane.xlu0 %1674
        %1676 = vadd.xlane.f32.xlu0 %v1645
        %v1677 = vpop.xlane.xlu0 %1676
        %1678 = vadd.xlane.f32.xlu0 %v1647
        %v1679 = vpop.xlane.xlu0 %1678
        %1680 = vadd.xlane.f32.xlu0 %v1649
        %v1681 = vpop.xlane.xlu0 %1680
        %1682 = vadd.xlane.f32.xlu0 %v1651
        %v1683 = vpop.xlane.xlu0 %1682
        %1684 = vadd.xlane.f32.xlu0 %v1653
        %v1685 = vpop.xlane.xlu0 %1684
        %1686 = vadd.xlane.f32.xlu0 %v1655
        %v1687 = vpop.xlane.xlu0 %1686
        %1688 = vadd.xlane.f32.xlu0 %v1657
        %v1689 = vpop.xlane.xlu0 %1688
        %1690 = vadd.xlane.f32.xlu0 %v1659
        %v1691 = vpop.xlane.xlu0 %1690
        %1692 = vadd.xlane.f32.xlu0 %v1661
        %v1693 = vpop.xlane.xlu0 %1692
        %1694 = vadd.xlane.f32.xlu0 %v1663
        %v1695 = vpop.xlane.xlu0 %1694
        %1696 = vadd.xlane.f32.xlu0 %v1665
        %v1697 = vpop.xlane.xlu0 %1696
        %1698 = vadd.xlane.f32.xlu0 %v1667
        %v1699 = vpop.xlane.xlu0 %1698
        %1700 = vadd.xlane.f32.xlu0 %v1669
        %v1701 = vpop.xlane.xlu0 %1700
        %v1702 = vrcp.pop %v1671
        %v1703 = vrcp.pop %v1673
        %v1704 = vrcp.pop %v1675
        %v1705 = vrcp.pop %v1677
        %v1706 = vrcp.pop %v1679
        %v1707 = vrcp.pop %v1681
        %v1708 = vrcp.pop %v1683
        %v1709 = vrcp.pop %v1685
        %v1710 = vrcp.pop %v1687
        %v1711 = vrcp.pop %v1689
        %v1712 = vrcp.pop %v1691
        %v1713 = vrcp.pop %v1693
        %v1714 = vrcp.pop %v1695
        %v1715 = vrcp.pop %v1697
        %v1716 = vrcp.pop %v1699
        %v1717 = vrcp.pop %v1701
        %v1718 = vmul.f32 %v1639, %v1702
        %v1719 = vmul.f32 %v1641, %v1703
        %v1720 = vmul.f32 %v1643, %v1704
        %v1721 = vmul.f32 %v1645, %v1705
        %v1722 = vmul.f32 %v1647, %v1706
        %v1723 = vmul.f32 %v1649, %v1707
        %v1724 = vmul.f32 %v1651, %v1708
        %v1725 = vmul.f32 %v1653, %v1709
        %v1726 = vmul.f32 %v1655, %v1710
        %v1727 = vmul.f32 %v1657, %v1711
        %v1728 = vmul.f32 %v1659, %v1712
        %v1729 = vmul.f32 %v1661, %v1713
        %v1730 = vmul.f32 %v1663, %v1714
        %v1731 = vmul.f32 %v1665, %v1715
        %v1732 = vmul.f32 %v1667, %v1716
        %v1733 = vmul.f32 %v1669, %v1717
        %v1734 = vlaneseq
        %v1735 = vand.u32 %v1734, 127
        %v1736 = vadd.s32 %v1735, 4294967294
        %vm1737 = vcmp.ge.s32.totalorder %v1736, 0
        %vm1738 = vcmp.lt.s32.totalorder %v1736, 128
        %vm1739 = vmand %vm1737, %vm1738
        %v1740 = vsel %vm1739, 1, 0
        %v1741 = vcvt.s32.f32 %v1740
        %1742 = vrot.lane.b32.xlu0 %v1445, 2
        %v1743 = vpop.permute.xlu0 %1742
        %1744 = vrot.lane.b32.xlu0 %v1446, 2
        %v1745 = vpop.permute.xlu0 %1744
        %1746 = vrot.lane.b32.xlu0 %v1447, 2
        %v1747 = vpop.permute.xlu0 %1746
        %1748 = vrot.lane.b32.xlu0 %v1448, 2
        %v1749 = vpop.permute.xlu0 %1748
        %1750 = vrot.lane.b32.xlu0 %v1449, 2
        %v1751 = vpop.permute.xlu0 %1750
        %1752 = vrot.lane.b32.xlu0 %v1450, 2
        %v1753 = vpop.permute.xlu0 %1752
        %1754 = vrot.lane.b32.xlu0 %v1451, 2
        %v1755 = vpop.permute.xlu0 %1754
        %1756 = vrot.lane.b32.xlu0 %v1452, 2
        %v1757 = vpop.permute.xlu0 %1756
        %1758 = vrot.lane.b32.xlu0 %v1453, 2
        %v1759 = vpop.permute.xlu0 %1758
        %1760 = vrot.lane.b32.xlu0 %v1454, 2
        %v1761 = vpop.permute.xlu0 %1760
        %1762 = vrot.lane.b32.xlu0 %v1455, 2
        %v1763 = vpop.permute.xlu0 %1762
        %1764 = vrot.lane.b32.xlu0 %v1456, 2
        %v1765 = vpop.permute.xlu0 %1764
        %1766 = vrot.lane.b32.xlu0 %v1457, 2
        %v1767 = vpop.permute.xlu0 %1766
        %1768 = vrot.lane.b32.xlu0 %v1458, 2
        %v1769 = vpop.permute.xlu0 %1768
        %1770 = vrot.lane.b32.xlu0 %v1459, 2
        %v1771 = vpop.permute.xlu0 %1770
        %1772 = vrot.lane.b32.xlu0 %v1460, 2
        %v1773 = vpop.permute.xlu0 %1772
        %v1774 = vmul.f32 %v1743, %v1741
        %v1775 = vmul.f32 %v1745, %v1741
        %v1776 = vmul.f32 %v1747, %v1741
        %v1777 = vmul.f32 %v1749, %v1741
        %v1778 = vmul.f32 %v1751, %v1741
        %v1779 = vmul.f32 %v1753, %v1741
        %v1780 = vmul.f32 %v1755, %v1741
        %v1781 = vmul.f32 %v1757, %v1741
        %v1782 = vmul.f32 %v1759, %v1741
        %v1783 = vmul.f32 %v1761, %v1741
        %v1784 = vmul.f32 %v1763, %v1741
        %v1785 = vmul.f32 %v1765, %v1741
        %v1786 = vmul.f32 %v1767, %v1741
        %v1787 = vmul.f32 %v1769, %v1741
        %v1788 = vmul.f32 %v1771, %v1741
        %v1789 = vmul.f32 %v1773, %v1741
        %s1790 = sld [smem:[#allocation11]]
        %v1791 = vstv %s1790
        %v1792 = vmul.f32 %v1791, %v1774
        %v1793 = vmul.f32 %v1791, %v1775
        %v1794 = vmul.f32 %v1791, %v1776
        %v1795 = vmul.f32 %v1791, %v1777
        %v1796 = vmul.f32 %v1791, %v1778
        %v1797 = vmul.f32 %v1791, %v1779
        %v1798 = vmul.f32 %v1791, %v1780
        %v1799 = vmul.f32 %v1791, %v1781
        %v1800 = vmul.f32 %v1791, %v1782
        %v1801 = vmul.f32 %v1791, %v1783
        %v1802 = vmul.f32 %v1791, %v1784
        %v1803 = vmul.f32 %v1791, %v1785
        %v1804 = vmul.f32 %v1791, %v1786
        %v1805 = vmul.f32 %v1791, %v1787
        %v1806 = vmul.f32 %v1791, %v1788
        %v1807 = vmul.f32 %v1791, %v1789
        %s1808 = sld [smem:[#allocation11 + $0xa]]
        %v1809 = vstv %s1808
        %v1810 = vmul.f32 %v1809, %v1774
        %v1811 = vmul.f32 %v1809, %v1775
        %v1812 = vmul.f32 %v1809, %v1776
        %v1813 = vmul.f32 %v1809, %v1777
        %v1814 = vmul.f32 %v1809, %v1778
        %v1815 = vmul.f32 %v1809, %v1779
        %v1816 = vmul.f32 %v1809, %v1780
        %v1817 = vmul.f32 %v1809, %v1781
        %v1818 = vmul.f32 %v1809, %v1782
        %v1819 = vmul.f32 %v1809, %v1783
        %v1820 = vmul.f32 %v1809, %v1784
        %v1821 = vmul.f32 %v1809, %v1785
        %v1822 = vmul.f32 %v1809, %v1786
        %v1823 = vmul.f32 %v1809, %v1787
        %v1824 = vmul.f32 %v1809, %v1788
        %v1825 = vmul.f32 %v1809, %v1789
        %1826 = vrot.lane.b32.xlu0 %v1718, 2
        %v1827 = vpop.permute.xlu0 %1826
        %1828 = vrot.lane.b32.xlu0 %v1719, 2
        %v1829 = vpop.permute.xlu0 %1828
        %1830 = vrot.lane.b32.xlu0 %v1720, 2
        %v1831 = vpop.permute.xlu0 %1830
        %1832 = vrot.lane.b32.xlu0 %v1721, 2
        %v1833 = vpop.permute.xlu0 %1832
        %1834 = vrot.lane.b32.xlu0 %v1722, 2
        %v1835 = vpop.permute.xlu0 %1834
        %1836 = vrot.lane.b32.xlu0 %v1723, 2
        %v1837 = vpop.permute.xlu0 %1836
        %1838 = vrot.lane.b32.xlu0 %v1724, 2
        %v1839 = vpop.permute.xlu0 %1838
        %1840 = vrot.lane.b32.xlu0 %v1725, 2
        %v1841 = vpop.permute.xlu0 %1840
        %1842 = vrot.lane.b32.xlu0 %v1726, 2
        %v1843 = vpop.permute.xlu0 %1842
        %1844 = vrot.lane.b32.xlu0 %v1727, 2
        %v1845 = vpop.permute.xlu0 %1844
        %1846 = vrot.lane.b32.xlu0 %v1728, 2
        %v1847 = vpop.permute.xlu0 %1846
        %1848 = vrot.lane.b32.xlu0 %v1729, 2
        %v1849 = vpop.permute.xlu0 %1848
        %1850 = vrot.lane.b32.xlu0 %v1730, 2
        %v1851 = vpop.permute.xlu0 %1850
        %1852 = vrot.lane.b32.xlu0 %v1731, 2
        %v1853 = vpop.permute.xlu0 %1852
        %1854 = vrot.lane.b32.xlu0 %v1732, 2
        %v1855 = vpop.permute.xlu0 %1854
        %1856 = vrot.lane.b32.xlu0 %v1733, 2
        %v1857 = vpop.permute.xlu0 %1856
        %v1858 = vmul.f32 %v1827, %v1741
        %v1859 = vmul.f32 %v1829, %v1741
        %v1860 = vmul.f32 %v1831, %v1741
        %v1861 = vmul.f32 %v1833, %v1741
        %v1862 = vmul.f32 %v1835, %v1741
        %v1863 = vmul.f32 %v1837, %v1741
        %v1864 = vmul.f32 %v1839, %v1741
        %v1865 = vmul.f32 %v1841, %v1741
        %v1866 = vmul.f32 %v1843, %v1741
        %v1867 = vmul.f32 %v1845, %v1741
        %v1868 = vmul.f32 %v1847, %v1741
        %v1869 = vmul.f32 %v1849, %v1741
        %v1870 = vmul.f32 %v1851, %v1741
        %v1871 = vmul.f32 %v1853, %v1741
        %v1872 = vmul.f32 %v1855, %v1741
        %v1873 = vmul.f32 %v1857, %v1741
        %s1874 = sld [smem:[#allocation11 + $0x5]]
        %v1875 = vstv %s1874
        %v1876 = vmul.f32 %v1875, %v1858
        %v1877 = vmul.f32 %v1875, %v1859
        %v1878 = vmul.f32 %v1875, %v1860
        %v1879 = vmul.f32 %v1875, %v1861
        %v1880 = vmul.f32 %v1875, %v1862
        %v1881 = vmul.f32 %v1875, %v1863
        %v1882 = vmul.f32 %v1875, %v1864
        %v1883 = vmul.f32 %v1875, %v1865
        %v1884 = vmul.f32 %v1875, %v1866
        %v1885 = vmul.f32 %v1875, %v1867
        %v1886 = vmul.f32 %v1875, %v1868
        %v1887 = vmul.f32 %v1875, %v1869
        %v1888 = vmul.f32 %v1875, %v1870
        %v1889 = vmul.f32 %v1875, %v1871
        %v1890 = vmul.f32 %v1875, %v1872
        %v1891 = vmul.f32 %v1875, %v1873
        %v1892 = vadd.f32 %v1792, %v1876
        %v1893 = vadd.f32 %v1793, %v1877
        %v1894 = vadd.f32 %v1794, %v1878
        %v1895 = vadd.f32 %v1795, %v1879
        %v1896 = vadd.f32 %v1796, %v1880
        %v1897 = vadd.f32 %v1797, %v1881
        %v1898 = vadd.f32 %v1798, %v1882
        %v1899 = vadd.f32 %v1799, %v1883
        %v1900 = vadd.f32 %v1800, %v1884
        %v1901 = vadd.f32 %v1801, %v1885
        %v1902 = vadd.f32 %v1802, %v1886
        %v1903 = vadd.f32 %v1803, %v1887
        %v1904 = vadd.f32 %v1804, %v1888
        %v1905 = vadd.f32 %v1805, %v1889
        %v1906 = vadd.f32 %v1806, %v1890
        %v1907 = vadd.f32 %v1807, %v1891
        %s1908 = sld [smem:[#allocation11 + $0xf]]
        %v1909 = vstv %s1908
        %v1910 = vmul.f32 %v1909, %v1858
        %v1911 = vmul.f32 %v1909, %v1859
        %v1912 = vmul.f32 %v1909, %v1860
        %v1913 = vmul.f32 %v1909, %v1861
        %v1914 = vmul.f32 %v1909, %v1862
        %v1915 = vmul.f32 %v1909, %v1863
        %v1916 = vmul.f32 %v1909, %v1864
        %v1917 = vmul.f32 %v1909, %v1865
        %v1918 = vmul.f32 %v1909, %v1866
        %v1919 = vmul.f32 %v1909, %v1867
        %v1920 = vmul.f32 %v1909, %v1868
        %v1921 = vmul.f32 %v1909, %v1869
        %v1922 = vmul.f32 %v1909, %v1870
        %v1923 = vmul.f32 %v1909, %v1871
        %v1924 = vmul.f32 %v1909, %v1872
        %v1925 = vmul.f32 %v1909, %v1873
        %v1926 = vadd.f32 %v1810, %v1910
        %v1927 = vadd.f32 %v1811, %v1911
        %v1928 = vadd.f32 %v1812, %v1912
        %v1929 = vadd.f32 %v1813, %v1913
        %v1930 = vadd.f32 %v1814, %v1914
        %v1931 = vadd.f32 %v1815, %v1915
        %v1932 = vadd.f32 %v1816, %v1916
        %v1933 = vadd.f32 %v1817, %v1917
        %v1934 = vadd.f32 %v1818, %v1918
        %v1935 = vadd.f32 %v1819, %v1919
        %v1936 = vadd.f32 %v1820, %v1920
        %v1937 = vadd.f32 %v1821, %v1921
        %v1938 = vadd.f32 %v1822, %v1922
        %v1939 = vadd.f32 %v1823, %v1923
        %v1940 = vadd.f32 %v1824, %v1924
        %v1941 = vadd.f32 %v1825, %v1925
        %v1942 = vadd.s32 %v1735, 4294967295
        %vm1943 = vcmp.ge.s32.totalorder %v1942, 0
        %vm1944 = vcmp.lt.s32.totalorder %v1942, 128
        %vm1945 = vmand %vm1943, %vm1944
        %v1946 = vsel %vm1945, 1, 0
        %v1947 = vcvt.s32.f32 %v1946
        %1948 = vrot.lane.b32.xlu0 %v1445, 1
        %v1949 = vpop.permute.xlu0 %1948
        %1950 = vrot.lane.b32.xlu0 %v1446, 1
        %v1951 = vpop.permute.xlu0 %1950
        %1952 = vrot.lane.b32.xlu0 %v1447, 1
        %v1953 = vpop.permute.xlu0 %1952
        %1954 = vrot.lane.b32.xlu0 %v1448, 1
        %v1955 = vpop.permute.xlu0 %1954
        %1956 = vrot.lane.b32.xlu0 %v1449, 1
        %v1957 = vpop.permute.xlu0 %1956
        %1958 = vrot.lane.b32.xlu0 %v1450, 1
        %v1959 = vpop.permute.xlu0 %1958
        %1960 = vrot.lane.b32.xlu0 %v1451, 1
        %v1961 = vpop.permute.xlu0 %1960
        %1962 = vrot.lane.b32.xlu0 %v1452, 1
        %v1963 = vpop.permute.xlu0 %1962
        %1964 = vrot.lane.b32.xlu0 %v1453, 1
        %v1965 = vpop.permute.xlu0 %1964
        %1966 = vrot.lane.b32.xlu0 %v1454, 1
        %v1967 = vpop.permute.xlu0 %1966
        %1968 = vrot.lane.b32.xlu0 %v1455, 1
        %v1969 = vpop.permute.xlu0 %1968
        %1970 = vrot.lane.b32.xlu0 %v1456, 1
        %v1971 = vpop.permute.xlu0 %1970
        %1972 = vrot.lane.b32.xlu0 %v1457, 1
        %v1973 = vpop.permute.xlu0 %1972
        %1974 = vrot.lane.b32.xlu0 %v1458, 1
        %v1975 = vpop.permute.xlu0 %1974
        %1976 = vrot.lane.b32.xlu0 %v1459, 1
        %v1977 = vpop.permute.xlu0 %1976
        %1978 = vrot.lane.b32.xlu0 %v1460, 1
        %v1979 = vpop.permute.xlu0 %1978
        %v1980 = vmul.f32 %v1949, %v1947
        %v1981 = vmul.f32 %v1951, %v1947
        %v1982 = vmul.f32 %v1953, %v1947
        %v1983 = vmul.f32 %v1955, %v1947
        %v1984 = vmul.f32 %v1957, %v1947
        %v1985 = vmul.f32 %v1959, %v1947
        %v1986 = vmul.f32 %v1961, %v1947
        %v1987 = vmul.f32 %v1963, %v1947
        %v1988 = vmul.f32 %v1965, %v1947
        %v1989 = vmul.f32 %v1967, %v1947
        %v1990 = vmul.f32 %v1969, %v1947
        %v1991 = vmul.f32 %v1971, %v1947
        %v1992 = vmul.f32 %v1973, %v1947
        %v1993 = vmul.f32 %v1975, %v1947
        %v1994 = vmul.f32 %v1977, %v1947
        %v1995 = vmul.f32 %v1979, %v1947
        %s1996 = sld [smem:[#allocation11 + $0x1]]
        %v1997 = vstv %s1996
        %v1998 = vmul.f32 %v1997, %v1980
        %v1999 = vmul.f32 %v1997, %v1981
        %v2000 = vmul.f32 %v1997, %v1982
        %v2001 = vmul.f32 %v1997, %v1983
        %v2002 = vmul.f32 %v1997, %v1984
        %v2003 = vmul.f32 %v1997, %v1985
        %v2004 = vmul.f32 %v1997, %v1986
        %v2005 = vmul.f32 %v1997, %v1987
        %v2006 = vmul.f32 %v1997, %v1988
        %v2007 = vmul.f32 %v1997, %v1989
        %v2008 = vmul.f32 %v1997, %v1990
        %v2009 = vmul.f32 %v1997, %v1991
        %v2010 = vmul.f32 %v1997, %v1992
        %v2011 = vmul.f32 %v1997, %v1993
        %v2012 = vmul.f32 %v1997, %v1994
        %v2013 = vmul.f32 %v1997, %v1995
        %v2014 = vadd.f32 %v1892, %v1998
        %v2015 = vadd.f32 %v1893, %v1999
        %v2016 = vadd.f32 %v1894, %v2000
        %v2017 = vadd.f32 %v1895, %v2001
        %v2018 = vadd.f32 %v1896, %v2002
        %v2019 = vadd.f32 %v1897, %v2003
        %v2020 = vadd.f32 %v1898, %v2004
        %v2021 = vadd.f32 %v1899, %v2005
        %v2022 = vadd.f32 %v1900, %v2006
        %v2023 = vadd.f32 %v1901, %v2007
        %v2024 = vadd.f32 %v1902, %v2008
        %v2025 = vadd.f32 %v1903, %v2009
        %v2026 = vadd.f32 %v1904, %v2010
        %v2027 = vadd.f32 %v1905, %v2011
        %v2028 = vadd.f32 %v1906, %v2012
        %v2029 = vadd.f32 %v1907, %v2013
        %s2030 = sld [smem:[#allocation11 + $0xb]]
        %v2031 = vstv %s2030
        %v2032 = vmul.f32 %v2031, %v1980
        %v2033 = vmul.f32 %v2031, %v1981
        %v2034 = vmul.f32 %v2031, %v1982
        %v2035 = vmul.f32 %v2031, %v1983
        %v2036 = vmul.f32 %v2031, %v1984
        %v2037 = vmul.f32 %v2031, %v1985
        %v2038 = vmul.f32 %v2031, %v1986
        %v2039 = vmul.f32 %v2031, %v1987
        %v2040 = vmul.f32 %v2031, %v1988
        %v2041 = vmul.f32 %v2031, %v1989
        %v2042 = vmul.f32 %v2031, %v1990
        %v2043 = vmul.f32 %v2031, %v1991
        %v2044 = vmul.f32 %v2031, %v1992
        %v2045 = vmul.f32 %v2031, %v1993
        %v2046 = vmul.f32 %v2031, %v1994
        %v2047 = vmul.f32 %v2031, %v1995
        %v2048 = vadd.f32 %v1926, %v2032
        %v2049 = vadd.f32 %v1927, %v2033
        %v2050 = vadd.f32 %v1928, %v2034
        %v2051 = vadd.f32 %v1929, %v2035
        %v2052 = vadd.f32 %v1930, %v2036
        %v2053 = vadd.f32 %v1931, %v2037
        %v2054 = vadd.f32 %v1932, %v2038
        %v2055 = vadd.f32 %v1933, %v2039
        %v2056 = vadd.f32 %v1934, %v2040
        %v2057 = vadd.f32 %v1935, %v2041
        %v2058 = vadd.f32 %v1936, %v2042
        %v2059 = vadd.f32 %v1937, %v2043
        %v2060 = vadd.f32 %v1938, %v2044
        %v2061 = vadd.f32 %v1939, %v2045
        %v2062 = vadd.f32 %v1940, %v2046
        %v2063 = vadd.f32 %v1941, %v2047
        %2064 = vrot.lane.b32.xlu0 %v1718, 1
        %v2065 = vpop.permute.xlu0 %2064
        %2066 = vrot.lane.b32.xlu0 %v1719, 1
        %v2067 = vpop.permute.xlu0 %2066
        %2068 = vrot.lane.b32.xlu0 %v1720, 1
        %v2069 = vpop.permute.xlu0 %2068
        %2070 = vrot.lane.b32.xlu0 %v1721, 1
        %v2071 = vpop.permute.xlu0 %2070
        %2072 = vrot.lane.b32.xlu0 %v1722, 1
        %v2073 = vpop.permute.xlu0 %2072
        %2074 = vrot.lane.b32.xlu0 %v1723, 1
        %v2075 = vpop.permute.xlu0 %2074
        %2076 = vrot.lane.b32.xlu0 %v1724, 1
        %v2077 = vpop.permute.xlu0 %2076
        %2078 = vrot.lane.b32.xlu0 %v1725, 1
        %v2079 = vpop.permute.xlu0 %2078
        %2080 = vrot.lane.b32.xlu0 %v1726, 1
        %v2081 = vpop.permute.xlu0 %2080
        %2082 = vrot.lane.b32.xlu0 %v1727, 1
        %v2083 = vpop.permute.xlu0 %2082
        %2084 = vrot.lane.b32.xlu0 %v1728, 1
        %v2085 = vpop.permute.xlu0 %2084
        %2086 = vrot.lane.b32.xlu0 %v1729, 1
        %v2087 = vpop.permute.xlu0 %2086
        %2088 = vrot.lane.b32.xlu0 %v1730, 1
        %v2089 = vpop.permute.xlu0 %2088
        %2090 = vrot.lane.b32.xlu0 %v1731, 1
        %v2091 = vpop.permute.xlu0 %2090
        %2092 = vrot.lane.b32.xlu0 %v1732, 1
        %v2093 = vpop.permute.xlu0 %2092
        %2094 = vrot.lane.b32.xlu0 %v1733, 1
        %v2095 = vpop.permute.xlu0 %2094
        %v2096 = vmul.f32 %v2065, %v1947
        %v2097 = vmul.f32 %v2067, %v1947
        %v2098 = vmul.f32 %v2069, %v1947
        %v2099 = vmul.f32 %v2071, %v1947
        %v2100 = vmul.f32 %v2073, %v1947
        %v2101 = vmul.f32 %v2075, %v1947
        %v2102 = vmul.f32 %v2077, %v1947
        %v2103 = vmul.f32 %v2079, %v1947
        %v2104 = vmul.f32 %v2081, %v1947
        %v2105 = vmul.f32 %v2083, %v1947
        %v2106 = vmul.f32 %v2085, %v1947
        %v2107 = vmul.f32 %v2087, %v1947
        %v2108 = vmul.f32 %v2089, %v1947
        %v2109 = vmul.f32 %v2091, %v1947
        %v2110 = vmul.f32 %v2093, %v1947
        %v2111 = vmul.f32 %v2095, %v1947
        %s2112 = sld [smem:[#allocation11 + $0x6]]
        %v2113 = vstv %s2112
        %v2114 = vmul.f32 %v2113, %v2096
        %v2115 = vmul.f32 %v2113, %v2097
        %v2116 = vmul.f32 %v2113, %v2098
        %v2117 = vmul.f32 %v2113, %v2099
        %v2118 = vmul.f32 %v2113, %v2100
        %v2119 = vmul.f32 %v2113, %v2101
        %v2120 = vmul.f32 %v2113, %v2102
        %v2121 = vmul.f32 %v2113, %v2103
        %v2122 = vmul.f32 %v2113, %v2104
        %v2123 = vmul.f32 %v2113, %v2105
        %v2124 = vmul.f32 %v2113, %v2106
        %v2125 = vmul.f32 %v2113, %v2107
        %v2126 = vmul.f32 %v2113, %v2108
        %v2127 = vmul.f32 %v2113, %v2109
        %v2128 = vmul.f32 %v2113, %v2110
        %v2129 = vmul.f32 %v2113, %v2111
        %v2130 = vadd.f32 %v2014, %v2114
        %v2131 = vadd.f32 %v2015, %v2115
        %v2132 = vadd.f32 %v2016, %v2116
        %v2133 = vadd.f32 %v2017, %v2117
        %v2134 = vadd.f32 %v2018, %v2118
        %v2135 = vadd.f32 %v2019, %v2119
        %v2136 = vadd.f32 %v2020, %v2120
        %v2137 = vadd.f32 %v2021, %v2121
        %v2138 = vadd.f32 %v2022, %v2122
        %v2139 = vadd.f32 %v2023, %v2123
        %v2140 = vadd.f32 %v2024, %v2124
        %v2141 = vadd.f32 %v2025, %v2125
        %v2142 = vadd.f32 %v2026, %v2126
        %v2143 = vadd.f32 %v2027, %v2127
        %v2144 = vadd.f32 %v2028, %v2128
        %v2145 = vadd.f32 %v2029, %v2129
        %s2146 = sld [smem:[#allocation11 + $0x10]]
        %v2147 = vstv %s2146
        %v2148 = vmul.f32 %v2147, %v2096
        %v2149 = vmul.f32 %v2147, %v2097
        %v2150 = vmul.f32 %v2147, %v2098
        %v2151 = vmul.f32 %v2147, %v2099
        %v2152 = vmul.f32 %v2147, %v2100
        %v2153 = vmul.f32 %v2147, %v2101
        %v2154 = vmul.f32 %v2147, %v2102
        %v2155 = vmul.f32 %v2147, %v2103
        %v2156 = vmul.f32 %v2147, %v2104
        %v2157 = vmul.f32 %v2147, %v2105
        %v2158 = vmul.f32 %v2147, %v2106
        %v2159 = vmul.f32 %v2147, %v2107
        %v2160 = vmul.f32 %v2147, %v2108
        %v2161 = vmul.f32 %v2147, %v2109
        %v2162 = vmul.f32 %v2147, %v2110
        %v2163 = vmul.f32 %v2147, %v2111
        %v2164 = vadd.f32 %v2048, %v2148
        %v2165 = vadd.f32 %v2049, %v2149
        %v2166 = vadd.f32 %v2050, %v2150
        %v2167 = vadd.f32 %v2051, %v2151
        %v2168 = vadd.f32 %v2052, %v2152
        %v2169 = vadd.f32 %v2053, %v2153
        %v2170 = vadd.f32 %v2054, %v2154
        %v2171 = vadd.f32 %v2055, %v2155
        %v2172 = vadd.f32 %v2056, %v2156
        %v2173 = vadd.f32 %v2057, %v2157
        %v2174 = vadd.f32 %v2058, %v2158
        %v2175 = vadd.f32 %v2059, %v2159
        %v2176 = vadd.f32 %v2060, %v2160
        %v2177 = vadd.f32 %v2061, %v2161
        %v2178 = vadd.f32 %v2062, %v2162
        %v2179 = vadd.f32 %v2063, %v2163
        %s2180 = sld [smem:[#allocation11 + $0x2]]
        %v2181 = vstv %s2180
        %v2182 = vmul.f32 %v2181, %v1445
        %v2183 = vmul.f32 %v2181, %v1446
        %v2184 = vmul.f32 %v2181, %v1447
        %v2185 = vmul.f32 %v2181, %v1448
        %v2186 = vmul.f32 %v2181, %v1449
        %v2187 = vmul.f32 %v2181, %v1450
        %v2188 = vmul.f32 %v2181, %v1451
        %v2189 = vmul.f32 %v2181, %v1452
        %v2190 = vmul.f32 %v2181, %v1453
        %v2191 = vmul.f32 %v2181, %v1454
        %v2192 = vmul.f32 %v2181, %v1455
        %v2193 = vmul.f32 %v2181, %v1456
        %v2194 = vmul.f32 %v2181, %v1457
        %v2195 = vmul.f32 %v2181, %v1458
        %v2196 = vmul.f32 %v2181, %v1459
        %v2197 = vmul.f32 %v2181, %v1460
        %v2198 = vadd.f32 %v2130, %v2182
        %v2199 = vadd.f32 %v2131, %v2183
        %v2200 = vadd.f32 %v2132, %v2184
        %v2201 = vadd.f32 %v2133, %v2185
        %v2202 = vadd.f32 %v2134, %v2186
        %v2203 = vadd.f32 %v2135, %v2187
        %v2204 = vadd.f32 %v2136, %v2188
        %v2205 = vadd.f32 %v2137, %v2189
        %v2206 = vadd.f32 %v2138, %v2190
        %v2207 = vadd.f32 %v2139, %v2191
        %v2208 = vadd.f32 %v2140, %v2192
        %v2209 = vadd.f32 %v2141, %v2193
        %v2210 = vadd.f32 %v2142, %v2194
        %v2211 = vadd.f32 %v2143, %v2195
        %v2212 = vadd.f32 %v2144, %v2196
        %v2213 = vadd.f32 %v2145, %v2197
        %s2214 = sld [smem:[#allocation11 + $0xc]]
        %v2215 = vstv %s2214
        %v2216 = vmul.f32 %v2215, %v1445
        %v2217 = vmul.f32 %v2215, %v1446
        %v2218 = vmul.f32 %v2215, %v1447
        %v2219 = vmul.f32 %v2215, %v1448
        %v2220 = vmul.f32 %v2215, %v1449
        %v2221 = vmul.f32 %v2215, %v1450
        %v2222 = vmul.f32 %v2215, %v1451
        %v2223 = vmul.f32 %v2215, %v1452
        %v2224 = vmul.f32 %v2215, %v1453
        %v2225 = vmul.f32 %v2215, %v1454
        %v2226 = vmul.f32 %v2215, %v1455
        %v2227 = vmul.f32 %v2215, %v1456
        %v2228 = vmul.f32 %v2215, %v1457
        %v2229 = vmul.f32 %v2215, %v1458
        %v2230 = vmul.f32 %v2215, %v1459
        %v2231 = vmul.f32 %v2215, %v1460
        %v2232 = vadd.f32 %v2164, %v2216
        %v2233 = vadd.f32 %v2165, %v2217
        %v2234 = vadd.f32 %v2166, %v2218
        %v2235 = vadd.f32 %v2167, %v2219
        %v2236 = vadd.f32 %v2168, %v2220
        %v2237 = vadd.f32 %v2169, %v2221
        %v2238 = vadd.f32 %v2170, %v2222
        %v2239 = vadd.f32 %v2171, %v2223
        %v2240 = vadd.f32 %v2172, %v2224
        %v2241 = vadd.f32 %v2173, %v2225
        %v2242 = vadd.f32 %v2174, %v2226
        %v2243 = vadd.f32 %v2175, %v2227
        %v2244 = vadd.f32 %v2176, %v2228
        %v2245 = vadd.f32 %v2177, %v2229
        %v2246 = vadd.f32 %v2178, %v2230
        %v2247 = vadd.f32 %v2179, %v2231
        %s2248 = sld [smem:[#allocation11 + $0x7]]
        %v2249 = vstv %s2248
        %v2250 = vmul.f32 %v2249, %v1718
        %v2251 = vmul.f32 %v2249, %v1719
        %v2252 = vmul.f32 %v2249, %v1720
        %v2253 = vmul.f32 %v2249, %v1721
        %v2254 = vmul.f32 %v2249, %v1722
        %v2255 = vmul.f32 %v2249, %v1723
        %v2256 = vmul.f32 %v2249, %v1724
        %v2257 = vmul.f32 %v2249, %v1725
        %v2258 = vmul.f32 %v2249, %v1726
        %v2259 = vmul.f32 %v2249, %v1727
        %v2260 = vmul.f32 %v2249, %v1728
        %v2261 = vmul.f32 %v2249, %v1729
        %v2262 = vmul.f32 %v2249, %v1730
        %v2263 = vmul.f32 %v2249, %v1731
        %v2264 = vmul.f32 %v2249, %v1732
        %v2265 = vmul.f32 %v2249, %v1733
        %v2266 = vadd.f32 %v2198, %v2250
        %v2267 = vadd.f32 %v2199, %v2251
        %v2268 = vadd.f32 %v2200, %v2252
        %v2269 = vadd.f32 %v2201, %v2253
        %v2270 = vadd.f32 %v2202, %v2254
        %v2271 = vadd.f32 %v2203, %v2255
        %v2272 = vadd.f32 %v2204, %v2256
        %v2273 = vadd.f32 %v2205, %v2257
        %v2274 = vadd.f32 %v2206, %v2258
        %v2275 = vadd.f32 %v2207, %v2259
        %v2276 = vadd.f32 %v2208, %v2260
        %v2277 = vadd.f32 %v2209, %v2261
        %v2278 = vadd.f32 %v2210, %v2262
        %v2279 = vadd.f32 %v2211, %v2263
        %v2280 = vadd.f32 %v2212, %v2264
        %v2281 = vadd.f32 %v2213, %v2265
        %s2282 = sld [smem:[#allocation11 + $0x11]]
        %v2283 = vstv %s2282
        %v2284 = vmul.f32 %v2283, %v1718
        %v2285 = vmul.f32 %v2283, %v1719
        %v2286 = vmul.f32 %v2283, %v1720
        %v2287 = vmul.f32 %v2283, %v1721
        %v2288 = vmul.f32 %v2283, %v1722
        %v2289 = vmul.f32 %v2283, %v1723
        %v2290 = vmul.f32 %v2283, %v1724
        %v2291 = vmul.f32 %v2283, %v1725
        %v2292 = vmul.f32 %v2283, %v1726
        %v2293 = vmul.f32 %v2283, %v1727
        %v2294 = vmul.f32 %v2283, %v1728
        %v2295 = vmul.f32 %v2283, %v1729
        %v2296 = vmul.f32 %v2283, %v1730
        %v2297 = vmul.f32 %v2283, %v1731
        %v2298 = vmul.f32 %v2283, %v1732
        %v2299 = vmul.f32 %v2283, %v1733
        %v2300 = vadd.f32 %v2232, %v2284
        %v2301 = vadd.f32 %v2233, %v2285
        %v2302 = vadd.f32 %v2234, %v2286
        %v2303 = vadd.f32 %v2235, %v2287
        %v2304 = vadd.f32 %v2236, %v2288
        %v2305 = vadd.f32 %v2237, %v2289
        %v2306 = vadd.f32 %v2238, %v2290
        %v2307 = vadd.f32 %v2239, %v2291
        %v2308 = vadd.f32 %v2240, %v2292
        %v2309 = vadd.f32 %v2241, %v2293
        %v2310 = vadd.f32 %v2242, %v2294
        %v2311 = vadd.f32 %v2243, %v2295
        %v2312 = vadd.f32 %v2244, %v2296
        %v2313 = vadd.f32 %v2245, %v2297
        %v2314 = vadd.f32 %v2246, %v2298
        %v2315 = vadd.f32 %v2247, %v2299
        %v2316 = vadd.s32 %v1735, 1
        %vm2317 = vcmp.ge.s32.totalorder %v2316, 0
        %vm2318 = vcmp.lt.s32.totalorder %v2316, 128
        %vm2319 = vmand %vm2317, %vm2318
        %v2320 = vsel %vm2319, 1, 0
        %v2321 = vcvt.s32.f32 %v2320
        %2322 = vrot.lane.b32.xlu0 %v1445, 127
        %v2323 = vpop.permute.xlu0 %2322
        %2324 = vrot.lane.b32.xlu0 %v1446, 127
        %v2325 = vpop.permute.xlu0 %2324
        %2326 = vrot.lane.b32.xlu0 %v1447, 127
        %v2327 = vpop.permute.xlu0 %2326
        %2328 = vrot.lane.b32.xlu0 %v1448, 127
        %v2329 = vpop.permute.xlu0 %2328
        %2330 = vrot.lane.b32.xlu0 %v1449, 127
        %v2331 = vpop.permute.xlu0 %2330
        %2332 = vrot.lane.b32.xlu0 %v1450, 127
        %v2333 = vpop.permute.xlu0 %2332
        %2334 = vrot.lane.b32.xlu0 %v1451, 127
        %v2335 = vpop.permute.xlu0 %2334
        %2336 = vrot.lane.b32.xlu0 %v1452, 127
        %v2337 = vpop.permute.xlu0 %2336
        %2338 = vrot.lane.b32.xlu0 %v1453, 127
        %v2339 = vpop.permute.xlu0 %2338
        %2340 = vrot.lane.b32.xlu0 %v1454, 127
        %v2341 = vpop.permute.xlu0 %2340
        %2342 = vrot.lane.b32.xlu0 %v1455, 127
        %v2343 = vpop.permute.xlu0 %2342
        %2344 = vrot.lane.b32.xlu0 %v1456, 127
        %v2345 = vpop.permute.xlu0 %2344
        %2346 = vrot.lane.b32.xlu0 %v1457, 127
        %v2347 = vpop.permute.xlu0 %2346
        %2348 = vrot.lane.b32.xlu0 %v1458, 127
        %v2349 = vpop.permute.xlu0 %2348
        %2350 = vrot.lane.b32.xlu0 %v1459, 127
        %v2351 = vpop.permute.xlu0 %2350
        %2352 = vrot.lane.b32.xlu0 %v1460, 127
        %v2353 = vpop.permute.xlu0 %2352
        %v2354 = vmul.f32 %v2323, %v2321
        %v2355 = vmul.f32 %v2325, %v2321
        %v2356 = vmul.f32 %v2327, %v2321
        %v2357 = vmul.f32 %v2329, %v2321
        %v2358 = vmul.f32 %v2331, %v2321
        %v2359 = vmul.f32 %v2333, %v2321
        %v2360 = vmul.f32 %v2335, %v2321
        %v2361 = vmul.f32 %v2337, %v2321
        %v2362 = vmul.f32 %v2339, %v2321
        %v2363 = vmul.f32 %v2341, %v2321
        %v2364 = vmul.f32 %v2343, %v2321
        %v2365 = vmul.f32 %v2345, %v2321
        %v2366 = vmul.f32 %v2347, %v2321
        %v2367 = vmul.f32 %v2349, %v2321
        %v2368 = vmul.f32 %v2351, %v2321
        %v2369 = vmul.f32 %v2353, %v2321
        %s2370 = sld [smem:[#allocation11 + $0x3]]
        %v2371 = vstv %s2370
        %v2372 = vmul.f32 %v2371, %v2354
        %v2373 = vmul.f32 %v2371, %v2355
        %v2374 = vmul.f32 %v2371, %v2356
        %v2375 = vmul.f32 %v2371, %v2357
        %v2376 = vmul.f32 %v2371, %v2358
        %v2377 = vmul.f32 %v2371, %v2359
        %v2378 = vmul.f32 %v2371, %v2360
        %v2379 = vmul.f32 %v2371, %v2361
        %v2380 = vmul.f32 %v2371, %v2362
        %v2381 = vmul.f32 %v2371, %v2363
        %v2382 = vmul.f32 %v2371, %v2364
        %v2383 = vmul.f32 %v2371, %v2365
        %v2384 = vmul.f32 %v2371, %v2366
        %v2385 = vmul.f32 %v2371, %v2367
        %v2386 = vmul.f32 %v2371, %v2368
        %v2387 = vmul.f32 %v2371, %v2369
        %v2388 = vadd.f32 %v2266, %v2372
        %v2389 = vadd.f32 %v2267, %v2373
        %v2390 = vadd.f32 %v2268, %v2374
        %v2391 = vadd.f32 %v2269, %v2375
        %v2392 = vadd.f32 %v2270, %v2376
        %v2393 = vadd.f32 %v2271, %v2377
        %v2394 = vadd.f32 %v2272, %v2378
        %v2395 = vadd.f32 %v2273, %v2379
        %v2396 = vadd.f32 %v2274, %v2380
        %v2397 = vadd.f32 %v2275, %v2381
        %v2398 = vadd.f32 %v2276, %v2382
        %v2399 = vadd.f32 %v2277, %v2383
        %v2400 = vadd.f32 %v2278, %v2384
        %v2401 = vadd.f32 %v2279, %v2385
        %v2402 = vadd.f32 %v2280, %v2386
        %v2403 = vadd.f32 %v2281, %v2387
        %s2404 = sld [smem:[#allocation11 + $0xd]]
        %v2405 = vstv %s2404
        %v2406 = vmul.f32 %v2405, %v2354
        %v2407 = vmul.f32 %v2405, %v2355
        %v2408 = vmul.f32 %v2405, %v2356
        %v2409 = vmul.f32 %v2405, %v2357
        %v2410 = vmul.f32 %v2405, %v2358
        %v2411 = vmul.f32 %v2405, %v2359
        %v2412 = vmul.f32 %v2405, %v2360
        %v2413 = vmul.f32 %v2405, %v2361
        %v2414 = vmul.f32 %v2405, %v2362
        %v2415 = vmul.f32 %v2405, %v2363
        %v2416 = vmul.f32 %v2405, %v2364
        %v2417 = vmul.f32 %v2405, %v2365
        %v2418 = vmul.f32 %v2405, %v2366
        %v2419 = vmul.f32 %v2405, %v2367
        %v2420 = vmul.f32 %v2405, %v2368
        %v2421 = vmul.f32 %v2405, %v2369
        %v2422 = vadd.f32 %v2300, %v2406
        %v2423 = vadd.f32 %v2301, %v2407
        %v2424 = vadd.f32 %v2302, %v2408
        %v2425 = vadd.f32 %v2303, %v2409
        %v2426 = vadd.f32 %v2304, %v2410
        %v2427 = vadd.f32 %v2305, %v2411
        %v2428 = vadd.f32 %v2306, %v2412
        %v2429 = vadd.f32 %v2307, %v2413
        %v2430 = vadd.f32 %v2308, %v2414
        %v2431 = vadd.f32 %v2309, %v2415
        %v2432 = vadd.f32 %v2310, %v2416
        %v2433 = vadd.f32 %v2311, %v2417
        %v2434 = vadd.f32 %v2312, %v2418
        %v2435 = vadd.f32 %v2313, %v2419
        %v2436 = vadd.f32 %v2314, %v2420
        %v2437 = vadd.f32 %v2315, %v2421
        %2438 = vrot.lane.b32.xlu0 %v1718, 127
        %v2439 = vpop.permute.xlu0 %2438
        %2440 = vrot.lane.b32.xlu0 %v1719, 127
        %v2441 = vpop.permute.xlu0 %2440
        %2442 = vrot.lane.b32.xlu0 %v1720, 127
        %v2443 = vpop.permute.xlu0 %2442
        %2444 = vrot.lane.b32.xlu0 %v1721, 127
        %v2445 = vpop.permute.xlu0 %2444
        %2446 = vrot.lane.b32.xlu0 %v1722, 127
        %v2447 = vpop.permute.xlu0 %2446
        %2448 = vrot.lane.b32.xlu0 %v1723, 127
        %v2449 = vpop.permute.xlu0 %2448
        %2450 = vrot.lane.b32.xlu0 %v1724, 127
        %v2451 = vpop.permute.xlu0 %2450
        %2452 = vrot.lane.b32.xlu0 %v1725, 127
        %v2453 = vpop.permute.xlu0 %2452
        %2454 = vrot.lane.b32.xlu0 %v1726, 127
        %v2455 = vpop.permute.xlu0 %2454
        %2456 = vrot.lane.b32.xlu0 %v1727, 127
        %v2457 = vpop.permute.xlu0 %2456
        %2458 = vrot.lane.b32.xlu0 %v1728, 127
        %v2459 = vpop.permute.xlu0 %2458
        %2460 = vrot.lane.b32.xlu0 %v1729, 127
        %v2461 = vpop.permute.xlu0 %2460
        %2462 = vrot.lane.b32.xlu0 %v1730, 127
        %v2463 = vpop.permute.xlu0 %2462
        %2464 = vrot.lane.b32.xlu0 %v1731, 127
        %v2465 = vpop.permute.xlu0 %2464
        %2466 = vrot.lane.b32.xlu0 %v1732, 127
        %v2467 = vpop.permute.xlu0 %2466
        %2468 = vrot.lane.b32.xlu0 %v1733, 127
        %v2469 = vpop.permute.xlu0 %2468
        %v2470 = vmul.f32 %v2439, %v2321
        %v2471 = vmul.f32 %v2441, %v2321
        %v2472 = vmul.f32 %v2443, %v2321
        %v2473 = vmul.f32 %v2445, %v2321
        %v2474 = vmul.f32 %v2447, %v2321
        %v2475 = vmul.f32 %v2449, %v2321
        %v2476 = vmul.f32 %v2451, %v2321
        %v2477 = vmul.f32 %v2453, %v2321
        %v2478 = vmul.f32 %v2455, %v2321
        %v2479 = vmul.f32 %v2457, %v2321
        %v2480 = vmul.f32 %v2459, %v2321
        %v2481 = vmul.f32 %v2461, %v2321
        %v2482 = vmul.f32 %v2463, %v2321
        %v2483 = vmul.f32 %v2465, %v2321
        %v2484 = vmul.f32 %v2467, %v2321
        %v2485 = vmul.f32 %v2469, %v2321
        %s2486 = sld [smem:[#allocation11 + $0x8]]
        %v2487 = vstv %s2486
        %v2488 = vmul.f32 %v2487, %v2470
        %v2489 = vmul.f32 %v2487, %v2471
        %v2490 = vmul.f32 %v2487, %v2472
        %v2491 = vmul.f32 %v2487, %v2473
        %v2492 = vmul.f32 %v2487, %v2474
        %v2493 = vmul.f32 %v2487, %v2475
        %v2494 = vmul.f32 %v2487, %v2476
        %v2495 = vmul.f32 %v2487, %v2477
        %v2496 = vmul.f32 %v2487, %v2478
        %v2497 = vmul.f32 %v2487, %v2479
        %v2498 = vmul.f32 %v2487, %v2480
        %v2499 = vmul.f32 %v2487, %v2481
        %v2500 = vmul.f32 %v2487, %v2482
        %v2501 = vmul.f32 %v2487, %v2483
        %v2502 = vmul.f32 %v2487, %v2484
        %v2503 = vmul.f32 %v2487, %v2485
        %v2504 = vadd.f32 %v2388, %v2488
        %v2505 = vadd.f32 %v2389, %v2489
        %v2506 = vadd.f32 %v2390, %v2490
        %v2507 = vadd.f32 %v2391, %v2491
        %v2508 = vadd.f32 %v2392, %v2492
        %v2509 = vadd.f32 %v2393, %v2493
        %v2510 = vadd.f32 %v2394, %v2494
        %v2511 = vadd.f32 %v2395, %v2495
        %v2512 = vadd.f32 %v2396, %v2496
        %v2513 = vadd.f32 %v2397, %v2497
        %v2514 = vadd.f32 %v2398, %v2498
        %v2515 = vadd.f32 %v2399, %v2499
        %v2516 = vadd.f32 %v2400, %v2500
        %v2517 = vadd.f32 %v2401, %v2501
        %v2518 = vadd.f32 %v2402, %v2502
        %v2519 = vadd.f32 %v2403, %v2503
        %s2520 = sld [smem:[#allocation11 + $0x12]]
        %v2521 = vstv %s2520
        %v2522 = vmul.f32 %v2521, %v2470
        %v2523 = vmul.f32 %v2521, %v2471
        %v2524 = vmul.f32 %v2521, %v2472
        %v2525 = vmul.f32 %v2521, %v2473
        %v2526 = vmul.f32 %v2521, %v2474
        %v2527 = vmul.f32 %v2521, %v2475
        %v2528 = vmul.f32 %v2521, %v2476
        %v2529 = vmul.f32 %v2521, %v2477
        %v2530 = vmul.f32 %v2521, %v2478
        %v2531 = vmul.f32 %v2521, %v2479
        %v2532 = vmul.f32 %v2521, %v2480
        %v2533 = vmul.f32 %v2521, %v2481
        %v2534 = vmul.f32 %v2521, %v2482
        %v2535 = vmul.f32 %v2521, %v2483
        %v2536 = vmul.f32 %v2521, %v2484
        %v2537 = vmul.f32 %v2521, %v2485
        %v2538 = vadd.f32 %v2422, %v2522
        %v2539 = vadd.f32 %v2423, %v2523
        %v2540 = vadd.f32 %v2424, %v2524
        %v2541 = vadd.f32 %v2425, %v2525
        %v2542 = vadd.f32 %v2426, %v2526
        %v2543 = vadd.f32 %v2427, %v2527
        %v2544 = vadd.f32 %v2428, %v2528
        %v2545 = vadd.f32 %v2429, %v2529
        %v2546 = vadd.f32 %v2430, %v2530
        %v2547 = vadd.f32 %v2431, %v2531
        %v2548 = vadd.f32 %v2432, %v2532
        %v2549 = vadd.f32 %v2433, %v2533
        %v2550 = vadd.f32 %v2434, %v2534
        %v2551 = vadd.f32 %v2435, %v2535
        %v2552 = vadd.f32 %v2436, %v2536
        %v2553 = vadd.f32 %v2437, %v2537
        %v2554 = vadd.s32 %v1735, 2
        %vm2555 = vcmp.ge.s32.totalorder %v2554, 0
        %vm2556 = vcmp.lt.s32.totalorder %v2554, 128
        %vm2557 = vmand %vm2555, %vm2556
        %v2558 = vsel %vm2557, 1, 0
        %v2559 = vcvt.s32.f32 %v2558
        %2560 = vrot.lane.b32.xlu0 %v1445, 126
        %v2561 = vpop.permute.xlu0 %2560
        %2562 = vrot.lane.b32.xlu0 %v1446, 126
        %v2563 = vpop.permute.xlu0 %2562
        %2564 = vrot.lane.b32.xlu0 %v1447, 126
        %v2565 = vpop.permute.xlu0 %2564
        %2566 = vrot.lane.b32.xlu0 %v1448, 126
        %v2567 = vpop.permute.xlu0 %2566
        %2568 = vrot.lane.b32.xlu0 %v1449, 126
        %v2569 = vpop.permute.xlu0 %2568
        %2570 = vrot.lane.b32.xlu0 %v1450, 126
        %v2571 = vpop.permute.xlu0 %2570
        %2572 = vrot.lane.b32.xlu0 %v1451, 126
        %v2573 = vpop.permute.xlu0 %2572
        %2574 = vrot.lane.b32.xlu0 %v1452, 126
        %v2575 = vpop.permute.xlu0 %2574
        %2576 = vrot.lane.b32.xlu0 %v1453, 126
        %v2577 = vpop.permute.xlu0 %2576
        %2578 = vrot.lane.b32.xlu0 %v1454, 126
        %v2579 = vpop.permute.xlu0 %2578
        %2580 = vrot.lane.b32.xlu0 %v1455, 126
        %v2581 = vpop.permute.xlu0 %2580
        %2582 = vrot.lane.b32.xlu0 %v1456, 126
        %v2583 = vpop.permute.xlu0 %2582
        %2584 = vrot.lane.b32.xlu0 %v1457, 126
        %v2585 = vpop.permute.xlu0 %2584
        %2586 = vrot.lane.b32.xlu0 %v1458, 126
        %v2587 = vpop.permute.xlu0 %2586
        %2588 = vrot.lane.b32.xlu0 %v1459, 126
        %v2589 = vpop.permute.xlu0 %2588
        %2590 = vrot.lane.b32.xlu0 %v1460, 126
        %v2591 = vpop.permute.xlu0 %2590
        %v2592 = vmul.f32 %v2561, %v2559
        %v2593 = vmul.f32 %v2563, %v2559
        %v2594 = vmul.f32 %v2565, %v2559
        %v2595 = vmul.f32 %v2567, %v2559
        %v2596 = vmul.f32 %v2569, %v2559
        %v2597 = vmul.f32 %v2571, %v2559
        %v2598 = vmul.f32 %v2573, %v2559
        %v2599 = vmul.f32 %v2575, %v2559
        %v2600 = vmul.f32 %v2577, %v2559
        %v2601 = vmul.f32 %v2579, %v2559
        %v2602 = vmul.f32 %v2581, %v2559
        %v2603 = vmul.f32 %v2583, %v2559
        %v2604 = vmul.f32 %v2585, %v2559
        %v2605 = vmul.f32 %v2587, %v2559
        %v2606 = vmul.f32 %v2589, %v2559
        %v2607 = vmul.f32 %v2591, %v2559
        %s2608 = sld [smem:[#allocation11 + $0x4]]
        %v2609 = vstv %s2608
        %v2610 = vmul.f32 %v2609, %v2592
        %v2611 = vmul.f32 %v2609, %v2593
        %v2612 = vmul.f32 %v2609, %v2594
        %v2613 = vmul.f32 %v2609, %v2595
        %v2614 = vmul.f32 %v2609, %v2596
        %v2615 = vmul.f32 %v2609, %v2597
        %v2616 = vmul.f32 %v2609, %v2598
        %v2617 = vmul.f32 %v2609, %v2599
        %v2618 = vmul.f32 %v2609, %v2600
        %v2619 = vmul.f32 %v2609, %v2601
        %v2620 = vmul.f32 %v2609, %v2602
        %v2621 = vmul.f32 %v2609, %v2603
        %v2622 = vmul.f32 %v2609, %v2604
        %v2623 = vmul.f32 %v2609, %v2605
        %v2624 = vmul.f32 %v2609, %v2606
        %v2625 = vmul.f32 %v2609, %v2607
        %v2626 = vadd.f32 %v2504, %v2610
        %v2627 = vadd.f32 %v2505, %v2611
        %v2628 = vadd.f32 %v2506, %v2612
        %v2629 = vadd.f32 %v2507, %v2613
        %v2630 = vadd.f32 %v2508, %v2614
        %v2631 = vadd.f32 %v2509, %v2615
        %v2632 = vadd.f32 %v2510, %v2616
        %v2633 = vadd.f32 %v2511, %v2617
        %v2634 = vadd.f32 %v2512, %v2618
        %v2635 = vadd.f32 %v2513, %v2619
        %v2636 = vadd.f32 %v2514, %v2620
        %v2637 = vadd.f32 %v2515, %v2621
        %v2638 = vadd.f32 %v2516, %v2622
        %v2639 = vadd.f32 %v2517, %v2623
        %v2640 = vadd.f32 %v2518, %v2624
        %v2641 = vadd.f32 %v2519, %v2625
        %s2642 = sld [smem:[#allocation11 + $0xe]]
        %v2643 = vstv %s2642
        %v2644 = vmul.f32 %v2643, %v2592
        %v2645 = vmul.f32 %v2643, %v2593
        %v2646 = vmul.f32 %v2643, %v2594
        %v2647 = vmul.f32 %v2643, %v2595
        %v2648 = vmul.f32 %v2643, %v2596
        %v2649 = vmul.f32 %v2643, %v2597
        %v2650 = vmul.f32 %v2643, %v2598
        %v2651 = vmul.f32 %v2643, %v2599
        %v2652 = vmul.f32 %v2643, %v2600
        %v2653 = vmul.f32 %v2643, %v2601
        %v2654 = vmul.f32 %v2643, %v2602
        %v2655 = vmul.f32 %v2643, %v2603
        %v2656 = vmul.f32 %v2643, %v2604
        %v2657 = vmul.f32 %v2643, %v2605
        %v2658 = vmul.f32 %v2643, %v2606
        %v2659 = vmul.f32 %v2643, %v2607
        %v2660 = vadd.f32 %v2538, %v2644
        %v2661 = vadd.f32 %v2539, %v2645
        %v2662 = vadd.f32 %v2540, %v2646
        %v2663 = vadd.f32 %v2541, %v2647
        %v2664 = vadd.f32 %v2542, %v2648
        %v2665 = vadd.f32 %v2543, %v2649
        %v2666 = vadd.f32 %v2544, %v2650
        %v2667 = vadd.f32 %v2545, %v2651
        %v2668 = vadd.f32 %v2546, %v2652
        %v2669 = vadd.f32 %v2547, %v2653
        %v2670 = vadd.f32 %v2548, %v2654
        %v2671 = vadd.f32 %v2549, %v2655
        %v2672 = vadd.f32 %v2550, %v2656
        %v2673 = vadd.f32 %v2551, %v2657
        %v2674 = vadd.f32 %v2552, %v2658
        %v2675 = vadd.f32 %v2553, %v2659
        %2676 = vrot.lane.b32.xlu0 %v1718, 126
        %v2677 = vpop.permute.xlu0 %2676
        %2678 = vrot.lane.b32.xlu0 %v1719, 126
        %v2679 = vpop.permute.xlu0 %2678
        %2680 = vrot.lane.b32.xlu0 %v1720, 126
        %v2681 = vpop.permute.xlu0 %2680
        %2682 = vrot.lane.b32.xlu0 %v1721, 126
        %v2683 = vpop.permute.xlu0 %2682
        %2684 = vrot.lane.b32.xlu0 %v1722, 126
        %v2685 = vpop.permute.xlu0 %2684
        %2686 = vrot.lane.b32.xlu0 %v1723, 126
        %v2687 = vpop.permute.xlu0 %2686
        %2688 = vrot.lane.b32.xlu0 %v1724, 126
        %v2689 = vpop.permute.xlu0 %2688
        %2690 = vrot.lane.b32.xlu0 %v1725, 126
        %v2691 = vpop.permute.xlu0 %2690
        %2692 = vrot.lane.b32.xlu0 %v1726, 126
        %v2693 = vpop.permute.xlu0 %2692
        %2694 = vrot.lane.b32.xlu0 %v1727, 126
        %v2695 = vpop.permute.xlu0 %2694
        %2696 = vrot.lane.b32.xlu0 %v1728, 126
        %v2697 = vpop.permute.xlu0 %2696
        %2698 = vrot.lane.b32.xlu0 %v1729, 126
        %v2699 = vpop.permute.xlu0 %2698
        %2700 = vrot.lane.b32.xlu0 %v1730, 126
        %v2701 = vpop.permute.xlu0 %2700
        %2702 = vrot.lane.b32.xlu0 %v1731, 126
        %v2703 = vpop.permute.xlu0 %2702
        %2704 = vrot.lane.b32.xlu0 %v1732, 126
        %v2705 = vpop.permute.xlu0 %2704
        %2706 = vrot.lane.b32.xlu0 %v1733, 126
        %v2707 = vpop.permute.xlu0 %2706
        %v2708 = vmul.f32 %v2677, %v2559
        %v2709 = vmul.f32 %v2679, %v2559
        %v2710 = vmul.f32 %v2681, %v2559
        %v2711 = vmul.f32 %v2683, %v2559
        %v2712 = vmul.f32 %v2685, %v2559
        %v2713 = vmul.f32 %v2687, %v2559
        %v2714 = vmul.f32 %v2689, %v2559
        %v2715 = vmul.f32 %v2691, %v2559
        %v2716 = vmul.f32 %v2693, %v2559
        %v2717 = vmul.f32 %v2695, %v2559
        %v2718 = vmul.f32 %v2697, %v2559
        %v2719 = vmul.f32 %v2699, %v2559
        %v2720 = vmul.f32 %v2701, %v2559
        %v2721 = vmul.f32 %v2703, %v2559
        %v2722 = vmul.f32 %v2705, %v2559
        %v2723 = vmul.f32 %v2707, %v2559
        %s2724 = sld [smem:[#allocation11 + $0x9]]
        %v2725 = vstv %s2724
        %v2726 = vmul.f32 %v2725, %v2708
        %v2727 = vmul.f32 %v2725, %v2709
        %v2728 = vmul.f32 %v2725, %v2710
        %v2729 = vmul.f32 %v2725, %v2711
        %v2730 = vmul.f32 %v2725, %v2712
        %v2731 = vmul.f32 %v2725, %v2713
        %v2732 = vmul.f32 %v2725, %v2714
        %v2733 = vmul.f32 %v2725, %v2715
        %v2734 = vmul.f32 %v2725, %v2716
        %v2735 = vmul.f32 %v2725, %v2717
        %v2736 = vmul.f32 %v2725, %v2718
        %v2737 = vmul.f32 %v2725, %v2719
        %v2738 = vmul.f32 %v2725, %v2720
        %v2739 = vmul.f32 %v2725, %v2721
        %v2740 = vmul.f32 %v2725, %v2722
        %v2741 = vmul.f32 %v2725, %v2723
        %v2742 = vadd.f32 %v2626, %v2726
        %v2743 = vadd.f32 %v2627, %v2727
        %v2744 = vadd.f32 %v2628, %v2728
        %v2745 = vadd.f32 %v2629, %v2729
        %v2746 = vadd.f32 %v2630, %v2730
        %v2747 = vadd.f32 %v2631, %v2731
        %v2748 = vadd.f32 %v2632, %v2732
        %v2749 = vadd.f32 %v2633, %v2733
        %v2750 = vadd.f32 %v2634, %v2734
        %v2751 = vadd.f32 %v2635, %v2735
        %v2752 = vadd.f32 %v2636, %v2736
        %v2753 = vadd.f32 %v2637, %v2737
        %v2754 = vadd.f32 %v2638, %v2738
        %v2755 = vadd.f32 %v2639, %v2739
        %v2756 = vadd.f32 %v2640, %v2740
        %v2757 = vadd.f32 %v2641, %v2741
        %s2758 = sld [smem:[#allocation11 + $0x13]]
        %v2759 = vstv %s2758
        %v2760 = vmul.f32 %v2759, %v2708
        %v2761 = vmul.f32 %v2759, %v2709
        %v2762 = vmul.f32 %v2759, %v2710
        %v2763 = vmul.f32 %v2759, %v2711
        %v2764 = vmul.f32 %v2759, %v2712
        %v2765 = vmul.f32 %v2759, %v2713
        %v2766 = vmul.f32 %v2759, %v2714
        %v2767 = vmul.f32 %v2759, %v2715
        %v2768 = vmul.f32 %v2759, %v2716
        %v2769 = vmul.f32 %v2759, %v2717
        %v2770 = vmul.f32 %v2759, %v2718
        %v2771 = vmul.f32 %v2759, %v2719
        %v2772 = vmul.f32 %v2759, %v2720
        %v2773 = vmul.f32 %v2759, %v2721
        %v2774 = vmul.f32 %v2759, %v2722
        %v2775 = vmul.f32 %v2759, %v2723
        %v2776 = vadd.f32 %v2660, %v2760
        %v2777 = vadd.f32 %v2661, %v2761
        %v2778 = vadd.f32 %v2662, %v2762
        %v2779 = vadd.f32 %v2663, %v2763
        %v2780 = vadd.f32 %v2664, %v2764
        %v2781 = vadd.f32 %v2665, %v2765
        %v2782 = vadd.f32 %v2666, %v2766
        %v2783 = vadd.f32 %v2667, %v2767
        %v2784 = vadd.f32 %v2668, %v2768
        %v2785 = vadd.f32 %v2669, %v2769
        %v2786 = vadd.f32 %v2670, %v2770
        %v2787 = vadd.f32 %v2671, %v2771
        %v2788 = vadd.f32 %v2672, %v2772
        %v2789 = vadd.f32 %v2673, %v2773
        %v2790 = vadd.f32 %v2674, %v2774
        %v2791 = vadd.f32 %v2675, %v2775
        %s2792 = sld [smem:[#allocation12]]
        %v2793 = vstv %s2792
        %v2794 = vadd.f32 %v2742, %v2793
        %v2795 = vadd.f32 %v2743, %v2793
        %v2796 = vadd.f32 %v2744, %v2793
        %v2797 = vadd.f32 %v2745, %v2793
        %v2798 = vadd.f32 %v2746, %v2793
        %v2799 = vadd.f32 %v2747, %v2793
        %v2800 = vadd.f32 %v2748, %v2793
        %v2801 = vadd.f32 %v2749, %v2793
        %v2802 = vadd.f32 %v2750, %v2793
        %v2803 = vadd.f32 %v2751, %v2793
        %v2804 = vadd.f32 %v2752, %v2793
        %v2805 = vadd.f32 %v2753, %v2793
        %v2806 = vadd.f32 %v2754, %v2793
        %v2807 = vadd.f32 %v2755, %v2793
        %v2808 = vadd.f32 %v2756, %v2793
        %v2809 = vadd.f32 %v2757, %v2793
        %v2810 = vxor.u32 %v2794, 2147483648
        %v2811 = vxor.u32 %v2795, 2147483648
        %v2812 = vxor.u32 %v2796, 2147483648
        %v2813 = vxor.u32 %v2797, 2147483648
        %v2814 = vxor.u32 %v2798, 2147483648
        %v2815 = vxor.u32 %v2799, 2147483648
        %v2816 = vxor.u32 %v2800, 2147483648
        %v2817 = vxor.u32 %v2801, 2147483648
        %v2818 = vxor.u32 %v2802, 2147483648
        %v2819 = vxor.u32 %v2803, 2147483648
        %v2820 = vxor.u32 %v2804, 2147483648
        %v2821 = vxor.u32 %v2805, 2147483648
        %v2822 = vxor.u32 %v2806, 2147483648
        %v2823 = vxor.u32 %v2807, 2147483648
        %v2824 = vxor.u32 %v2808, 2147483648
        %v2825 = vxor.u32 %v2809, 2147483648
        %v2826 = vmul.f32 %v2810, 1.442695
        %v2827 = vpow.pop %v2826
        %v2828 = vmul.f32 %v2811, 1.442695
        %v2829 = vpow.pop %v2828
        %v2830 = vmul.f32 %v2812, 1.442695
        %v2831 = vpow.pop %v2830
        %v2832 = vmul.f32 %v2813, 1.442695
        %v2833 = vpow.pop %v2832
        %v2834 = vmul.f32 %v2814, 1.442695
        %v2835 = vpow.pop %v2834
        %v2836 = vmul.f32 %v2815, 1.442695
        %v2837 = vpow.pop %v2836
        %v2838 = vmul.f32 %v2816, 1.442695
        %v2839 = vpow.pop %v2838
        %v2840 = vmul.f32 %v2817, 1.442695
        %v2841 = vpow.pop %v2840
        %v2842 = vmul.f32 %v2818, 1.442695
        %v2843 = vpow.pop %v2842
        %v2844 = vmul.f32 %v2819, 1.442695
        %v2845 = vpow.pop %v2844
        %v2846 = vmul.f32 %v2820, 1.442695
        %v2847 = vpow.pop %v2846
        %v2848 = vmul.f32 %v2821, 1.442695
        %v2849 = vpow.pop %v2848
        %v2850 = vmul.f32 %v2822, 1.442695
        %v2851 = vpow.pop %v2850
        %v2852 = vmul.f32 %v2823, 1.442695
        %v2853 = vpow.pop %v2852
        %v2854 = vmul.f32 %v2824, 1.442695
        %v2855 = vpow.pop %v2854
        %v2856 = vmul.f32 %v2825, 1.442695
        %v2857 = vpow.pop %v2856
        %v2858 = vadd.f32 %v2827, 1.0
        %v2859 = vadd.f32 %v2829, 1.0
        %v2860 = vadd.f32 %v2831, 1.0
        %v2861 = vadd.f32 %v2833, 1.0
        %v2862 = vadd.f32 %v2835, 1.0
        %v2863 = vadd.f32 %v2837, 1.0
        %v2864 = vadd.f32 %v2839, 1.0
        %v2865 = vadd.f32 %v2841, 1.0
        %v2866 = vadd.f32 %v2843, 1.0
        %v2867 = vadd.f32 %v2845, 1.0
        %v2868 = vadd.f32 %v2847, 1.0
        %v2869 = vadd.f32 %v2849, 1.0
        %v2870 = vadd.f32 %v2851, 1.0
        %v2871 = vadd.f32 %v2853, 1.0
        %v2872 = vadd.f32 %v2855, 1.0
        %v2873 = vadd.f32 %v2857, 1.0
        %v2874 = vrcp.pop %v2858
        %v2875 = vmul.f32 %v2858, %v2874
        %v2876 = vsub.f32 1.0, %v2875
        %v2877 = vmul.f32 %v2874, %v2876
        %v2878 = vadd.f32 %v2874, %v2877
        %vm2879 = vweird.f32 %v2858
        %vm2880 = vweird.f32 %v2874
        %vm2881 = vmor %vm2879, %vm2880
        %v2882 = vsel %vm2881, %v2874, %v2878
        %v2883 = vand.u32 2147483647, %v2858
        %vm2884 = vcmp.eq.f32.partialorder %v2883, 8.507059e+37
        %v2885 = vand.u32 %v2858, 2147483648
        %v2886 = vor.u32 1.1754944e-38, %v2885
        %v2887 = vsel %vm2884, %v2886, %v2882
        %v2888 = vmul.f32 1.0, %v2887
        %v2889 = vrcp.pop %v2859
        %v2890 = vmul.f32 %v2859, %v2889
        %v2891 = vsub.f32 1.0, %v2890
        %v2892 = vmul.f32 %v2889, %v2891
        %v2893 = vadd.f32 %v2889, %v2892
        %vm2894 = vweird.f32 %v2859
        %vm2895 = vweird.f32 %v2889
        %vm2896 = vmor %vm2894, %vm2895
        %v2897 = vsel %vm2896, %v2889, %v2893
        %v2898 = vand.u32 2147483647, %v2859
        %vm2899 = vcmp.eq.f32.partialorder %v2898, 8.507059e+37
        %v2900 = vand.u32 %v2859, 2147483648
        %v2901 = vor.u32 1.1754944e-38, %v2900
        %v2902 = vsel %vm2899, %v2901, %v2897
        %v2903 = vmul.f32 1.0, %v2902
        %v2904 = vrcp.pop %v2860
        %v2905 = vmul.f32 %v2860, %v2904
        %v2906 = vsub.f32 1.0, %v2905
        %v2907 = vmul.f32 %v2904, %v2906
        %v2908 = vadd.f32 %v2904, %v2907
        %vm2909 = vweird.f32 %v2860
        %vm2910 = vweird.f32 %v2904
        %vm2911 = vmor %vm2909, %vm2910
        %v2912 = vsel %vm2911, %v2904, %v2908
        %v2913 = vand.u32 2147483647, %v2860
        %vm2914 = vcmp.eq.f32.partialorder %v2913, 8.507059e+37
        %v2915 = vand.u32 %v2860, 2147483648
        %v2916 = vor.u32 1.1754944e-38, %v2915
        %v2917 = vsel %vm2914, %v2916, %v2912
        %v2918 = vmul.f32 1.0, %v2917
        %v2919 = vrcp.pop %v2861
        %v2920 = vmul.f32 %v2861, %v2919
        %v2921 = vsub.f32 1.0, %v2920
        %v2922 = vmul.f32 %v2919, %v2921
        %v2923 = vadd.f32 %v2919, %v2922
        %vm2924 = vweird.f32 %v2861
        %vm2925 = vweird.f32 %v2919
        %vm2926 = vmor %vm2924, %vm2925
        %v2927 = vsel %vm2926, %v2919, %v2923
        %v2928 = vand.u32 2147483647, %v2861
        %vm2929 = vcmp.eq.f32.partialorder %v2928, 8.507059e+37
        %v2930 = vand.u32 %v2861, 2147483648
        %v2931 = vor.u32 1.1754944e-38, %v2930
        %v2932 = vsel %vm2929, %v2931, %v2927
        %v2933 = vmul.f32 1.0, %v2932
        %v2934 = vrcp.pop %v2862
        %v2935 = vmul.f32 %v2862, %v2934
        %v2936 = vsub.f32 1.0, %v2935
        %v2937 = vmul.f32 %v2934, %v2936
        %v2938 = vadd.f32 %v2934, %v2937
        %vm2939 = vweird.f32 %v2862
        %vm2940 = vweird.f32 %v2934
        %vm2941 = vmor %vm2939, %vm2940
        %v2942 = vsel %vm2941, %v2934, %v2938
        %v2943 = vand.u32 2147483647, %v2862
        %vm2944 = vcmp.eq.f32.partialorder %v2943, 8.507059e+37
        %v2945 = vand.u32 %v2862, 2147483648
        %v2946 = vor.u32 1.1754944e-38, %v2945
        %v2947 = vsel %vm2944, %v2946, %v2942
        %v2948 = vmul.f32 1.0, %v2947
        %v2949 = vrcp.pop %v2863
        %v2950 = vmul.f32 %v2863, %v2949
        %v2951 = vsub.f32 1.0, %v2950
        %v2952 = vmul.f32 %v2949, %v2951
        %v2953 = vadd.f32 %v2949, %v2952
        %vm2954 = vweird.f32 %v2863
        %vm2955 = vweird.f32 %v2949
        %vm2956 = vmor %vm2954, %vm2955
        %v2957 = vsel %vm2956, %v2949, %v2953
        %v2958 = vand.u32 2147483647, %v2863
        %vm2959 = vcmp.eq.f32.partialorder %v2958, 8.507059e+37
        %v2960 = vand.u32 %v2863, 2147483648
        %v2961 = vor.u32 1.1754944e-38, %v2960
        %v2962 = vsel %vm2959, %v2961, %v2957
        %v2963 = vmul.f32 1.0, %v2962
        %v2964 = vrcp.pop %v2864
        %v2965 = vmul.f32 %v2864, %v2964
        %v2966 = vsub.f32 1.0, %v2965
        %v2967 = vmul.f32 %v2964, %v2966
        %v2968 = vadd.f32 %v2964, %v2967
        %vm2969 = vweird.f32 %v2864
        %vm2970 = vweird.f32 %v2964
        %vm2971 = vmor %vm2969, %vm2970
        %v2972 = vsel %vm2971, %v2964, %v2968
        %v2973 = vand.u32 2147483647, %v2864
        %vm2974 = vcmp.eq.f32.partialorder %v2973, 8.507059e+37
        %v2975 = vand.u32 %v2864, 2147483648
        %v2976 = vor.u32 1.1754944e-38, %v2975
        %v2977 = vsel %vm2974, %v2976, %v2972
        %v2978 = vmul.f32 1.0, %v2977
        %v2979 = vrcp.pop %v2865
        %v2980 = vmul.f32 %v2865, %v2979
        %v2981 = vsub.f32 1.0, %v2980
        %v2982 = vmul.f32 %v2979, %v2981
        %v2983 = vadd.f32 %v2979, %v2982
        %vm2984 = vweird.f32 %v2865
        %vm2985 = vweird.f32 %v2979
        %vm2986 = vmor %vm2984, %vm2985
        %v2987 = vsel %vm2986, %v2979, %v2983
        %v2988 = vand.u32 2147483647, %v2865
        %vm2989 = vcmp.eq.f32.partialorder %v2988, 8.507059e+37
        %v2990 = vand.u32 %v2865, 2147483648
        %v2991 = vor.u32 1.1754944e-38, %v2990
        %v2992 = vsel %vm2989, %v2991, %v2987
        %v2993 = vmul.f32 1.0, %v2992
        %v2994 = vrcp.pop %v2866
        %v2995 = vmul.f32 %v2866, %v2994
        %v2996 = vsub.f32 1.0, %v2995
        %v2997 = vmul.f32 %v2994, %v2996
        %v2998 = vadd.f32 %v2994, %v2997
        %vm2999 = vweird.f32 %v2866
        %vm3000 = vweird.f32 %v2994
        %vm3001 = vmor %vm2999, %vm3000
        %v3002 = vsel %vm3001, %v2994, %v2998
        %v3003 = vand.u32 2147483647, %v2866
        %vm3004 = vcmp.eq.f32.partialorder %v3003, 8.507059e+37
        %v3005 = vand.u32 %v2866, 2147483648
        %v3006 = vor.u32 1.1754944e-38, %v3005
        %v3007 = vsel %vm3004, %v3006, %v3002
        %v3008 = vmul.f32 1.0, %v3007
        %v3009 = vrcp.pop %v2867
        %v3010 = vmul.f32 %v2867, %v3009
        %v3011 = vsub.f32 1.0, %v3010
        %v3012 = vmul.f32 %v3009, %v3011
        %v3013 = vadd.f32 %v3009, %v3012
        %vm3014 = vweird.f32 %v2867
        %vm3015 = vweird.f32 %v3009
        %vm3016 = vmor %vm3014, %vm3015
        %v3017 = vsel %vm3016, %v3009, %v3013
        %v3018 = vand.u32 2147483647, %v2867
        %vm3019 = vcmp.eq.f32.partialorder %v3018, 8.507059e+37
        %v3020 = vand.u32 %v2867, 2147483648
        %v3021 = vor.u32 1.1754944e-38, %v3020
        %v3022 = vsel %vm3019, %v3021, %v3017
        %v3023 = vmul.f32 1.0, %v3022
        %v3024 = vrcp.pop %v2868
        %v3025 = vmul.f32 %v2868, %v3024
        %v3026 = vsub.f32 1.0, %v3025
        %v3027 = vmul.f32 %v3024, %v3026
        %v3028 = vadd.f32 %v3024, %v3027
        %vm3029 = vweird.f32 %v2868
        %vm3030 = vweird.f32 %v3024
        %vm3031 = vmor %vm3029, %vm3030
        %v3032 = vsel %vm3031, %v3024, %v3028
        %v3033 = vand.u32 2147483647, %v2868
        %vm3034 = vcmp.eq.f32.partialorder %v3033, 8.507059e+37
        %v3035 = vand.u32 %v2868, 2147483648
        %v3036 = vor.u32 1.1754944e-38, %v3035
        %v3037 = vsel %vm3034, %v3036, %v3032
        %v3038 = vmul.f32 1.0, %v3037
        %v3039 = vrcp.pop %v2869
        %v3040 = vmul.f32 %v2869, %v3039
        %v3041 = vsub.f32 1.0, %v3040
        %v3042 = vmul.f32 %v3039, %v3041
        %v3043 = vadd.f32 %v3039, %v3042
        %vm3044 = vweird.f32 %v2869
        %vm3045 = vweird.f32 %v3039
        %vm3046 = vmor %vm3044, %vm3045
        %v3047 = vsel %vm3046, %v3039, %v3043
        %v3048 = vand.u32 2147483647, %v2869
        %vm3049 = vcmp.eq.f32.partialorder %v3048, 8.507059e+37
        %v3050 = vand.u32 %v2869, 2147483648
        %v3051 = vor.u32 1.1754944e-38, %v3050
        %v3052 = vsel %vm3049, %v3051, %v3047
        %v3053 = vmul.f32 1.0, %v3052
        %v3054 = vrcp.pop %v2870
        %v3055 = vmul.f32 %v2870, %v3054
        %v3056 = vsub.f32 1.0, %v3055
        %v3057 = vmul.f32 %v3054, %v3056
        %v3058 = vadd.f32 %v3054, %v3057
        %vm3059 = vweird.f32 %v2870
        %vm3060 = vweird.f32 %v3054
        %vm3061 = vmor %vm3059, %vm3060
        %v3062 = vsel %vm3061, %v3054, %v3058
        %v3063 = vand.u32 2147483647, %v2870
        %vm3064 = vcmp.eq.f32.partialorder %v3063, 8.507059e+37
        %v3065 = vand.u32 %v2870, 2147483648
        %v3066 = vor.u32 1.1754944e-38, %v3065
        %v3067 = vsel %vm3064, %v3066, %v3062
        %v3068 = vmul.f32 1.0, %v3067
        %v3069 = vrcp.pop %v2871
        %v3070 = vmul.f32 %v2871, %v3069
        %v3071 = vsub.f32 1.0, %v3070
        %v3072 = vmul.f32 %v3069, %v3071
        %v3073 = vadd.f32 %v3069, %v3072
        %vm3074 = vweird.f32 %v2871
        %vm3075 = vweird.f32 %v3069
        %vm3076 = vmor %vm3074, %vm3075
        %v3077 = vsel %vm3076, %v3069, %v3073
        %v3078 = vand.u32 2147483647, %v2871
        %vm3079 = vcmp.eq.f32.partialorder %v3078, 8.507059e+37
        %v3080 = vand.u32 %v2871, 2147483648
        %v3081 = vor.u32 1.1754944e-38, %v3080
        %v3082 = vsel %vm3079, %v3081, %v3077
        %v3083 = vmul.f32 1.0, %v3082
        %v3084 = vrcp.pop %v2872
        %v3085 = vmul.f32 %v2872, %v3084
        %v3086 = vsub.f32 1.0, %v3085
        %v3087 = vmul.f32 %v3084, %v3086
        %v3088 = vadd.f32 %v3084, %v3087
        %vm3089 = vweird.f32 %v2872
        %vm3090 = vweird.f32 %v3084
        %vm3091 = vmor %vm3089, %vm3090
        %v3092 = vsel %vm3091, %v3084, %v3088
        %v3093 = vand.u32 2147483647, %v2872
        %vm3094 = vcmp.eq.f32.partialorder %v3093, 8.507059e+37
        %v3095 = vand.u32 %v2872, 2147483648
        %v3096 = vor.u32 1.1754944e-38, %v3095
        %v3097 = vsel %vm3094, %v3096, %v3092
        %v3098 = vmul.f32 1.0, %v3097
        %v3099 = vrcp.pop %v2873
        %v3100 = vmul.f32 %v2873, %v3099
        %v3101 = vsub.f32 1.0, %v3100
        %v3102 = vmul.f32 %v3099, %v3101
        %v3103 = vadd.f32 %v3099, %v3102
        %vm3104 = vweird.f32 %v2873
        %vm3105 = vweird.f32 %v3099
        %vm3106 = vmor %vm3104, %vm3105
        %v3107 = vsel %vm3106, %v3099, %v3103
        %v3108 = vand.u32 2147483647, %v2873
        %vm3109 = vcmp.eq.f32.partialorder %v3108, 8.507059e+37
        %v3110 = vand.u32 %v2873, 2147483648
        %v3111 = vor.u32 1.1754944e-38, %v3110
        %v3112 = vsel %vm3109, %v3111, %v3107
        %v3113 = vmul.f32 1.0, %v3112
        %v3114 = vmul.f32 %v2794, %v2888
        %v3115 = vmul.f32 %v2795, %v2903
        %v3116 = vmul.f32 %v2796, %v2918
        %v3117 = vmul.f32 %v2797, %v2933
        %v3118 = vmul.f32 %v2798, %v2948
        %v3119 = vmul.f32 %v2799, %v2963
        %v3120 = vmul.f32 %v2800, %v2978
        %v3121 = vmul.f32 %v2801, %v2993
        %v3122 = vmul.f32 %v2802, %v3008
        %v3123 = vmul.f32 %v2803, %v3023
        %v3124 = vmul.f32 %v2804, %v3038
        %v3125 = vmul.f32 %v2805, %v3053
        %v3126 = vmul.f32 %v2806, %v3068
        %v3127 = vmul.f32 %v2807, %v3083
        %v3128 = vmul.f32 %v2808, %v3098
        %v3129 = vmul.f32 %v2809, %v3113
        %v3130 = vpack.c.bf16 %v3114, %v3114
        %v3131 = vpack.c.bf16 %v3115, %v3115
        %v3132 = vpack.c.bf16 %v3116, %v3116
        %v3133 = vpack.c.bf16 %v3117, %v3117
        %v3134 = vpack.c.bf16 %v3118, %v3118
        %v3135 = vpack.c.bf16 %v3119, %v3119
        %v3136 = vpack.c.bf16 %v3120, %v3120
        %v3137 = vpack.c.bf16 %v3121, %v3121
        %v3138 = vpack.c.bf16 %v3122, %v3122
        %v3139 = vpack.c.bf16 %v3123, %v3123
        %v3140 = vpack.c.bf16 %v3124, %v3124
        %v3141 = vpack.c.bf16 %v3125, %v3125
        %v3142 = vpack.c.bf16 %v3126, %v3126
        %v3143 = vpack.c.bf16 %v3127, %v3127
        %v3144 = vpack.c.bf16 %v3128, %v3128
        %v3145 = vpack.c.bf16 %v3129, %v3129
        %v3162 = vunpack.c.l.b16 %v3130
        %v3163 = vunpack.c.l.b16 %v3131
        %v3164 = vunpack.c.l.b16 %v3132
        %v3165 = vunpack.c.l.b16 %v3133
        %v3166 = vunpack.c.l.b16 %v3134
        %v3167 = vunpack.c.l.b16 %v3135
        %v3168 = vunpack.c.l.b16 %v3136
        %v3169 = vunpack.c.l.b16 %v3137
        %v3170 = vunpack.c.l.b16 %v3138
        %v3171 = vunpack.c.l.b16 %v3139
        %v3172 = vunpack.c.l.b16 %v3140
        %v3173 = vunpack.c.l.b16 %v3141
        %v3174 = vunpack.c.l.b16 %v3142
        %v3175 = vunpack.c.l.b16 %v3143
        %v3176 = vunpack.c.l.b16 %v3144
        %v3177 = vunpack.c.l.b16 %v3145
        %v3178 = vpack.c.b16 %v3163, %v3162
        %v3179 = vpack.c.b16 %v3165, %v3164
        %v3180 = vpack.c.b16 %v3167, %v3166
        %v3181 = vpack.c.b16 %v3169, %v3168
        %v3182 = vpack.c.b16 %v3171, %v3170
        %v3183 = vpack.c.b16 %v3173, %v3172
        %v3184 = vpack.c.b16 %v3175, %v3174
        %v3185 = vpack.c.b16 %v3177, %v3176
        %v3210 = vunpack.c.l.b16 %v1091
        %v3211 = vunpack.c.l.b16 %v1092
        %v3212 = vunpack.c.l.b16 %v1093
        %v3213 = vunpack.c.l.b16 %v1094
        %v3214 = vunpack.c.l.b16 %v1095
        %v3215 = vunpack.c.l.b16 %v1096
        %v3216 = vunpack.c.l.b16 %v1097
        %v3217 = vunpack.c.l.b16 %v1098
        %v3218 = vunpack.c.l.b16 %v1099
        %v3219 = vunpack.c.l.b16 %v1100
        %v3220 = vunpack.c.l.b16 %v1101
        %v3221 = vunpack.c.l.b16 %v1102
        %v3222 = vunpack.c.l.b16 %v1103
        %v3223 = vunpack.c.l.b16 %v1104
        %v3224 = vunpack.c.l.b16 %v1105
        %v3225 = vunpack.c.l.b16 %v1106
        %v3226 = vpack.c.b16 %v3211, %v3210
        %v3227 = vpack.c.b16 %v3213, %v3212
        %v3228 = vpack.c.b16 %v3215, %v3214
        %v3229 = vpack.c.b16 %v3217, %v3216
        %v3230 = vpack.c.b16 %v3219, %v3218
        %v3231 = vpack.c.b16 %v3221, %v3220
        %v3232 = vpack.c.b16 %v3223, %v3222
        %v3233 = vpack.c.b16 %v3225, %v3224
        %3242 = vmatpush.bf16.msra.mxu0 %v3233
        %3243 = vmatpush.bf16.msra.mxu0 %v3232
        %3244 = vmatpush.bf16.msra.mxu0 %v3231
        %3245 = vmatpush.bf16.msra.mxu0 %v3230
        %3246 = vmatpush.bf16.msra.mxu0 %v3229
        %3247 = vmatpush.bf16.msra.mxu0 %v3228
        %3248 = vmatpush.bf16.msra.mxu0 %v3227
        %3249 = vmatpush.bf16.msra.mxu0 %v3226
        %3250 = vmatmul.bf16.gmra.mxu0 %v3178
        %v3251 = vpop.f32.mrf.mxu0
        %v3252 = vadd.f32 0.0, %v3251
        %v3253 = vpop.f32.mrf.mxu0
        %v3254 = vadd.f32 0.0, %v3253
        %3255 = vmatmul.bf16.gmra.mxu0 %v3179
        %v3256 = vpop.f32.mrf.mxu0
        %v3257 = vadd.f32 0.0, %v3256
        %v3258 = vpop.f32.mrf.mxu0
        %v3259 = vadd.f32 0.0, %v3258
        %3260 = vmatmul.bf16.gmra.mxu0 %v3180
        %v3261 = vpop.f32.mrf.mxu0
        %v3262 = vadd.f32 0.0, %v3261
        %v3263 = vpop.f32.mrf.mxu0
        %v3264 = vadd.f32 0.0, %v3263
        %3265 = vmatmul.bf16.gmra.mxu0 %v3181
        %v3266 = vpop.f32.mrf.mxu0
        %v3267 = vadd.f32 0.0, %v3266
        %v3268 = vpop.f32.mrf.mxu0
        %v3269 = vadd.f32 0.0, %v3268
        %3270 = vmatmul.bf16.gmra.mxu0 %v3182
        %v3271 = vpop.f32.mrf.mxu0
        %v3272 = vadd.f32 0.0, %v3271
        %v3273 = vpop.f32.mrf.mxu0
        %v3274 = vadd.f32 0.0, %v3273
        %3275 = vmatmul.bf16.gmra.mxu0 %v3183
        %v3276 = vpop.f32.mrf.mxu0
        %v3277 = vadd.f32 0.0, %v3276
        %v3278 = vpop.f32.mrf.mxu0
        %v3279 = vadd.f32 0.0, %v3278
        %3280 = vmatmul.bf16.gmra.mxu0 %v3184
        %v3281 = vpop.f32.mrf.mxu0
        %v3282 = vadd.f32 0.0, %v3281
        %v3283 = vpop.f32.mrf.mxu0
        %v3284 = vadd.f32 0.0, %v3283
        %3285 = vmatmul.bf16.gmra.mxu0 %v3185
        %v3286 = vpop.f32.mrf.mxu0
        %v3287 = vadd.f32 0.0, %v3286
        %v3288 = vpop.f32.mrf.mxu0
        %v3289 = vadd.f32 0.0, %v3288
        %3290 = vdwg.mxu0
        %s3291 = sld [smem:[#allocation12 + $0x1]]
        %v3292 = vstv %s3291
        %v3293 = vadd.f32 %v2776, %v3292
        %v3294 = vadd.f32 %v2777, %v3292
        %v3295 = vadd.f32 %v2778, %v3292
        %v3296 = vadd.f32 %v2779, %v3292
        %v3297 = vadd.f32 %v2780, %v3292
        %v3298 = vadd.f32 %v2781, %v3292
        %v3299 = vadd.f32 %v2782, %v3292
        %v3300 = vadd.f32 %v2783, %v3292
        %v3301 = vadd.f32 %v2784, %v3292
        %v3302 = vadd.f32 %v2785, %v3292
        %v3303 = vadd.f32 %v2786, %v3292
        %v3304 = vadd.f32 %v2787, %v3292
        %v3305 = vadd.f32 %v2788, %v3292
        %v3306 = vadd.f32 %v2789, %v3292
        %v3307 = vadd.f32 %v2790, %v3292
        %v3308 = vadd.f32 %v2791, %v3292
        %v3309 = vxor.u32 %v3293, 2147483648
        %v3310 = vxor.u32 %v3294, 2147483648
        %v3311 = vxor.u32 %v3295, 2147483648
        %v3312 = vxor.u32 %v3296, 2147483648
        %v3313 = vxor.u32 %v3297, 2147483648
        %v3314 = vxor.u32 %v3298, 2147483648
        %v3315 = vxor.u32 %v3299, 2147483648
        %v3316 = vxor.u32 %v3300, 2147483648
        %v3317 = vxor.u32 %v3301, 2147483648
        %v3318 = vxor.u32 %v3302, 2147483648
        %v3319 = vxor.u32 %v3303, 2147483648
        %v3320 = vxor.u32 %v3304, 2147483648
        %v3321 = vxor.u32 %v3305, 2147483648
        %v3322 = vxor.u32 %v3306, 2147483648
        %v3323 = vxor.u32 %v3307, 2147483648
        %v3324 = vxor.u32 %v3308, 2147483648
        %v3325 = vmul.f32 %v3309, 1.442695
        %v3326 = vpow.pop %v3325
        %v3327 = vmul.f32 %v3310, 1.442695
        %v3328 = vpow.pop %v3327
        %v3329 = vmul.f32 %v3311, 1.442695
        %v3330 = vpow.pop %v3329
        %v3331 = vmul.f32 %v3312, 1.442695
        %v3332 = vpow.pop %v3331
        %v3333 = vmul.f32 %v3313, 1.442695
        %v3334 = vpow.pop %v3333
        %v3335 = vmul.f32 %v3314, 1.442695
        %v3336 = vpow.pop %v3335
        %v3337 = vmul.f32 %v3315, 1.442695
        %v3338 = vpow.pop %v3337
        %v3339 = vmul.f32 %v3316, 1.442695
        %v3340 = vpow.pop %v3339
        %v3341 = vmul.f32 %v3317, 1.442695
        %v3342 = vpow.pop %v3341
        %v3343 = vmul.f32 %v3318, 1.442695
        %v3344 = vpow.pop %v3343
        %v3345 = vmul.f32 %v3319, 1.442695
        %v3346 = vpow.pop %v3345
        %v3347 = vmul.f32 %v3320, 1.442695
        %v3348 = vpow.pop %v3347
        %v3349 = vmul.f32 %v3321, 1.442695
        %v3350 = vpow.pop %v3349
        %v3351 = vmul.f32 %v3322, 1.442695
        %v3352 = vpow.pop %v3351
        %v3353 = vmul.f32 %v3323, 1.442695
        %v3354 = vpow.pop %v3353
        %v3355 = vmul.f32 %v3324, 1.442695
        %v3356 = vpow.pop %v3355
        %v3357 = vadd.f32 %v3326, 1.0
        %v3358 = vadd.f32 %v3328, 1.0
        %v3359 = vadd.f32 %v3330, 1.0
        %v3360 = vadd.f32 %v3332, 1.0
        %v3361 = vadd.f32 %v3334, 1.0
        %v3362 = vadd.f32 %v3336, 1.0
        %v3363 = vadd.f32 %v3338, 1.0
        %v3364 = vadd.f32 %v3340, 1.0
        %v3365 = vadd.f32 %v3342, 1.0
        %v3366 = vadd.f32 %v3344, 1.0
        %v3367 = vadd.f32 %v3346, 1.0
        %v3368 = vadd.f32 %v3348, 1.0
        %v3369 = vadd.f32 %v3350, 1.0
        %v3370 = vadd.f32 %v3352, 1.0
        %v3371 = vadd.f32 %v3354, 1.0
        %v3372 = vadd.f32 %v3356, 1.0
        %v3373 = vrcp.pop %v3357
        %v3374 = vmul.f32 %v3357, %v3373
        %v3375 = vsub.f32 1.0, %v3374
        %v3376 = vmul.f32 %v3373, %v3375
        %v3377 = vadd.f32 %v3373, %v3376
        %vm3378 = vweird.f32 %v3357
        %vm3379 = vweird.f32 %v3373
        %vm3380 = vmor %vm3378, %vm3379
        %v3381 = vsel %vm3380, %v3373, %v3377
        %v3382 = vand.u32 2147483647, %v3357
        %vm3383 = vcmp.eq.f32.partialorder %v3382, 8.507059e+37
        %v3384 = vand.u32 %v3357, 2147483648
        %v3385 = vor.u32 1.1754944e-38, %v3384
        %v3386 = vsel %vm3383, %v3385, %v3381
        %v3387 = vmul.f32 1.0, %v3386
        %v3388 = vrcp.pop %v3358
        %v3389 = vmul.f32 %v3358, %v3388
        %v3390 = vsub.f32 1.0, %v3389
        %v3391 = vmul.f32 %v3388, %v3390
        %v3392 = vadd.f32 %v3388, %v3391
        %vm3393 = vweird.f32 %v3358
        %vm3394 = vweird.f32 %v3388
        %vm3395 = vmor %vm3393, %vm3394
        %v3396 = vsel %vm3395, %v3388, %v3392
        %v3397 = vand.u32 2147483647, %v3358
        %vm3398 = vcmp.eq.f32.partialorder %v3397, 8.507059e+37
        %v3399 = vand.u32 %v3358, 2147483648
        %v3400 = vor.u32 1.1754944e-38, %v3399
        %v3401 = vsel %vm3398, %v3400, %v3396
        %v3402 = vmul.f32 1.0, %v3401
        %v3403 = vrcp.pop %v3359
        %v3404 = vmul.f32 %v3359, %v3403
        %v3405 = vsub.f32 1.0, %v3404
        %v3406 = vmul.f32 %v3403, %v3405
        %v3407 = vadd.f32 %v3403, %v3406
        %vm3408 = vweird.f32 %v3359
        %vm3409 = vweird.f32 %v3403
        %vm3410 = vmor %vm3408, %vm3409
        %v3411 = vsel %vm3410, %v3403, %v3407
        %v3412 = vand.u32 2147483647, %v3359
        %vm3413 = vcmp.eq.f32.partialorder %v3412, 8.507059e+37
        %v3414 = vand.u32 %v3359, 2147483648
        %v3415 = vor.u32 1.1754944e-38, %v3414
        %v3416 = vsel %vm3413, %v3415, %v3411
        %v3417 = vmul.f32 1.0, %v3416
        %v3418 = vrcp.pop %v3360
        %v3419 = vmul.f32 %v3360, %v3418
        %v3420 = vsub.f32 1.0, %v3419
        %v3421 = vmul.f32 %v3418, %v3420
        %v3422 = vadd.f32 %v3418, %v3421
        %vm3423 = vweird.f32 %v3360
        %vm3424 = vweird.f32 %v3418
        %vm3425 = vmor %vm3423, %vm3424
        %v3426 = vsel %vm3425, %v3418, %v3422
        %v3427 = vand.u32 2147483647, %v3360
        %vm3428 = vcmp.eq.f32.partialorder %v3427, 8.507059e+37
        %v3429 = vand.u32 %v3360, 2147483648
        %v3430 = vor.u32 1.1754944e-38, %v3429
        %v3431 = vsel %vm3428, %v3430, %v3426
        %v3432 = vmul.f32 1.0, %v3431
        %v3433 = vrcp.pop %v3361
        %v3434 = vmul.f32 %v3361, %v3433
        %v3435 = vsub.f32 1.0, %v3434
        %v3436 = vmul.f32 %v3433, %v3435
        %v3437 = vadd.f32 %v3433, %v3436
        %vm3438 = vweird.f32 %v3361
        %vm3439 = vweird.f32 %v3433
        %vm3440 = vmor %vm3438, %vm3439
        %v3441 = vsel %vm3440, %v3433, %v3437
        %v3442 = vand.u32 2147483647, %v3361
        %vm3443 = vcmp.eq.f32.partialorder %v3442, 8.507059e+37
        %v3444 = vand.u32 %v3361, 2147483648
        %v3445 = vor.u32 1.1754944e-38, %v3444
        %v3446 = vsel %vm3443, %v3445, %v3441
        %v3447 = vmul.f32 1.0, %v3446
        %v3448 = vrcp.pop %v3362
        %v3449 = vmul.f32 %v3362, %v3448
        %v3450 = vsub.f32 1.0, %v3449
        %v3451 = vmul.f32 %v3448, %v3450
        %v3452 = vadd.f32 %v3448, %v3451
        %vm3453 = vweird.f32 %v3362
        %vm3454 = vweird.f32 %v3448
        %vm3455 = vmor %vm3453, %vm3454
        %v3456 = vsel %vm3455, %v3448, %v3452
        %v3457 = vand.u32 2147483647, %v3362
        %vm3458 = vcmp.eq.f32.partialorder %v3457, 8.507059e+37
        %v3459 = vand.u32 %v3362, 2147483648
        %v3460 = vor.u32 1.1754944e-38, %v3459
        %v3461 = vsel %vm3458, %v3460, %v3456
        %v3462 = vmul.f32 1.0, %v3461
        %v3463 = vrcp.pop %v3363
        %v3464 = vmul.f32 %v3363, %v3463
        %v3465 = vsub.f32 1.0, %v3464
        %v3466 = vmul.f32 %v3463, %v3465
        %v3467 = vadd.f32 %v3463, %v3466
        %vm3468 = vweird.f32 %v3363
        %vm3469 = vweird.f32 %v3463
        %vm3470 = vmor %vm3468, %vm3469
        %v3471 = vsel %vm3470, %v3463, %v3467
        %v3472 = vand.u32 2147483647, %v3363
        %vm3473 = vcmp.eq.f32.partialorder %v3472, 8.507059e+37
        %v3474 = vand.u32 %v3363, 2147483648
        %v3475 = vor.u32 1.1754944e-38, %v3474
        %v3476 = vsel %vm3473, %v3475, %v3471
        %v3477 = vmul.f32 1.0, %v3476
        %v3478 = vrcp.pop %v3364
        %v3479 = vmul.f32 %v3364, %v3478
        %v3480 = vsub.f32 1.0, %v3479
        %v3481 = vmul.f32 %v3478, %v3480
        %v3482 = vadd.f32 %v3478, %v3481
        %vm3483 = vweird.f32 %v3364
        %vm3484 = vweird.f32 %v3478
        %vm3485 = vmor %vm3483, %vm3484
        %v3486 = vsel %vm3485, %v3478, %v3482
        %v3487 = vand.u32 2147483647, %v3364
        %vm3488 = vcmp.eq.f32.partialorder %v3487, 8.507059e+37
        %v3489 = vand.u32 %v3364, 2147483648
        %v3490 = vor.u32 1.1754944e-38, %v3489
        %v3491 = vsel %vm3488, %v3490, %v3486
        %v3492 = vmul.f32 1.0, %v3491
        %v3493 = vrcp.pop %v3365
        %v3494 = vmul.f32 %v3365, %v3493
        %v3495 = vsub.f32 1.0, %v3494
        %v3496 = vmul.f32 %v3493, %v3495
        %v3497 = vadd.f32 %v3493, %v3496
        %vm3498 = vweird.f32 %v3365
        %vm3499 = vweird.f32 %v3493
        %vm3500 = vmor %vm3498, %vm3499
        %v3501 = vsel %vm3500, %v3493, %v3497
        %v3502 = vand.u32 2147483647, %v3365
        %vm3503 = vcmp.eq.f32.partialorder %v3502, 8.507059e+37
        %v3504 = vand.u32 %v3365, 2147483648
        %v3505 = vor.u32 1.1754944e-38, %v3504
        %v3506 = vsel %vm3503, %v3505, %v3501
        %v3507 = vmul.f32 1.0, %v3506
        %v3508 = vrcp.pop %v3366
        %v3509 = vmul.f32 %v3366, %v3508
        %v3510 = vsub.f32 1.0, %v3509
        %v3511 = vmul.f32 %v3508, %v3510
        %v3512 = vadd.f32 %v3508, %v3511
        %vm3513 = vweird.f32 %v3366
        %vm3514 = vweird.f32 %v3508
        %vm3515 = vmor %vm3513, %vm3514
        %v3516 = vsel %vm3515, %v3508, %v3512
        %v3517 = vand.u32 2147483647, %v3366
        %vm3518 = vcmp.eq.f32.partialorder %v3517, 8.507059e+37
        %v3519 = vand.u32 %v3366, 2147483648
        %v3520 = vor.u32 1.1754944e-38, %v3519
        %v3521 = vsel %vm3518, %v3520, %v3516
        %v3522 = vmul.f32 1.0, %v3521
        %v3523 = vrcp.pop %v3367
        %v3524 = vmul.f32 %v3367, %v3523
        %v3525 = vsub.f32 1.0, %v3524
        %v3526 = vmul.f32 %v3523, %v3525
        %v3527 = vadd.f32 %v3523, %v3526
        %vm3528 = vweird.f32 %v3367
        %vm3529 = vweird.f32 %v3523
        %vm3530 = vmor %vm3528, %vm3529
        %v3531 = vsel %vm3530, %v3523, %v3527
        %v3532 = vand.u32 2147483647, %v3367
        %vm3533 = vcmp.eq.f32.partialorder %v3532, 8.507059e+37
        %v3534 = vand.u32 %v3367, 2147483648
        %v3535 = vor.u32 1.1754944e-38, %v3534
        %v3536 = vsel %vm3533, %v3535, %v3531
        %v3537 = vmul.f32 1.0, %v3536
        %v3538 = vrcp.pop %v3368
        %v3539 = vmul.f32 %v3368, %v3538
        %v3540 = vsub.f32 1.0, %v3539
        %v3541 = vmul.f32 %v3538, %v3540
        %v3542 = vadd.f32 %v3538, %v3541
        %vm3543 = vweird.f32 %v3368
        %vm3544 = vweird.f32 %v3538
        %vm3545 = vmor %vm3543, %vm3544
        %v3546 = vsel %vm3545, %v3538, %v3542
        %v3547 = vand.u32 2147483647, %v3368
        %vm3548 = vcmp.eq.f32.partialorder %v3547, 8.507059e+37
        %v3549 = vand.u32 %v3368, 2147483648
        %v3550 = vor.u32 1.1754944e-38, %v3549
        %v3551 = vsel %vm3548, %v3550, %v3546
        %v3552 = vmul.f32 1.0, %v3551
        %v3553 = vrcp.pop %v3369
        %v3554 = vmul.f32 %v3369, %v3553
        %v3555 = vsub.f32 1.0, %v3554
        %v3556 = vmul.f32 %v3553, %v3555
        %v3557 = vadd.f32 %v3553, %v3556
        %vm3558 = vweird.f32 %v3369
        %vm3559 = vweird.f32 %v3553
        %vm3560 = vmor %vm3558, %vm3559
        %v3561 = vsel %vm3560, %v3553, %v3557
        %v3562 = vand.u32 2147483647, %v3369
        %vm3563 = vcmp.eq.f32.partialorder %v3562, 8.507059e+37
        %v3564 = vand.u32 %v3369, 2147483648
        %v3565 = vor.u32 1.1754944e-38, %v3564
        %v3566 = vsel %vm3563, %v3565, %v3561
        %v3567 = vmul.f32 1.0, %v3566
        %v3568 = vrcp.pop %v3370
        %v3569 = vmul.f32 %v3370, %v3568
        %v3570 = vsub.f32 1.0, %v3569
        %v3571 = vmul.f32 %v3568, %v3570
        %v3572 = vadd.f32 %v3568, %v3571
        %vm3573 = vweird.f32 %v3370
        %vm3574 = vweird.f32 %v3568
        %vm3575 = vmor %vm3573, %vm3574
        %v3576 = vsel %vm3575, %v3568, %v3572
        %v3577 = vand.u32 2147483647, %v3370
        %vm3578 = vcmp.eq.f32.partialorder %v3577, 8.507059e+37
        %v3579 = vand.u32 %v3370, 2147483648
        %v3580 = vor.u32 1.1754944e-38, %v3579
        %v3581 = vsel %vm3578, %v3580, %v3576
        %v3582 = vmul.f32 1.0, %v3581
        %v3583 = vrcp.pop %v3371
        %v3584 = vmul.f32 %v3371, %v3583
        %v3585 = vsub.f32 1.0, %v3584
        %v3586 = vmul.f32 %v3583, %v3585
        %v3587 = vadd.f32 %v3583, %v3586
        %vm3588 = vweird.f32 %v3371
        %vm3589 = vweird.f32 %v3583
        %vm3590 = vmor %vm3588, %vm3589
        %v3591 = vsel %vm3590, %v3583, %v3587
        %v3592 = vand.u32 2147483647, %v3371
        %vm3593 = vcmp.eq.f32.partialorder %v3592, 8.507059e+37
        %v3594 = vand.u32 %v3371, 2147483648
        %v3595 = vor.u32 1.1754944e-38, %v3594
        %v3596 = vsel %vm3593, %v3595, %v3591
        %v3597 = vmul.f32 1.0, %v3596
        %v3598 = vrcp.pop %v3372
        %v3599 = vmul.f32 %v3372, %v3598
        %v3600 = vsub.f32 1.0, %v3599
        %v3601 = vmul.f32 %v3598, %v3600
        %v3602 = vadd.f32 %v3598, %v3601
        %vm3603 = vweird.f32 %v3372
        %vm3604 = vweird.f32 %v3598
        %vm3605 = vmor %vm3603, %vm3604
        %v3606 = vsel %vm3605, %v3598, %v3602
        %v3607 = vand.u32 2147483647, %v3372
        %vm3608 = vcmp.eq.f32.partialorder %v3607, 8.507059e+37
        %v3609 = vand.u32 %v3372, 2147483648
        %v3610 = vor.u32 1.1754944e-38, %v3609
        %v3611 = vsel %vm3608, %v3610, %v3606
        %v3612 = vmul.f32 1.0, %v3611
        %v3613 = vmul.f32 %v3293, %v3387
        %v3614 = vmul.f32 %v3294, %v3402
        %v3615 = vmul.f32 %v3295, %v3417
        %v3616 = vmul.f32 %v3296, %v3432
        %v3617 = vmul.f32 %v3297, %v3447
        %v3618 = vmul.f32 %v3298, %v3462
        %v3619 = vmul.f32 %v3299, %v3477
        %v3620 = vmul.f32 %v3300, %v3492
        %v3621 = vmul.f32 %v3301, %v3507
        %v3622 = vmul.f32 %v3302, %v3522
        %v3623 = vmul.f32 %v3303, %v3537
        %v3624 = vmul.f32 %v3304, %v3552
        %v3625 = vmul.f32 %v3305, %v3567
        %v3626 = vmul.f32 %v3306, %v3582
        %v3627 = vmul.f32 %v3307, %v3597
        %v3628 = vmul.f32 %v3308, %v3612
        %v3629 = vpack.c.bf16 %v3613, %v3613
        %v3630 = vpack.c.bf16 %v3614, %v3614
        %v3631 = vpack.c.bf16 %v3615, %v3615
        %v3632 = vpack.c.bf16 %v3616, %v3616
        %v3633 = vpack.c.bf16 %v3617, %v3617
        %v3634 = vpack.c.bf16 %v3618, %v3618
        %v3635 = vpack.c.bf16 %v3619, %v3619
        %v3636 = vpack.c.bf16 %v3620, %v3620
        %v3637 = vpack.c.bf16 %v3621, %v3621
        %v3638 = vpack.c.bf16 %v3622, %v3622
        %v3639 = vpack.c.bf16 %v3623, %v3623
        %v3640 = vpack.c.bf16 %v3624, %v3624
        %v3641 = vpack.c.bf16 %v3625, %v3625
        %v3642 = vpack.c.bf16 %v3626, %v3626
        %v3643 = vpack.c.bf16 %v3627, %v3627
        %v3644 = vpack.c.bf16 %v3628, %v3628
        %v3661 = vunpack.c.l.b16 %v3629
        %v3662 = vunpack.c.l.b16 %v3630
        %v3663 = vunpack.c.l.b16 %v3631
        %v3664 = vunpack.c.l.b16 %v3632
        %v3665 = vunpack.c.l.b16 %v3633
        %v3666 = vunpack.c.l.b16 %v3634
        %v3667 = vunpack.c.l.b16 %v3635
        %v3668 = vunpack.c.l.b16 %v3636
        %v3669 = vunpack.c.l.b16 %v3637
        %v3670 = vunpack.c.l.b16 %v3638
        %v3671 = vunpack.c.l.b16 %v3639
        %v3672 = vunpack.c.l.b16 %v3640
        %v3673 = vunpack.c.l.b16 %v3641
        %v3674 = vunpack.c.l.b16 %v3642
        %v3675 = vunpack.c.l.b16 %v3643
        %v3676 = vunpack.c.l.b16 %v3644
        %v3677 = vpack.c.b16 %v3662, %v3661
        %v3678 = vpack.c.b16 %v3664, %v3663
        %v3679 = vpack.c.b16 %v3666, %v3665
        %v3680 = vpack.c.b16 %v3668, %v3667
        %v3681 = vpack.c.b16 %v3670, %v3669
        %v3682 = vpack.c.b16 %v3672, %v3671
        %v3683 = vpack.c.b16 %v3674, %v3673
        %v3684 = vpack.c.b16 %v3676, %v3675
        %3693 = vrot.lane.b32.xlu0 %v3226, 64
        %v3694 = vpop.permute.xlu0 %3693
        %3695 = vrot.lane.b32.xlu0 %v3227, 64
        %v3696 = vpop.permute.xlu0 %3695
        %3697 = vrot.lane.b32.xlu0 %v3228, 64
        %v3698 = vpop.permute.xlu0 %3697
        %3699 = vrot.lane.b32.xlu0 %v3229, 64
        %v3700 = vpop.permute.xlu0 %3699
        %3701 = vrot.lane.b32.xlu0 %v3230, 64
        %v3702 = vpop.permute.xlu0 %3701
        %3703 = vrot.lane.b32.xlu0 %v3231, 64
        %v3704 = vpop.permute.xlu0 %3703
        %3705 = vrot.lane.b32.xlu0 %v3232, 64
        %v3706 = vpop.permute.xlu0 %3705
        %3707 = vrot.lane.b32.xlu0 %v3233, 64
        %v3708 = vpop.permute.xlu0 %3707
        %3717 = vmatpush.bf16.msra.mxu0 %v3708
        %3718 = vmatpush.bf16.msra.mxu0 %v3706
        %3719 = vmatpush.bf16.msra.mxu0 %v3704
        %3720 = vmatpush.bf16.msra.mxu0 %v3702
        %3721 = vmatpush.bf16.msra.mxu0 %v3700
        %3722 = vmatpush.bf16.msra.mxu0 %v3698
        %3723 = vmatpush.bf16.msra.mxu0 %v3696
        %3724 = vmatpush.bf16.msra.mxu0 %v3694
        %3725 = vmatmul.bf16.gmra.mxu0 %v3677
        %v3726 = vpop.f32.mrf.mxu0
        %v3727 = vadd.f32 0.0, %v3726
        %v3728 = vpop.f32.mrf.mxu0
        %v3729 = vadd.f32 0.0, %v3728
        %3730 = vmatmul.bf16.gmra.mxu0 %v3678
        %v3731 = vpop.f32.mrf.mxu0
        %v3732 = vadd.f32 0.0, %v3731
        %v3733 = vpop.f32.mrf.mxu0
        %v3734 = vadd.f32 0.0, %v3733
        %3735 = vmatmul.bf16.gmra.mxu0 %v3679
        %v3736 = vpop.f32.mrf.mxu0
        %v3737 = vadd.f32 0.0, %v3736
        %v3738 = vpop.f32.mrf.mxu0
        %v3739 = vadd.f32 0.0, %v3738
        %3740 = vmatmul.bf16.gmra.mxu0 %v3680
        %v3741 = vpop.f32.mrf.mxu0
        %v3742 = vadd.f32 0.0, %v3741
        %v3743 = vpop.f32.mrf.mxu0
        %v3744 = vadd.f32 0.0, %v3743
        %3745 = vmatmul.bf16.gmra.mxu0 %v3681
        %v3746 = vpop.f32.mrf.mxu0
        %v3747 = vadd.f32 0.0, %v3746
        %v3748 = vpop.f32.mrf.mxu0
        %v3749 = vadd.f32 0.0, %v3748
        %3750 = vmatmul.bf16.gmra.mxu0 %v3682
        %v3751 = vpop.f32.mrf.mxu0
        %v3752 = vadd.f32 0.0, %v3751
        %v3753 = vpop.f32.mrf.mxu0
        %v3754 = vadd.f32 0.0, %v3753
        %3755 = vmatmul.bf16.gmra.mxu0 %v3683
        %v3756 = vpop.f32.mrf.mxu0
        %v3757 = vadd.f32 0.0, %v3756
        %v3758 = vpop.f32.mrf.mxu0
        %v3759 = vadd.f32 0.0, %v3758
        %3760 = vmatmul.bf16.gmra.mxu0 %v3684
        %v3761 = vpop.f32.mrf.mxu0
        %v3762 = vadd.f32 0.0, %v3761
        %v3763 = vpop.f32.mrf.mxu0
        %v3764 = vadd.f32 0.0, %v3763
        %3765 = vdwg.mxu0
        %3782 = vrot.lane.b32.xlu0 %v3727, 64
        %v3783 = vpop.permute.xlu0 %3782
        %3784 = vrot.lane.b32.xlu0 %v3729, 64
        %v3785 = vpop.permute.xlu0 %3784
        %3786 = vrot.lane.b32.xlu0 %v3732, 64
        %v3787 = vpop.permute.xlu0 %3786
        %3788 = vrot.lane.b32.xlu0 %v3734, 64
        %v3789 = vpop.permute.xlu0 %3788
        %3790 = vrot.lane.b32.xlu0 %v3737, 64
        %v3791 = vpop.permute.xlu0 %3790
        %3792 = vrot.lane.b32.xlu0 %v3739, 64
        %v3793 = vpop.permute.xlu0 %3792
        %3794 = vrot.lane.b32.xlu0 %v3742, 64
        %v3795 = vpop.permute.xlu0 %3794
        %3796 = vrot.lane.b32.xlu0 %v3744, 64
        %v3797 = vpop.permute.xlu0 %3796
        %3798 = vrot.lane.b32.xlu0 %v3747, 64
        %v3799 = vpop.permute.xlu0 %3798
        %3800 = vrot.lane.b32.xlu0 %v3749, 64
        %v3801 = vpop.permute.xlu0 %3800
        %3802 = vrot.lane.b32.xlu0 %v3752, 64
        %v3803 = vpop.permute.xlu0 %3802
        %3804 = vrot.lane.b32.xlu0 %v3754, 64
        %v3805 = vpop.permute.xlu0 %3804
        %3806 = vrot.lane.b32.xlu0 %v3757, 64
        %v3807 = vpop.permute.xlu0 %3806
        %3808 = vrot.lane.b32.xlu0 %v3759, 64
        %v3809 = vpop.permute.xlu0 %3808
        %3810 = vrot.lane.b32.xlu0 %v3762, 64
        %v3811 = vpop.permute.xlu0 %3810
        %3812 = vrot.lane.b32.xlu0 %v3764, 64
        %v3813 = vpop.permute.xlu0 %3812
        %v3830 = vsel %vm1219, %v3252, %v3783
        %v3831 = vsel %vm1219, %v3254, %v3785
        %v3832 = vsel %vm1219, %v3257, %v3787
        %v3833 = vsel %vm1219, %v3259, %v3789
        %v3834 = vsel %vm1219, %v3262, %v3791
        %v3835 = vsel %vm1219, %v3264, %v3793
        %v3836 = vsel %vm1219, %v3267, %v3795
        %v3837 = vsel %vm1219, %v3269, %v3797
        %v3838 = vsel %vm1219, %v3272, %v3799
        %v3839 = vsel %vm1219, %v3274, %v3801
        %v3840 = vsel %vm1219, %v3277, %v3803
        %v3841 = vsel %vm1219, %v3279, %v3805
        %v3842 = vsel %vm1219, %v3282, %v3807
        %v3843 = vsel %vm1219, %v3284, %v3809
        %v3844 = vsel %vm1219, %v3287, %v3811
        %v3845 = vsel %vm1219, %v3289, %v3813
        %v3846 = vpack.c.bf16 %v3831, %v3830
        %v3847 = vpack.c.bf16 %v3833, %v3832
        %v3848 = vpack.c.bf16 %v3835, %v3834
        %v3849 = vpack.c.bf16 %v3837, %v3836
        %v3850 = vpack.c.bf16 %v3839, %v3838
        %v3851 = vpack.c.bf16 %v3841, %v3840
        %v3852 = vpack.c.bf16 %v3843, %v3842
        %v3853 = vpack.c.bf16 %v3845, %v3844
        %v3854 = vld [vmem:[#allocation8] sm:$0xf]
        %v3855 = vld [vmem:[#allocation8 + $0x4] sm:$0xf]
        %v3856 = vld [vmem:[#allocation8 + $0x8] sm:$0xf]
        %v3857 = vld [vmem:[#allocation8 + $0xc] sm:$0xf]
        %v3858 = vld [vmem:[#allocation8 + $0x10] sm:$0xf]
        %v3859 = vld [vmem:[#allocation8 + $0x14] sm:$0xf]
        %v3860 = vld [vmem:[#allocation8 + $0x18] sm:$0xf]
        %v3861 = vld [vmem:[#allocation8 + $0x1c] sm:$0xf]
        %v3862 = vld [vmem:[#allocation8 + $0x20] sm:$0xf]
        %v3863 = vld [vmem:[#allocation8 + $0x24] sm:$0xf]
        %v3864 = vld [vmem:[#allocation8 + $0x28] sm:$0xf]
        %v3865 = vld [vmem:[#allocation8 + $0x2c] sm:$0xf]
        %v3866 = vld [vmem:[#allocation8 + $0x30] sm:$0xf]
        %v3867 = vld [vmem:[#allocation8 + $0x34] sm:$0xf]
        %v3868 = vld [vmem:[#allocation8 + $0x38] sm:$0xf]
        %v3869 = vld [vmem:[#allocation8 + $0x3c] sm:$0xf]
        %v3870 = vld [vmem:[%s4] sm:$0x1]
        %v3872 = vperm.slane %v3870, 0
        %v3890 = vunpack.c.l.b16 %v3854
        %v3891 = vunpack.c.l.b16 %v3855
        %v3892 = vunpack.c.l.b16 %v3856
        %v3893 = vunpack.c.l.b16 %v3857
        %v3894 = vunpack.c.l.b16 %v3858
        %v3895 = vunpack.c.l.b16 %v3859
        %v3896 = vunpack.c.l.b16 %v3860
        %v3897 = vunpack.c.l.b16 %v3861
        %v3898 = vunpack.c.l.b16 %v3862
        %v3899 = vunpack.c.l.b16 %v3863
        %v3900 = vunpack.c.l.b16 %v3864
        %v3901 = vunpack.c.l.b16 %v3865
        %v3902 = vunpack.c.l.b16 %v3866
        %v3903 = vunpack.c.l.b16 %v3867
        %v3904 = vunpack.c.l.b16 %v3868
        %v3905 = vunpack.c.l.b16 %v3869
        %v3906 = vpack.c.b16 %v3891, %v3890
        %v3907 = vpack.c.b16 %v3893, %v3892
        %v3908 = vpack.c.b16 %v3895, %v3894
        %v3909 = vpack.c.b16 %v3897, %v3896
        %v3910 = vpack.c.b16 %v3899, %v3898
        %v3911 = vpack.c.b16 %v3901, %v3900
        %v3912 = vpack.c.b16 %v3903, %v3902
        %v3913 = vpack.c.b16 %v3905, %v3904
        %3922 = vmatpush.bf16.msra.mxu0 %v3913
        %3923 = vmatpush.bf16.msra.mxu0 %v3912
        %3924 = vmatpush.bf16.msra.mxu0 %v3911
        %3925 = vmatpush.bf16.msra.mxu0 %v3910
        %3926 = vmatpush.bf16.msra.mxu0 %v3909
        %3927 = vmatpush.bf16.msra.mxu0 %v3908
        %3928 = vmatpush.bf16.msra.mxu0 %v3907
        %3929 = vmatpush.bf16.msra.mxu0 %v3906
        %3930 = vmatmul.bf16.gmra.mxu0 %v3846
        %v3931 = vpop.f32.mrf.mxu0
        %v3932 = vadd.f32 %v3872, %v3931
        %v3933 = vpop.f32.mrf.mxu0
        %v3934 = vadd.f32 %v3872, %v3933
        %3935 = vmatmul.bf16.gmra.mxu0 %v3847
        %v3936 = vpop.f32.mrf.mxu0
        %v3937 = vadd.f32 %v3872, %v3936
        %v3938 = vpop.f32.mrf.mxu0
        %v3939 = vadd.f32 %v3872, %v3938
        %3940 = vmatmul.bf16.gmra.mxu0 %v3848
        %v3941 = vpop.f32.mrf.mxu0
        %v3942 = vadd.f32 %v3872, %v3941
        %v3943 = vpop.f32.mrf.mxu0
        %v3944 = vadd.f32 %v3872, %v3943
        %3945 = vmatmul.bf16.gmra.mxu0 %v3849
        %v3946 = vpop.f32.mrf.mxu0
        %v3947 = vadd.f32 %v3872, %v3946
        %v3948 = vpop.f32.mrf.mxu0
        %v3949 = vadd.f32 %v3872, %v3948
        %3950 = vmatmul.bf16.gmra.mxu0 %v3850
        %v3951 = vpop.f32.mrf.mxu0
        %v3952 = vadd.f32 %v3872, %v3951
        %v3953 = vpop.f32.mrf.mxu0
        %v3954 = vadd.f32 %v3872, %v3953
        %3955 = vmatmul.bf16.gmra.mxu0 %v3851
        %v3956 = vpop.f32.mrf.mxu0
        %v3957 = vadd.f32 %v3872, %v3956
        %v3958 = vpop.f32.mrf.mxu0
        %v3959 = vadd.f32 %v3872, %v3958
        %3960 = vmatmul.bf16.gmra.mxu0 %v3852
        %v3961 = vpop.f32.mrf.mxu0
        %v3962 = vadd.f32 %v3872, %v3961
        %v3963 = vpop.f32.mrf.mxu0
        %v3964 = vadd.f32 %v3872, %v3963
        %3965 = vmatmul.bf16.gmra.mxu0 %v3853
        %v3966 = vpop.f32.mrf.mxu0
        %v3967 = vadd.f32 %v3872, %v3966
        %v3968 = vpop.f32.mrf.mxu0
        %v3969 = vadd.f32 %v3872, %v3968
        %3970 = vdwg.mxu0
        %v3971 = vxor.u32 %v3932, 2147483648
        %v3972 = vxor.u32 %v3934, 2147483648
        %v3973 = vxor.u32 %v3937, 2147483648
        %v3974 = vxor.u32 %v3939, 2147483648
        %v3975 = vxor.u32 %v3942, 2147483648
        %v3976 = vxor.u32 %v3944, 2147483648
        %v3977 = vxor.u32 %v3947, 2147483648
        %v3978 = vxor.u32 %v3949, 2147483648
        %v3979 = vxor.u32 %v3952, 2147483648
        %v3980 = vxor.u32 %v3954, 2147483648
        %v3981 = vxor.u32 %v3957, 2147483648
        %v3982 = vxor.u32 %v3959, 2147483648
        %v3983 = vxor.u32 %v3962, 2147483648
        %v3984 = vxor.u32 %v3964, 2147483648
        %v3985 = vxor.u32 %v3967, 2147483648
        %v3986 = vxor.u32 %v3969, 2147483648
        %v3987 = vmul.f32 %v3971, 1.442695
        %v3988 = vpow.pop %v3987
        %v3989 = vmul.f32 %v3972, 1.442695
        %v3990 = vpow.pop %v3989
        %v3991 = vmul.f32 %v3973, 1.442695
        %v3992 = vpow.pop %v3991
        %v3993 = vmul.f32 %v3974, 1.442695
        %v3994 = vpow.pop %v3993
        %v3995 = vmul.f32 %v3975, 1.442695
        %v3996 = vpow.pop %v3995
        %v3997 = vmul.f32 %v3976, 1.442695
        %v3998 = vpow.pop %v3997
        %v3999 = vmul.f32 %v3977, 1.442695
        %v4000 = vpow.pop %v3999
        %v4001 = vmul.f32 %v3978, 1.442695
        %v4002 = vpow.pop %v4001
        %v4003 = vmul.f32 %v3979, 1.442695
        %v4004 = vpow.pop %v4003
        %v4005 = vmul.f32 %v3980, 1.442695
        %v4006 = vpow.pop %v4005
        %v4007 = vmul.f32 %v3981, 1.442695
        %v4008 = vpow.pop %v4007
        %v4009 = vmul.f32 %v3982, 1.442695
        %v4010 = vpow.pop %v4009
        %v4011 = vmul.f32 %v3983, 1.442695
        %v4012 = vpow.pop %v4011
        %v4013 = vmul.f32 %v3984, 1.442695
        %v4014 = vpow.pop %v4013
        %v4015 = vmul.f32 %v3985, 1.442695
        %v4016 = vpow.pop %v4015
        %v4017 = vmul.f32 %v3986, 1.442695
        %v4018 = vpow.pop %v4017
        %v4019 = vadd.f32 %v3988, 1.0
        %v4020 = vadd.f32 %v3990, 1.0
        %v4021 = vadd.f32 %v3992, 1.0
        %v4022 = vadd.f32 %v3994, 1.0
        %v4023 = vadd.f32 %v3996, 1.0
        %v4024 = vadd.f32 %v3998, 1.0
        %v4025 = vadd.f32 %v4000, 1.0
        %v4026 = vadd.f32 %v4002, 1.0
        %v4027 = vadd.f32 %v4004, 1.0
        %v4028 = vadd.f32 %v4006, 1.0
        %v4029 = vadd.f32 %v4008, 1.0
        %v4030 = vadd.f32 %v4010, 1.0
        %v4031 = vadd.f32 %v4012, 1.0
        %v4032 = vadd.f32 %v4014, 1.0
        %v4033 = vadd.f32 %v4016, 1.0
        %v4034 = vadd.f32 %v4018, 1.0
        %v4035 = vrcp.pop %v4019
        %v4036 = vmul.f32 %v4019, %v4035
        %v4037 = vsub.f32 1.0, %v4036
        %v4038 = vmul.f32 %v4035, %v4037
        %v4039 = vadd.f32 %v4035, %v4038
        %vm4040 = vweird.f32 %v4019
        %vm4041 = vweird.f32 %v4035
        %vm4042 = vmor %vm4040, %vm4041
        %v4043 = vsel %vm4042, %v4035, %v4039
        %v4044 = vand.u32 2147483647, %v4019
        %vm4045 = vcmp.eq.f32.partialorder %v4044, 8.507059e+37
        %v4046 = vand.u32 %v4019, 2147483648
        %v4047 = vor.u32 1.1754944e-38, %v4046
        %v4048 = vsel %vm4045, %v4047, %v4043
        %v4049 = vmul.f32 1.0, %v4048
        %v4050 = vrcp.pop %v4020
        %v4051 = vmul.f32 %v4020, %v4050
        %v4052 = vsub.f32 1.0, %v4051
        %v4053 = vmul.f32 %v4050, %v4052
        %v4054 = vadd.f32 %v4050, %v4053
        %vm4055 = vweird.f32 %v4020
        %vm4056 = vweird.f32 %v4050
        %vm4057 = vmor %vm4055, %vm4056
        %v4058 = vsel %vm4057, %v4050, %v4054
        %v4059 = vand.u32 2147483647, %v4020
        %vm4060 = vcmp.eq.f32.partialorder %v4059, 8.507059e+37
        %v4061 = vand.u32 %v4020, 2147483648
        %v4062 = vor.u32 1.1754944e-38, %v4061
        %v4063 = vsel %vm4060, %v4062, %v4058
        %v4064 = vmul.f32 1.0, %v4063
        %v4065 = vrcp.pop %v4021
        %v4066 = vmul.f32 %v4021, %v4065
        %v4067 = vsub.f32 1.0, %v4066
        %v4068 = vmul.f32 %v4065, %v4067
        %v4069 = vadd.f32 %v4065, %v4068
        %vm4070 = vweird.f32 %v4021
        %vm4071 = vweird.f32 %v4065
        %vm4072 = vmor %vm4070, %vm4071
        %v4073 = vsel %vm4072, %v4065, %v4069
        %v4074 = vand.u32 2147483647, %v4021
        %vm4075 = vcmp.eq.f32.partialorder %v4074, 8.507059e+37
        %v4076 = vand.u32 %v4021, 2147483648
        %v4077 = vor.u32 1.1754944e-38, %v4076
        %v4078 = vsel %vm4075, %v4077, %v4073
        %v4079 = vmul.f32 1.0, %v4078
        %v4080 = vrcp.pop %v4022
        %v4081 = vmul.f32 %v4022, %v4080
        %v4082 = vsub.f32 1.0, %v4081
        %v4083 = vmul.f32 %v4080, %v4082
        %v4084 = vadd.f32 %v4080, %v4083
        %vm4085 = vweird.f32 %v4022
        %vm4086 = vweird.f32 %v4080
        %vm4087 = vmor %vm4085, %vm4086
        %v4088 = vsel %vm4087, %v4080, %v4084
        %v4089 = vand.u32 2147483647, %v4022
        %vm4090 = vcmp.eq.f32.partialorder %v4089, 8.507059e+37
        %v4091 = vand.u32 %v4022, 2147483648
        %v4092 = vor.u32 1.1754944e-38, %v4091
        %v4093 = vsel %vm4090, %v4092, %v4088
        %v4094 = vmul.f32 1.0, %v4093
        %v4095 = vrcp.pop %v4023
        %v4096 = vmul.f32 %v4023, %v4095
        %v4097 = vsub.f32 1.0, %v4096
        %v4098 = vmul.f32 %v4095, %v4097
        %v4099 = vadd.f32 %v4095, %v4098
        %vm4100 = vweird.f32 %v4023
        %vm4101 = vweird.f32 %v4095
        %vm4102 = vmor %vm4100, %vm4101
        %v4103 = vsel %vm4102, %v4095, %v4099
        %v4104 = vand.u32 2147483647, %v4023
        %vm4105 = vcmp.eq.f32.partialorder %v4104, 8.507059e+37
        %v4106 = vand.u32 %v4023, 2147483648
        %v4107 = vor.u32 1.1754944e-38, %v4106
        %v4108 = vsel %vm4105, %v4107, %v4103
        %v4109 = vmul.f32 1.0, %v4108
        %v4110 = vrcp.pop %v4024
        %v4111 = vmul.f32 %v4024, %v4110
        %v4112 = vsub.f32 1.0, %v4111
        %v4113 = vmul.f32 %v4110, %v4112
        %v4114 = vadd.f32 %v4110, %v4113
        %vm4115 = vweird.f32 %v4024
        %vm4116 = vweird.f32 %v4110
        %vm4117 = vmor %vm4115, %vm4116
        %v4118 = vsel %vm4117, %v4110, %v4114
        %v4119 = vand.u32 2147483647, %v4024
        %vm4120 = vcmp.eq.f32.partialorder %v4119, 8.507059e+37
        %v4121 = vand.u32 %v4024, 2147483648
        %v4122 = vor.u32 1.1754944e-38, %v4121
        %v4123 = vsel %vm4120, %v4122, %v4118
        %v4124 = vmul.f32 1.0, %v4123
        %v4125 = vrcp.pop %v4025
        %v4126 = vmul.f32 %v4025, %v4125
        %v4127 = vsub.f32 1.0, %v4126
        %v4128 = vmul.f32 %v4125, %v4127
        %v4129 = vadd.f32 %v4125, %v4128
        %vm4130 = vweird.f32 %v4025
        %vm4131 = vweird.f32 %v4125
        %vm4132 = vmor %vm4130, %vm4131
        %v4133 = vsel %vm4132, %v4125, %v4129
        %v4134 = vand.u32 2147483647, %v4025
        %vm4135 = vcmp.eq.f32.partialorder %v4134, 8.507059e+37
        %v4136 = vand.u32 %v4025, 2147483648
        %v4137 = vor.u32 1.1754944e-38, %v4136
        %v4138 = vsel %vm4135, %v4137, %v4133
        %v4139 = vmul.f32 1.0, %v4138
        %v4140 = vrcp.pop %v4026
        %v4141 = vmul.f32 %v4026, %v4140
        %v4142 = vsub.f32 1.0, %v4141
        %v4143 = vmul.f32 %v4140, %v4142
        %v4144 = vadd.f32 %v4140, %v4143
        %vm4145 = vweird.f32 %v4026
        %vm4146 = vweird.f32 %v4140
        %vm4147 = vmor %vm4145, %vm4146
        %v4148 = vsel %vm4147, %v4140, %v4144
        %v4149 = vand.u32 2147483647, %v4026
        %vm4150 = vcmp.eq.f32.partialorder %v4149, 8.507059e+37
        %v4151 = vand.u32 %v4026, 2147483648
        %v4152 = vor.u32 1.1754944e-38, %v4151
        %v4153 = vsel %vm4150, %v4152, %v4148
        %v4154 = vmul.f32 1.0, %v4153
        %v4155 = vrcp.pop %v4027
        %v4156 = vmul.f32 %v4027, %v4155
        %v4157 = vsub.f32 1.0, %v4156
        %v4158 = vmul.f32 %v4155, %v4157
        %v4159 = vadd.f32 %v4155, %v4158
        %vm4160 = vweird.f32 %v4027
        %vm4161 = vweird.f32 %v4155
        %vm4162 = vmor %vm4160, %vm4161
        %v4163 = vsel %vm4162, %v4155, %v4159
        %v4164 = vand.u32 2147483647, %v4027
        %vm4165 = vcmp.eq.f32.partialorder %v4164, 8.507059e+37
        %v4166 = vand.u32 %v4027, 2147483648
        %v4167 = vor.u32 1.1754944e-38, %v4166
        %v4168 = vsel %vm4165, %v4167, %v4163
        %v4169 = vmul.f32 1.0, %v4168
        %v4170 = vrcp.pop %v4028
        %v4171 = vmul.f32 %v4028, %v4170
        %v4172 = vsub.f32 1.0, %v4171
        %v4173 = vmul.f32 %v4170, %v4172
        %v4174 = vadd.f32 %v4170, %v4173
        %vm4175 = vweird.f32 %v4028
        %vm4176 = vweird.f32 %v4170
        %vm4177 = vmor %vm4175, %vm4176
        %v4178 = vsel %vm4177, %v4170, %v4174
        %v4179 = vand.u32 2147483647, %v4028
        %vm4180 = vcmp.eq.f32.partialorder %v4179, 8.507059e+37
        %v4181 = vand.u32 %v4028, 2147483648
        %v4182 = vor.u32 1.1754944e-38, %v4181
        %v4183 = vsel %vm4180, %v4182, %v4178
        %v4184 = vmul.f32 1.0, %v4183
        %v4185 = vrcp.pop %v4029
        %v4186 = vmul.f32 %v4029, %v4185
        %v4187 = vsub.f32 1.0, %v4186
        %v4188 = vmul.f32 %v4185, %v4187
        %v4189 = vadd.f32 %v4185, %v4188
        %vm4190 = vweird.f32 %v4029
        %vm4191 = vweird.f32 %v4185
        %vm4192 = vmor %vm4190, %vm4191
        %v4193 = vsel %vm4192, %v4185, %v4189
        %v4194 = vand.u32 2147483647, %v4029
        %vm4195 = vcmp.eq.f32.partialorder %v4194, 8.507059e+37
        %v4196 = vand.u32 %v4029, 2147483648
        %v4197 = vor.u32 1.1754944e-38, %v4196
        %v4198 = vsel %vm4195, %v4197, %v4193
        %v4199 = vmul.f32 1.0, %v4198
        %v4200 = vrcp.pop %v4030
        %v4201 = vmul.f32 %v4030, %v4200
        %v4202 = vsub.f32 1.0, %v4201
        %v4203 = vmul.f32 %v4200, %v4202
        %v4204 = vadd.f32 %v4200, %v4203
        %vm4205 = vweird.f32 %v4030
        %vm4206 = vweird.f32 %v4200
        %vm4207 = vmor %vm4205, %vm4206
        %v4208 = vsel %vm4207, %v4200, %v4204
        %v4209 = vand.u32 2147483647, %v4030
        %vm4210 = vcmp.eq.f32.partialorder %v4209, 8.507059e+37
        %v4211 = vand.u32 %v4030, 2147483648
        %v4212 = vor.u32 1.1754944e-38, %v4211
        %v4213 = vsel %vm4210, %v4212, %v4208
        %v4214 = vmul.f32 1.0, %v4213
        %v4215 = vrcp.pop %v4031
        %v4216 = vmul.f32 %v4031, %v4215
        %v4217 = vsub.f32 1.0, %v4216
        %v4218 = vmul.f32 %v4215, %v4217
        %v4219 = vadd.f32 %v4215, %v4218
        %vm4220 = vweird.f32 %v4031
        %vm4221 = vweird.f32 %v4215
        %vm4222 = vmor %vm4220, %vm4221
        %v4223 = vsel %vm4222, %v4215, %v4219
        %v4224 = vand.u32 2147483647, %v4031
        %vm4225 = vcmp.eq.f32.partialorder %v4224, 8.507059e+37
        %v4226 = vand.u32 %v4031, 2147483648
        %v4227 = vor.u32 1.1754944e-38, %v4226
        %v4228 = vsel %vm4225, %v4227, %v4223
        %v4229 = vmul.f32 1.0, %v4228
        %v4230 = vrcp.pop %v4032
        %v4231 = vmul.f32 %v4032, %v4230
        %v4232 = vsub.f32 1.0, %v4231
        %v4233 = vmul.f32 %v4230, %v4232
        %v4234 = vadd.f32 %v4230, %v4233
        %vm4235 = vweird.f32 %v4032
        %vm4236 = vweird.f32 %v4230
        %vm4237 = vmor %vm4235, %vm4236
        %v4238 = vsel %vm4237, %v4230, %v4234
        %v4239 = vand.u32 2147483647, %v4032
        %vm4240 = vcmp.eq.f32.partialorder %v4239, 8.507059e+37
        %v4241 = vand.u32 %v4032, 2147483648
        %v4242 = vor.u32 1.1754944e-38, %v4241
        %v4243 = vsel %vm4240, %v4242, %v4238
        %v4244 = vmul.f32 1.0, %v4243
        %v4245 = vrcp.pop %v4033
        %v4246 = vmul.f32 %v4033, %v4245
        %v4247 = vsub.f32 1.0, %v4246
        %v4248 = vmul.f32 %v4245, %v4247
        %v4249 = vadd.f32 %v4245, %v4248
        %vm4250 = vweird.f32 %v4033
        %vm4251 = vweird.f32 %v4245
        %vm4252 = vmor %vm4250, %vm4251
        %v4253 = vsel %vm4252, %v4245, %v4249
        %v4254 = vand.u32 2147483647, %v4033
        %vm4255 = vcmp.eq.f32.partialorder %v4254, 8.507059e+37
        %v4256 = vand.u32 %v4033, 2147483648
        %v4257 = vor.u32 1.1754944e-38, %v4256
        %v4258 = vsel %vm4255, %v4257, %v4253
        %v4259 = vmul.f32 1.0, %v4258
        %v4260 = vrcp.pop %v4034
        %v4261 = vmul.f32 %v4034, %v4260
        %v4262 = vsub.f32 1.0, %v4261
        %v4263 = vmul.f32 %v4260, %v4262
        %v4264 = vadd.f32 %v4260, %v4263
        %vm4265 = vweird.f32 %v4034
        %vm4266 = vweird.f32 %v4260
        %vm4267 = vmor %vm4265, %vm4266
        %v4268 = vsel %vm4267, %v4260, %v4264
        %v4269 = vand.u32 2147483647, %v4034
        %vm4270 = vcmp.eq.f32.partialorder %v4269, 8.507059e+37
        %v4271 = vand.u32 %v4034, 2147483648
        %v4272 = vor.u32 1.1754944e-38, %v4271
        %v4273 = vsel %vm4270, %v4272, %v4268
        %v4274 = vmul.f32 1.0, %v4273
        %v4275 = vmul.f32 %v4049, %v3830
        %v4276 = vmul.f32 %v4064, %v3831
        %v4277 = vmul.f32 %v4079, %v3832
        %v4278 = vmul.f32 %v4094, %v3833
        %v4279 = vmul.f32 %v4109, %v3834
        %v4280 = vmul.f32 %v4124, %v3835
        %v4281 = vmul.f32 %v4139, %v3836
        %v4282 = vmul.f32 %v4154, %v3837
        %v4283 = vmul.f32 %v4169, %v3838
        %v4284 = vmul.f32 %v4184, %v3839
        %v4285 = vmul.f32 %v4199, %v3840
        %v4286 = vmul.f32 %v4214, %v3841
        %v4287 = vmul.f32 %v4229, %v3842
        %v4288 = vmul.f32 %v4244, %v3843
        %v4289 = vmul.f32 %v4259, %v3844
        %v4290 = vmul.f32 %v4274, %v3845
        %v4291 = vld [vmem:[%s316] sm:$0xf]
        %v4292 = vld [vmem:[%s316 + $0x4] sm:$0xf]
        %v4293 = vld [vmem:[%s316 + $0x8] sm:$0xf]
        %v4294 = vld [vmem:[%s316 + $0xc] sm:$0xf]
        %v4295 = vld [vmem:[%s316 + $0x10] sm:$0xf]
        %v4296 = vld [vmem:[%s316 + $0x14] sm:$0xf]
        %v4297 = vld [vmem:[%s316 + $0x18] sm:$0xf]
        %v4298 = vld [vmem:[%s316 + $0x1c] sm:$0xf]
        %v4299 = vld [vmem:[%s316 + $0x20] sm:$0xf]
        %v4300 = vld [vmem:[%s316 + $0x24] sm:$0xf]
        %v4301 = vld [vmem:[%s316 + $0x28] sm:$0xf]
        %v4302 = vld [vmem:[%s316 + $0x2c] sm:$0xf]
        %v4303 = vld [vmem:[%s316 + $0x30] sm:$0xf]
        %v4304 = vld [vmem:[%s316 + $0x34] sm:$0xf]
        %v4305 = vld [vmem:[%s316 + $0x38] sm:$0xf]
        %v4306 = vld [vmem:[%s316 + $0x3c] sm:$0xf]
        %v4307 = vunpack.c.l.bf16 %v4291
        %v4308 = vunpack.c.l.bf16 %v4292
        %v4309 = vunpack.c.l.bf16 %v4293
        %v4310 = vunpack.c.l.bf16 %v4294
        %v4311 = vunpack.c.l.bf16 %v4295
        %v4312 = vunpack.c.l.bf16 %v4296
        %v4313 = vunpack.c.l.bf16 %v4297
        %v4314 = vunpack.c.l.bf16 %v4298
        %v4315 = vunpack.c.l.bf16 %v4299
        %v4316 = vunpack.c.l.bf16 %v4300
        %v4317 = vunpack.c.l.bf16 %v4301
        %v4318 = vunpack.c.l.bf16 %v4302
        %v4319 = vunpack.c.l.bf16 %v4303
        %v4320 = vunpack.c.l.bf16 %v4304
        %v4321 = vunpack.c.l.bf16 %v4305
        %v4322 = vunpack.c.l.bf16 %v4306
        %v4323 = vadd.f32 %v4275, %v4307
        %v4324 = vadd.f32 %v4276, %v4308
        %v4325 = vadd.f32 %v4277, %v4309
        %v4326 = vadd.f32 %v4278, %v4310
        %v4327 = vadd.f32 %v4279, %v4311
        %v4328 = vadd.f32 %v4280, %v4312
        %v4329 = vadd.f32 %v4281, %v4313
        %v4330 = vadd.f32 %v4282, %v4314
        %v4331 = vadd.f32 %v4283, %v4315
        %v4332 = vadd.f32 %v4284, %v4316
        %v4333 = vadd.f32 %v4285, %v4317
        %v4334 = vadd.f32 %v4286, %v4318
        %v4335 = vadd.f32 %v4287, %v4319
        %v4336 = vadd.f32 %v4288, %v4320
        %v4337 = vadd.f32 %v4289, %v4321
        %v4338 = vadd.f32 %v4290, %v4322
        %v4339 = vpack.c.bf16 %v4323, %v4323
        %v4340 = vpack.c.bf16 %v4324, %v4324
        %v4341 = vpack.c.bf16 %v4325, %v4325
        %v4342 = vpack.c.bf16 %v4326, %v4326
        %v4343 = vpack.c.bf16 %v4327, %v4327
        %v4344 = vpack.c.bf16 %v4328, %v4328
        %v4345 = vpack.c.bf16 %v4329, %v4329
        %v4346 = vpack.c.bf16 %v4330, %v4330
        %v4347 = vpack.c.bf16 %v4331, %v4331
        %v4348 = vpack.c.bf16 %v4332, %v4332
        %v4349 = vpack.c.bf16 %v4333, %v4333
        %v4350 = vpack.c.bf16 %v4334, %v4334
        %v4351 = vpack.c.bf16 %v4335, %v4335
        %v4352 = vpack.c.bf16 %v4336, %v4336
        %v4353 = vpack.c.bf16 %v4337, %v4337
        %v4354 = vpack.c.bf16 %v4338, %v4338
        %4355 = vst [vmem:[%s373] sm:$0xf] %v4339
        %4356 = vst [vmem:[%s373 + $0x4] sm:$0xf] %v4340
        %4357 = vst [vmem:[%s373 + $0x8] sm:$0xf] %v4341
        %4358 = vst [vmem:[%s373 + $0xc] sm:$0xf] %v4342
        %4359 = vst [vmem:[%s373 + $0x10] sm:$0xf] %v4343
        %4360 = vst [vmem:[%s373 + $0x14] sm:$0xf] %v4344
        %4361 = vst [vmem:[%s373 + $0x18] sm:$0xf] %v4345
        %4362 = vst [vmem:[%s373 + $0x1c] sm:$0xf] %v4346
        %4363 = vst [vmem:[%s373 + $0x20] sm:$0xf] %v4347
        %4364 = vst [vmem:[%s373 + $0x24] sm:$0xf] %v4348
        %4365 = vst [vmem:[%s373 + $0x28] sm:$0xf] %v4349
        %4366 = vst [vmem:[%s373 + $0x2c] sm:$0xf] %v4350
        %4367 = vst [vmem:[%s373 + $0x30] sm:$0xf] %v4351
        %4368 = vst [vmem:[%s373 + $0x34] sm:$0xf] %v4352
        %4369 = vst [vmem:[%s373 + $0x38] sm:$0xf] %v4353
        %4370 = vst [vmem:[%s373 + $0x3c] sm:$0xf] %v4354
        %s4371 = sand.u32 %s188, 1
        %s4372 = scalar_lea.sflag [#allocation4], %s4371
        %s4373 = sand.u32 %s188, 1
        %s4374 = smul.addr %s4373, 64
        %s4375 = scalar_lea.vmem [#allocation14], %s4374
        // Predicated region
        $region73: #{tpu_custom_call.1} parent=47 // pred_check
          %p4376 = pneg %p198
        $region74: #{tpu_custom_call.1} parent=47 // pred_check_branch
          %4378 = sbr.rel (%p4376) target = $region76
        $region75: #{tpu_custom_call.1} parent=47 // pred_region
          %s4379 = smul.u32 16, %s28
          %4381 = vsyncadd %s4372, 0
          %s4382 = smul.addr %s4379, 4
          %s4383 = scalar_lea.hbm %s7, %s4382
          %s4384 = sshll.u32 %s4375, 4
          %s4385 = int_to_ptr.vmem [resolvable:$true] %s4384
          %s4386 = sshll.u32 %s4383, 4
          %s4387 = int_to_ptr.hbm [resolvable:$true] %s4386
          %4392 = dma.vmem_to_hbm [thread:$0]  %s4385, 1024, %s4387, %s4372, 64, 64, 4
        $region76: #{tpu_custom_call.1} parent=47 // pred_fallthru
          _
      $region48: #{tpu_custom_call.1} parent=5 // pred_fallthru
        _
      %p4393 = scmp.le.s32.totalorder 2, %s23
      // Predicated region
      $region77: #{tpu_custom_call.1} parent=5 // pred_check
        %p4394 = pneg %p4393
      $region78: #{tpu_custom_call.1} parent=5 // pred_check_branch
        %4396 = sbr.rel (%p4394) target = $region80
      $region79: #{tpu_custom_call.1} parent=5 // pred_region
        %s4397 = ssub.s32 %s23, 2
        // Predicated region
        $region81: #{tpu_custom_call.1} parent=79 // pred_check
          %p4398 = pneg %p204
        $region82: #{tpu_custom_call.1} parent=79 // pred_check_branch
          %4400 = sbr.rel (%p4398) target = $region84
        $region83: #{tpu_custom_call.1} parent=79 // pred_region
          %s4401 = sand.u32 %s189, 1
          %s4402 = scalar_lea.sflag [#allocation4], %s4401
          %s4403 = sand.u32 %s189, 1
          %s4404 = smul.addr %s4403, 64
          %s4405 = scalar_lea.vmem [#allocation14], %s4404
          %4407 = dma.done %s4402, 1024
        $region84: #{tpu_custom_call.1} parent=79 // pred_fallthru
          _
      $region80: #{tpu_custom_call.1} parent=5 // pred_fallthru
        _
    $region6: #{tpu_custom_call.1} parent=1 // loop_footer
      %s27 = sadd.s32 1, %s23
    $region7: #{tpu_custom_call.1} parent=1 // loop_footer_branch
      %22 = sbr.rel target = $region3
    $region8: #{tpu_custom_call.1} parent=1 // loop_exit
      _
    %4408 = vsyncpa [#allocation3], 1
    %s4409 = scalar_lea.sflag [#allocation3], 1
    %4410 = vsyncpa %s4409, 1
    %4411 = vsyncpa [#allocation7], 1
    %4412 = vsyncpa [#allocation10], 1
    %4413 = vsyncpa [#allocation4], 1
    %s4414 = scalar_lea.sflag [#allocation4], 1
    %4415 = vsyncpa %s4414, 1
    %4416 = vsyncpa [#allocation5], 1
    %s4417 = scalar_lea.sflag [#allocation5], 1
    %4418 = vsyncpa %s4417, 1
    %4419 = vsyncpa [#allocation13], 1

</llo_original>
